<compile_context>
chip_gen: v5e
topology: v5e:2x2
jax: 0.10.0
libtpu: 0.0.40
codegen_flags: <defaults>
</compile_context>

<pallas_src>
import jax
import jax.numpy as jnp
from jax import lax
from jax.experimental import pallas as pl
from jax.experimental.pallas import tpu as pltpu

N_STATES = 2
N_ACTIONS = 2
HIDDEN = 8
D_IN = N_STATES + 1          # state concat prev_action
MLP_H = 128
Q_PAD = 128                  # lane-dense padded width of the q output


# ----------------------------------------------------------------------------
# Pallas kernel: hoisted input projection + unrolled GRU + batched MLP head.
# ----------------------------------------------------------------------------
def dqn_kernel(x_ref, h0_ref,
               wir_ref, wiz_ref, win_ref, bir_ref, biz_ref, bin_ref,
               whr_ref, whz_ref, whn_ref, bhr_ref, bhz_ref, bhn_ref,
               w1_ref, b1_ref, w2_ref, b2_ref, w3_ref, b3_ref,
               q_ref, h_ref):
    # x_ref : (T*B, D_IN) time-major rows    h0_ref : (B, H)
    # q_ref : (T*B, Q_PAD)                   h_ref  : (T*B, H)
    TB = x_ref.shape[0]
    B, H = h0_ref.shape
    T = TB // B

    # ---- Hoisted input projection for ALL timesteps (off the serial path) --
    x = x_ref[...]                                                   # (T*B, D_IN)
    gi_r = jnp.dot(x, wir_ref[...], preferred_element_type=jnp.float32) + bir_ref[...]
    gi_z = jnp.dot(x, wiz_ref[...], preferred_element_type=jnp.float32) + biz_ref[...]
    gi_n = jnp.dot(x, win_ref[...], preferred_element_type=jnp.float32) + bin_ref[...]

    whr = whr_ref[...]                                               # (H, H)
    whz = whz_ref[...]
    whn = whn_ref[...]
    bhr = bhr_ref[...]                                               # (1, H)
    bhz = bhz_ref[...]
    bhn = bhn_ref[...]

    # ---- Unrolled GRU recurrence (serial path: VPU/EUP, no MXU round-trip) -
    # TODO(synk): switch to lax.fori_loop(unroll=...) if T grows large.
    h_prev = h0_ref[...]                                             # (B, H)
    for t in range(T):
        lo = t * B
        gh_r = bhr
        gh_z = bhz
        gh_n = bhn
        for k in range(H):
            hk = h_prev[:, k:k + 1]                                  # one broadcast,
            gh_r = gh_r + hk * whr[k:k + 1, :]                       # reused by all
            gh_z = gh_z + hk * whz[k:k + 1, :]                       # three gates
            gh_n = gh_n + hk * whn[k:k + 1, :]
        r = jax.nn.sigmoid(gi_r[lo:lo + B, :] + gh_r)
        z = jax.nn.sigmoid(gi_z[lo:lo + B, :] + gh_z)
        n = jnp.tanh(gi_n[lo:lo + B, :] + r * gh_n)
        h_new = (1.0 - z) * n + z * h_prev                           # (B, H)

        h_ref[lo:lo + B, :] = h_new                                  # contiguous store
        h_prev = h_new

    # ---- Hoisted MLP head: batched MXU matmuls over all T*B rows -----------
    hs = h_ref[...]                                                  # (T*B, H)
    y = jnp.maximum(
        jnp.dot(hs, w1_ref[...], preferred_element_type=jnp.float32) + b1_ref[...], 0.0)
    y = jnp.maximum(
        jnp.dot(y, w2_ref[...], preferred_element_type=jnp.float32) + b2_ref[...], 0.0)
    # w3 / b3 are zero-padded to Q_PAD columns -> lane-dense (unmasked) store.
    q_ref[...] = (jnp.dot(y, w3_ref[...], preferred_element_type=jnp.float32)
                  + b3_ref[...])


# ----------------------------------------------------------------------------
# Wrapper: cheap XLA-level layout ops only; all compute is in the kernel.
# ----------------------------------------------------------------------------
def dqn_forward(state, prev_action, params, h=None):
    """state: (B, T, n_states), prev_action: (B, T, 1), h: None or (B, 1, H)."""
    B, T, _ = state.shape
    x = jnp.concatenate([state, prev_action], axis=-1).astype(jnp.float32)  # (B,T,D_IN)
    x_tm = jnp.transpose(x, (1, 0, 2)).reshape(T * B, D_IN)                 # time-major

    if h is None:
        h0 = jnp.zeros((B, HIDDEN), jnp.float32)
    else:
        # torch does h.permute(1, 0, 2) -> (num_layers=1, B, H); we need (B, H)
        h0 = jnp.reshape(h, (B, HIDDEN)).astype(jnp.float32)

    vmem = pl.BlockSpec(memory_space=pltpu.MemorySpace.VMEM)
    q_pad, h_tm = pl.pallas_call(
        dqn_kernel,
        out_shape=(jax.ShapeDtypeStruct((T * B, Q_PAD), jnp.float32),
                   jax.ShapeDtypeStruct((T * B, HIDDEN), jnp.float32)),
        in_specs=[vmem] * 20,
        out_specs=(vmem, vmem),
    )(x_tm, h0,
      params["w_ir"], params["w_iz"], params["w_in"],
      params["b_ir"], params["b_iz"], params["b_in"],
      params["w_hr"], params["w_hz"], params["w_hn"],
      params["b_hr"], params["b_hz"], params["b_hn"],
      params["w1"], params["b1"], params["w2"], params["b2"],
      params["w3p"], params["b3p"])

    q = jnp.transpose(q_pad.reshape(T, B, Q_PAD), (1, 0, 2))[:, :, :N_ACTIONS]
    h_seq = jnp.transpose(h_tm.reshape(T, B, HIDDEN), (1, 0, 2))
    return q, h_seq


# ----------------------------------------------------------------------------
# Deterministic parameter init (PyTorch-style uniform ranges, synthetic).
# GRU weights are stored per gate, transposed (in_features, out_features).
# w3/b3 are padded to Q_PAD columns ONCE here (not per forward call).
# ----------------------------------------------------------------------------
def init_params(key):
    ks = jax.random.split(key, 18)
    kg = 1.0 / jnp.sqrt(HIDDEN)

    def u(k, shape, bound):
        return jax.random.uniform(k, shape, jnp.float32, -bound, bound)

    params = {
        # GRU input projection, per gate (D_IN, H)
        "w_ir": u(ks[0], (D_IN, HIDDEN), kg),
        "w_iz": u(ks[1], (D_IN, HIDDEN), kg),
        "w_in": u(ks[2], (D_IN, HIDDEN), kg),
        "b_ir": u(ks[3], (1, HIDDEN), kg),
        "b_iz": u(ks[4], (1, HIDDEN), kg),
        "b_in": u(ks[5], (1, HIDDEN), kg),
        # GRU recurrent projection, per gate (H, H)
        "w_hr": u(ks[6], (HIDDEN, HIDDEN), kg),
        "w_hz": u(ks[7], (HIDDEN, HIDDEN), kg),
        "w_hn": u(ks[8], (HIDDEN, HIDDEN), kg),
        "b_hr": u(ks[9], (1, HIDDEN), kg),
        "b_hz": u(ks[10], (1, HIDDEN), kg),
        "b_hn": u(ks[11], (1, HIDDEN), kg),
        # MLP head
        "w1": u(ks[12], (HIDDEN, MLP_H), 1.0 / jnp.sqrt(HIDDEN)),
        "b1": u(ks[13], (1, MLP_H), 1.0 / jnp.sqrt(HIDDEN)),
        "w2": u(ks[14], (MLP_H, MLP_H), 1.0 / jnp.sqrt(MLP_H)),
        "b2": u(ks[15], (1, MLP_H), 1.0 / jnp.sqrt(MLP_H)),
        "w3": u(ks[16], (MLP_H, N_ACTIONS), 1.0 / jnp.sqrt(MLP_H)),
        "b3": u(ks[17], (1, N_ACTIONS), 1.0 / jnp.sqrt(MLP_H)),
    }
    # Lane-dense padding of the final Linear, hoisted to init time.
    params["w3p"] = jnp.pad(params["w3"], ((0, 0), (0, Q_PAD - N_ACTIONS)))
    params["b3p"] = jnp.pad(params["b3"], ((0, 0), (0, Q_PAD - N_ACTIONS)))
    return params


# ----------------------------------------------------------------------------
# Pure-JAX reference (mirrors PyTorch GRU + Sequential semantics)
# ----------------------------------------------------------------------------
def dqn_reference(state, prev_action, params, h=None):
    B, T, _ = state.shape
    x = jnp.concatenate([state, prev_action], axis=-1).astype(jnp.float32)
    h0 = (jnp.zeros((B, HIDDEN), jnp.float32) if h is None
          else jnp.reshape(h, (B, HIDDEN)).astype(jnp.float32))

    def cell(h_prev, x_t):
        r = jax.nn.sigmoid(x_t @ params["w_ir"] + params["b_ir"]
                           + h_prev @ params["w_hr"] + params["b_hr"])
        z = jax.nn.sigmoid(x_t @ params["w_iz"] + params["b_iz"]
                           + h_prev @ params["w_hz"] + params["b_hz"])
        n = jnp.tanh(x_t @ params["w_in"] + params["b_in"]
                     + r * (h_prev @ params["w_hn"] + params["b_hn"]))
        h_new = (1.0 - z) * n + z * h_prev
        return h_new, h_new

    _, hs = lax.scan(cell, h0, jnp.transpose(x, (1, 0, 2)))          # (T, B, H)
    hs = jnp.transpose(hs, (1, 0, 2))                                # (B, T, H)
    y = jnp.maximum(hs @ params["w1"] + params["b1"], 0.0)
    y = jnp.maximum(y @ params["w2"] + params["b2"], 0.0)
    q = y @ params["w3"] + params["b3"]
    return q, hs


if __name__ == "__main__":
    key = jax.random.PRNGKey(0)
    k_params, k_state, k_action, k_h = jax.random.split(key, 4)

    params = init_params(k_params)

    B, T = 2, 8
    state = jax.random.normal(k_state, (B, T, N_STATES), jnp.float32)
    prev_action = jax.random.normal(k_action, (B, T, 1), jnp.float32)

    # h = None path
    q, h_seq = dqn_forward(state, prev_action, params)
    jax.block_until_ready((q, h_seq))
    q_ref, h_ref_out = dqn_reference(state, prev_action, params)
    assert q.shape == (B, T, N_ACTIONS) and h_seq.shape == (B, T, HIDDEN)
    assert jnp.allclose(q, q_ref, atol=1e-4, rtol=1e-4)
    assert jnp.allclose(h_seq, h_ref_out, atol=1e-4, rtol=1e-4)

    # explicit initial hidden state path
    h_init = jax.random.normal(k_h, (B, 1, HIDDEN), jnp.float32)
    q2, h_seq2 = dqn_forward(state, prev_action, params, h=h_init)
    jax.block_until_ready((q2, h_seq2))
    q_ref2, h_ref2 = dqn_reference(state, prev_action, params, h=h_init)
    assert jnp.allclose(q2, q_ref2, atol=1e-4, rtol=1e-4)
    assert jnp.allclose(h_seq2, h_ref2, atol=1e-4, rtol=1e-4)

    print("KERNEL_OK")
</pallas_src>

<mosaic_0001>
module attributes {stable_mosaic.version = 11 : i64} {
  func.func @dqn_kernel(%arg0: memref<16x3xf32, #tpu.memory_space<vmem>>, %arg1: memref<2x8xf32, #tpu.memory_space<vmem>>, %arg2: memref<3x8xf32, #tpu.memory_space<vmem>>, %arg3: memref<3x8xf32, #tpu.memory_space<vmem>>, %arg4: memref<3x8xf32, #tpu.memory_space<vmem>>, %arg5: memref<1x8xf32, #tpu.memory_space<vmem>>, %arg6: memref<1x8xf32, #tpu.memory_space<vmem>>, %arg7: memref<1x8xf32, #tpu.memory_space<vmem>>, %arg8: memref<8x8xf32, #tpu.memory_space<vmem>>, %arg9: memref<8x8xf32, #tpu.memory_space<vmem>>, %arg10: memref<8x8xf32, #tpu.memory_space<vmem>>, %arg11: memref<1x8xf32, #tpu.memory_space<vmem>>, %arg12: memref<1x8xf32, #tpu.memory_space<vmem>>, %arg13: memref<1x8xf32, #tpu.memory_space<vmem>>, %arg14: memref<8x128xf32, #tpu.memory_space<vmem>>, %arg15: memref<1x128xf32, #tpu.memory_space<vmem>>, %arg16: memref<128x128xf32, #tpu.memory_space<vmem>>, %arg17: memref<1x128xf32, #tpu.memory_space<vmem>>, %arg18: memref<128x128xf32, #tpu.memory_space<vmem>>, %arg19: memref<1x128xf32, #tpu.memory_space<vmem>>, %arg20: memref<16x128xf32, #tpu.memory_space<vmem>>, %arg21: memref<16x8xf32, #tpu.memory_space<vmem>>) attributes {dimension_semantics = [], scalar_prefetch = 0 : i64, scratch_operands = 0 : i64, tpu.core_type = #tpu.core_type<tc>} {
    %c0 = arith.constant 0 : index
    %c0_0 = arith.constant 0 : index
    %0 = vector.load %arg0[%c0, %c0_0] : memref<16x3xf32, #tpu.memory_space<vmem>>, vector<16x3xf32>
    %c0_1 = arith.constant 0 : index
    %c0_2 = arith.constant 0 : index
    %1 = vector.load %arg2[%c0_1, %c0_2] : memref<3x8xf32, #tpu.memory_space<vmem>>, vector<3x8xf32>
    %cst = arith.constant dense<0.000000e+00> : vector<16x8xf32>
    %2 = tpu.matmul %0, %1, %cst {dimension_numbers = #tpu.dot_dimension_numbers<[1], [0], [0], [1], [0, 0, 1, 1], [], []>} : vector<16x3xf32>, vector<3x8xf32>, vector<16x8xf32> -> vector<16x8xf32>
    %c0_3 = arith.constant 0 : index
    %c0_4 = arith.constant 0 : index
    %3 = vector.load %arg5[%c0_3, %c0_4] : memref<1x8xf32, #tpu.memory_space<vmem>>, vector<1x8xf32>
    %4 = vector.broadcast %3 : vector<1x8xf32> to vector<16x8xf32>
    %5 = arith.addf %2, %4 : vector<16x8xf32>
    %c0_5 = arith.constant 0 : index
    %c0_6 = arith.constant 0 : index
    %6 = vector.load %arg3[%c0_5, %c0_6] : memref<3x8xf32, #tpu.memory_space<vmem>>, vector<3x8xf32>
    %cst_7 = arith.constant dense<0.000000e+00> : vector<16x8xf32>
    %7 = tpu.matmul %0, %6, %cst_7 {dimension_numbers = #tpu.dot_dimension_numbers<[1], [0], [0], [1], [0, 0, 1, 1], [], []>} : vector<16x3xf32>, vector<3x8xf32>, vector<16x8xf32> -> vector<16x8xf32>
    %c0_8 = arith.constant 0 : index
    %c0_9 = arith.constant 0 : index
    %8 = vector.load %arg6[%c0_8, %c0_9] : memref<1x8xf32, #tpu.memory_space<vmem>>, vector<1x8xf32>
    %9 = vector.broadcast %8 : vector<1x8xf32> to vector<16x8xf32>
    %10 = arith.addf %7, %9 : vector<16x8xf32>
    %c0_10 = arith.constant 0 : index
    %c0_11 = arith.constant 0 : index
    %11 = vector.load %arg4[%c0_10, %c0_11] : memref<3x8xf32, #tpu.memory_space<vmem>>, vector<3x8xf32>
    %cst_12 = arith.constant dense<0.000000e+00> : vector<16x8xf32>
    %12 = tpu.matmul %0, %11, %cst_12 {dimension_numbers = #tpu.dot_dimension_numbers<[1], [0], [0], [1], [0, 0, 1, 1], [], []>} : vector<16x3xf32>, vector<3x8xf32>, vector<16x8xf32> -> vector<16x8xf32>
    %c0_13 = arith.constant 0 : index
    %c0_14 = arith.constant 0 : index
    %13 = vector.load %arg7[%c0_13, %c0_14] : memref<1x8xf32, #tpu.memory_space<vmem>>, vector<1x8xf32>
    %14 = vector.broadcast %13 : vector<1x8xf32> to vector<16x8xf32>
    %15 = arith.addf %12, %14 : vector<16x8xf32>
    %c0_15 = arith.constant 0 : index
    %c0_16 = arith.constant 0 : index
    %16 = vector.load %arg8[%c0_15, %c0_16] : memref<8x8xf32, #tpu.memory_space<vmem>>, vector<8x8xf32>
    %c0_17 = arith.constant 0 : index
    %c0_18 = arith.constant 0 : index
    %17 = vector.load %arg9[%c0_17, %c0_18] : memref<8x8xf32, #tpu.memory_space<vmem>>, vector<8x8xf32>
    %c0_19 = arith.constant 0 : index
    %c0_20 = arith.constant 0 : index
    %18 = vector.load %arg10[%c0_19, %c0_20] : memref<8x8xf32, #tpu.memory_space<vmem>>, vector<8x8xf32>
    %c0_21 = arith.constant 0 : index
    %c0_22 = arith.constant 0 : index
    %19 = vector.load %arg11[%c0_21, %c0_22] : memref<1x8xf32, #tpu.memory_space<vmem>>, vector<1x8xf32>
    %c0_23 = arith.constant 0 : index
    %c0_24 = arith.constant 0 : index
    %20 = vector.load %arg12[%c0_23, %c0_24] : memref<1x8xf32, #tpu.memory_space<vmem>>, vector<1x8xf32>
    %c0_25 = arith.constant 0 : index
    %c0_26 = arith.constant 0 : index
    %21 = vector.load %arg13[%c0_25, %c0_26] : memref<1x8xf32, #tpu.memory_space<vmem>>, vector<1x8xf32>
    %c0_27 = arith.constant 0 : index
    %c0_28 = arith.constant 0 : index
    %22 = vector.load %arg1[%c0_27, %c0_28] : memref<2x8xf32, #tpu.memory_space<vmem>>, vector<2x8xf32>
    %23 = vector.extract_strided_slice %22 {offsets = [0, 0], sizes = [2, 1], strides = [1, 1]} : vector<2x8xf32> to vector<2x1xf32>
    %24 = vector.extract_strided_slice %16 {offsets = [0, 0], sizes = [1, 8], strides = [1, 1]} : vector<8x8xf32> to vector<1x8xf32>
    %25 = vector.broadcast %23 : vector<2x1xf32> to vector<2x8xf32>
    %26 = vector.broadcast %24 : vector<1x8xf32> to vector<2x8xf32>
    %27 = arith.mulf %25, %26 : vector<2x8xf32>
    %28 = vector.broadcast %19 : vector<1x8xf32> to vector<2x8xf32>
    %29 = arith.addf %28, %27 : vector<2x8xf32>
    %30 = vector.extract_strided_slice %17 {offsets = [0, 0], sizes = [1, 8], strides = [1, 1]} : vector<8x8xf32> to vector<1x8xf32>
    %31 = vector.broadcast %23 : vector<2x1xf32> to vector<2x8xf32>
    %32 = vector.broadcast %30 : vector<1x8xf32> to vector<2x8xf32>
    %33 = arith.mulf %31, %32 : vector<2x8xf32>
    %34 = vector.broadcast %20 : vector<1x8xf32> to vector<2x8xf32>
    %35 = arith.addf %34, %33 : vector<2x8xf32>
    %36 = vector.extract_strided_slice %18 {offsets = [0, 0], sizes = [1, 8], strides = [1, 1]} : vector<8x8xf32> to vector<1x8xf32>
    %37 = vector.broadcast %23 : vector<2x1xf32> to vector<2x8xf32>
    %38 = vector.broadcast %36 : vector<1x8xf32> to vector<2x8xf32>
    %39 = arith.mulf %37, %38 : vector<2x8xf32>
    %40 = vector.broadcast %21 : vector<1x8xf32> to vector<2x8xf32>
    %41 = arith.addf %40, %39 : vector<2x8xf32>
    %42 = vector.extract_strided_slice %22 {offsets = [0, 1], sizes = [2, 1], strides = [1, 1]} : vector<2x8xf32> to vector<2x1xf32>
    %43 = vector.extract_strided_slice %16 {offsets = [1, 0], sizes = [1, 8], strides = [1, 1]} : vector<8x8xf32> to vector<1x8xf32>
    %44 = vector.broadcast %42 : vector<2x1xf32> to vector<2x8xf32>
    %45 = vector.broadcast %43 : vector<1x8xf32> to vector<2x8xf32>
    %46 = arith.mulf %44, %45 : vector<2x8xf32>
    %47 = arith.addf %29, %46 : vector<2x8xf32>
    %48 = vector.extract_strided_slice %17 {offsets = [1, 0], sizes = [1, 8], strides = [1, 1]} : vector<8x8xf32> to vector<1x8xf32>
    %49 = vector.broadcast %42 : vector<2x1xf32> to vector<2x8xf32>
    %50 = vector.broadcast %48 : vector<1x8xf32> to vector<2x8xf32>
    %51 = arith.mulf %49, %50 : vector<2x8xf32>
    %52 = arith.addf %35, %51 : vector<2x8xf32>
    %53 = vector.extract_strided_slice %18 {offsets = [1, 0], sizes = [1, 8], strides = [1, 1]} : vector<8x8xf32> to vector<1x8xf32>
    %54 = vector.broadcast %42 : vector<2x1xf32> to vector<2x8xf32>
    %55 = vector.broadcast %53 : vector<1x8xf32> to vector<2x8xf32>
    %56 = arith.mulf %54, %55 : vector<2x8xf32>
    %57 = arith.addf %41, %56 : vector<2x8xf32>
    %58 = vector.extract_strided_slice %22 {offsets = [0, 2], sizes = [2, 1], strides = [1, 1]} : vector<2x8xf32> to vector<2x1xf32>
    %59 = vector.extract_strided_slice %16 {offsets = [2, 0], sizes = [1, 8], strides = [1, 1]} : vector<8x8xf32> to vector<1x8xf32>
    %60 = vector.broadcast %58 : vector<2x1xf32> to vector<2x8xf32>
    %61 = vector.broadcast %59 : vector<1x8xf32> to vector<2x8xf32>
    %62 = arith.mulf %60, %61 : vector<2x8xf32>
    %63 = arith.addf %47, %62 : vector<2x8xf32>
    %64 = vector.extract_strided_slice %17 {offsets = [2, 0], sizes = [1, 8], strides = [1, 1]} : vector<8x8xf32> to vector<1x8xf32>
    %65 = vector.broadcast %58 : vector<2x1xf32> to vector<2x8xf32>
    %66 = vector.broadcast %64 : vector<1x8xf32> to vector<2x8xf32>
    %67 = arith.mulf %65, %66 : vector<2x8xf32>
    %68 = arith.addf %52, %67 : vector<2x8xf32>
    %69 = vector.extract_strided_slice %18 {offsets = [2, 0], sizes = [1, 8], strides = [1, 1]} : vector<8x8xf32> to vector<1x8xf32>
    %70 = vector.broadcast %58 : vector<2x1xf32> to vector<2x8xf32>
    %71 = vector.broadcast %69 : vector<1x8xf32> to vector<2x8xf32>
    %72 = arith.mulf %70, %71 : vector<2x8xf32>
    %73 = arith.addf %57, %72 : vector<2x8xf32>
    %74 = vector.extract_strided_slice %22 {offsets = [0, 3], sizes = [2, 1], strides = [1, 1]} : vector<2x8xf32> to vector<2x1xf32>
    %75 = vector.extract_strided_slice %16 {offsets = [3, 0], sizes = [1, 8], strides = [1, 1]} : vector<8x8xf32> to vector<1x8xf32>
    %76 = vector.broadcast %74 : vector<2x1xf32> to vector<2x8xf32>
    %77 = vector.broadcast %75 : vector<1x8xf32> to vector<2x8xf32>
    %78 = arith.mulf %76, %77 : vector<2x8xf32>
    %79 = arith.addf %63, %78 : vector<2x8xf32>
    %80 = vector.extract_strided_slice %17 {offsets = [3, 0], sizes = [1, 8], strides = [1, 1]} : vector<8x8xf32> to vector<1x8xf32>
    %81 = vector.broadcast %74 : vector<2x1xf32> to vector<2x8xf32>
    %82 = vector.broadcast %80 : vector<1x8xf32> to vector<2x8xf32>
    %83 = arith.mulf %81, %82 : vector<2x8xf32>
    %84 = arith.addf %68, %83 : vector<2x8xf32>
    %85 = vector.extract_strided_slice %18 {offsets = [3, 0], sizes = [1, 8], strides = [1, 1]} : vector<8x8xf32> to vector<1x8xf32>
    %86 = vector.broadcast %74 : vector<2x1xf32> to vector<2x8xf32>
    %87 = vector.broadcast %85 : vector<1x8xf32> to vector<2x8xf32>
    %88 = arith.mulf %86, %87 : vector<2x8xf32>
    %89 = arith.addf %73, %88 : vector<2x8xf32>
    %90 = vector.extract_strided_slice %22 {offsets = [0, 4], sizes = [2, 1], strides = [1, 1]} : vector<2x8xf32> to vector<2x1xf32>
    %91 = vector.extract_strided_slice %16 {offsets = [4, 0], sizes = [1, 8], strides = [1, 1]} : vector<8x8xf32> to vector<1x8xf32>
    %92 = vector.broadcast %90 : vector<2x1xf32> to vector<2x8xf32>
    %93 = vector.broadcast %91 : vector<1x8xf32> to vector<2x8xf32>
    %94 = arith.mulf %92, %93 : vector<2x8xf32>
    %95 = arith.addf %79, %94 : vector<2x8xf32>
    %96 = vector.extract_strided_slice %17 {offsets = [4, 0], sizes = [1, 8], strides = [1, 1]} : vector<8x8xf32> to vector<1x8xf32>
    %97 = vector.broadcast %90 : vector<2x1xf32> to vector<2x8xf32>
    %98 = vector.broadcast %96 : vector<1x8xf32> to vector<2x8xf32>
    %99 = arith.mulf %97, %98 : vector<2x8xf32>
    %100 = arith.addf %84, %99 : vector<2x8xf32>
    %101 = vector.extract_strided_slice %18 {offsets = [4, 0], sizes = [1, 8], strides = [1, 1]} : vector<8x8xf32> to vector<1x8xf32>
    %102 = vector.broadcast %90 : vector<2x1xf32> to vector<2x8xf32>
    %103 = vector.broadcast %101 : vector<1x8xf32> to vector<2x8xf32>
    %104 = arith.mulf %102, %103 : vector<2x8xf32>
    %105 = arith.addf %89, %104 : vector<2x8xf32>
    %106 = vector.extract_strided_slice %22 {offsets = [0, 5], sizes = [2, 1], strides = [1, 1]} : vector<2x8xf32> to vector<2x1xf32>
    %107 = vector.extract_strided_slice %16 {offsets = [5, 0], sizes = [1, 8], strides = [1, 1]} : vector<8x8xf32> to vector<1x8xf32>
    %108 = vector.broadcast %106 : vector<2x1xf32> to vector<2x8xf32>
    %109 = vector.broadcast %107 : vector<1x8xf32> to vector<2x8xf32>
    %110 = arith.mulf %108, %109 : vector<2x8xf32>
    %111 = arith.addf %95, %110 : vector<2x8xf32>
    %112 = vector.extract_strided_slice %17 {offsets = [5, 0], sizes = [1, 8], strides = [1, 1]} : vector<8x8xf32> to vector<1x8xf32>
    %113 = vector.broadcast %106 : vector<2x1xf32> to vector<2x8xf32>
    %114 = vector.broadcast %112 : vector<1x8xf32> to vector<2x8xf32>
    %115 = arith.mulf %113, %114 : vector<2x8xf32>
    %116 = arith.addf %100, %115 : vector<2x8xf32>
    %117 = vector.extract_strided_slice %18 {offsets = [5, 0], sizes = [1, 8], strides = [1, 1]} : vector<8x8xf32> to vector<1x8xf32>
    %118 = vector.broadcast %106 : vector<2x1xf32> to vector<2x8xf32>
    %119 = vector.broadcast %117 : vector<1x8xf32> to vector<2x8xf32>
    %120 = arith.mulf %118, %119 : vector<2x8xf32>
    %121 = arith.addf %105, %120 : vector<2x8xf32>
    %122 = vector.extract_strided_slice %22 {offsets = [0, 6], sizes = [2, 1], strides = [1, 1]} : vector<2x8xf32> to vector<2x1xf32>
    %123 = vector.extract_strided_slice %16 {offsets = [6, 0], sizes = [1, 8], strides = [1, 1]} : vector<8x8xf32> to vector<1x8xf32>
    %124 = vector.broadcast %122 : vector<2x1xf32> to vector<2x8xf32>
    %125 = vector.broadcast %123 : vector<1x8xf32> to vector<2x8xf32>
    %126 = arith.mulf %124, %125 : vector<2x8xf32>
    %127 = arith.addf %111, %126 : vector<2x8xf32>
    %128 = vector.extract_strided_slice %17 {offsets = [6, 0], sizes = [1, 8], strides = [1, 1]} : vector<8x8xf32> to vector<1x8xf32>
    %129 = vector.broadcast %122 : vector<2x1xf32> to vector<2x8xf32>
    %130 = vector.broadcast %128 : vector<1x8xf32> to vector<2x8xf32>
    %131 = arith.mulf %129, %130 : vector<2x8xf32>
    %132 = arith.addf %116, %131 : vector<2x8xf32>
    %133 = vector.extract_strided_slice %18 {offsets = [6, 0], sizes = [1, 8], strides = [1, 1]} : vector<8x8xf32> to vector<1x8xf32>
    %134 = vector.broadcast %122 : vector<2x1xf32> to vector<2x8xf32>
    %135 = vector.broadcast %133 : vector<1x8xf32> to vector<2x8xf32>
    %136 = arith.mulf %134, %135 : vector<2x8xf32>
    %137 = arith.addf %121, %136 : vector<2x8xf32>
    %138 = vector.extract_strided_slice %22 {offsets = [0, 7], sizes = [2, 1], strides = [1, 1]} : vector<2x8xf32> to vector<2x1xf32>
    %139 = vector.extract_strided_slice %16 {offsets = [7, 0], sizes = [1, 8], strides = [1, 1]} : vector<8x8xf32> to vector<1x8xf32>
    %140 = vector.broadcast %138 : vector<2x1xf32> to vector<2x8xf32>
    %141 = vector.broadcast %139 : vector<1x8xf32> to vector<2x8xf32>
    %142 = arith.mulf %140, %141 : vector<2x8xf32>
    %143 = arith.addf %127, %142 : vector<2x8xf32>
    %144 = vector.extract_strided_slice %17 {offsets = [7, 0], sizes = [1, 8], strides = [1, 1]} : vector<8x8xf32> to vector<1x8xf32>
    %145 = vector.broadcast %138 : vector<2x1xf32> to vector<2x8xf32>
    %146 = vector.broadcast %144 : vector<1x8xf32> to vector<2x8xf32>
    %147 = arith.mulf %145, %146 : vector<2x8xf32>
    %148 = arith.addf %132, %147 : vector<2x8xf32>
    %149 = vector.extract_strided_slice %18 {offsets = [7, 0], sizes = [1, 8], strides = [1, 1]} : vector<8x8xf32> to vector<1x8xf32>
    %150 = vector.broadcast %138 : vector<2x1xf32> to vector<2x8xf32>
    %151 = vector.broadcast %149 : vector<1x8xf32> to vector<2x8xf32>
    %152 = arith.mulf %150, %151 : vector<2x8xf32>
    %153 = arith.addf %137, %152 : vector<2x8xf32>
    %154 = vector.extract_strided_slice %5 {offsets = [0, 0], sizes = [2, 8], strides = [1, 1]} : vector<16x8xf32> to vector<2x8xf32>
    %155 = arith.addf %154, %143 : vector<2x8xf32>
    %156 = arith.negf %155 : vector<2x8xf32>
    %157 = math.exp %156 : vector<2x8xf32>
    %cst_29 = arith.constant 1.000000e+00 : f32
    %158 = vector.broadcast %cst_29 : f32 to vector<2x8xf32>
    %159 = arith.addf %158, %157 : vector<2x8xf32>
    %160 = arith.divf %158, %159 : vector<2x8xf32>
    %161 = vector.extract_strided_slice %10 {offsets = [0, 0], sizes = [2, 8], strides = [1, 1]} : vector<16x8xf32> to vector<2x8xf32>
    %162 = arith.addf %161, %148 : vector<2x8xf32>
    %163 = arith.negf %162 : vector<2x8xf32>
    %164 = math.exp %163 : vector<2x8xf32>
    %cst_30 = arith.constant 1.000000e+00 : f32
    %165 = vector.broadcast %cst_30 : f32 to vector<2x8xf32>
    %166 = arith.addf %165, %164 : vector<2x8xf32>
    %167 = arith.divf %165, %166 : vector<2x8xf32>
    %168 = vector.extract_strided_slice %15 {offsets = [0, 0], sizes = [2, 8], strides = [1, 1]} : vector<16x8xf32> to vector<2x8xf32>
    %169 = arith.mulf %160, %153 : vector<2x8xf32>
    %170 = arith.addf %168, %169 : vector<2x8xf32>
    %171 = math.tanh %170 : vector<2x8xf32>
    %cst_31 = arith.constant 1.000000e+00 : f32
    %172 = vector.broadcast %cst_31 : f32 to vector<2x8xf32>
    %173 = arith.subf %172, %167 : vector<2x8xf32>
    %174 = arith.mulf %173, %171 : vector<2x8xf32>
    %175 = arith.mulf %167, %22 : vector<2x8xf32>
    %176 = arith.addf %174, %175 : vector<2x8xf32>
    %c0_32 = arith.constant 0 : index
    %c0_33 = arith.constant 0 : index
    %177 = vector.load %arg21[%c0_32, %c0_33] : memref<16x8xf32, #tpu.memory_space<vmem>>, vector<2x8xf32>
    tpu.vector_store %arg21[%c0_32, %c0_33], %176 {strides = array<i32>} : memref<16x8xf32, #tpu.memory_space<vmem>>, vector<2x8xf32>,
    %178 = vector.extract_strided_slice %176 {offsets = [0, 0], sizes = [2, 1], strides = [1, 1]} : vector<2x8xf32> to vector<2x1xf32>
    %179 = vector.extract_strided_slice %16 {offsets = [0, 0], sizes = [1, 8], strides = [1, 1]} : vector<8x8xf32> to vector<1x8xf32>
    %180 = vector.broadcast %178 : vector<2x1xf32> to vector<2x8xf32>
    %181 = vector.broadcast %179 : vector<1x8xf32> to vector<2x8xf32>
    %182 = arith.mulf %180, %181 : vector<2x8xf32>
    %183 = vector.broadcast %19 : vector<1x8xf32> to vector<2x8xf32>
    %184 = arith.addf %183, %182 : vector<2x8xf32>
    %185 = vector.extract_strided_slice %17 {offsets = [0, 0], sizes = [1, 8], strides = [1, 1]} : vector<8x8xf32> to vector<1x8xf32>
    %186 = vector.broadcast %178 : vector<2x1xf32> to vector<2x8xf32>
    %187 = vector.broadcast %185 : vector<1x8xf32> to vector<2x8xf32>
    %188 = arith.mulf %186, %187 : vector<2x8xf32>
    %189 = vector.broadcast %20 : vector<1x8xf32> to vector<2x8xf32>
    %190 = arith.addf %189, %188 : vector<2x8xf32>
    %191 = vector.extract_strided_slice %18 {offsets = [0, 0], sizes = [1, 8], strides = [1, 1]} : vector<8x8xf32> to vector<1x8xf32>
    %192 = vector.broadcast %178 : vector<2x1xf32> to vector<2x8xf32>
    %193 = vector.broadcast %191 : vector<1x8xf32> to vector<2x8xf32>
    %194 = arith.mulf %192, %193 : vector<2x8xf32>
    %195 = vector.broadcast %21 : vector<1x8xf32> to vector<2x8xf32>
    %196 = arith.addf %195, %194 : vector<2x8xf32>
    %197 = vector.extract_strided_slice %176 {offsets = [0, 1], sizes = [2, 1], strides = [1, 1]} : vector<2x8xf32> to vector<2x1xf32>
    %198 = vector.extract_strided_slice %16 {offsets = [1, 0], sizes = [1, 8], strides = [1, 1]} : vector<8x8xf32> to vector<1x8xf32>
    %199 = vector.broadcast %197 : vector<2x1xf32> to vector<2x8xf32>
    %200 = vector.broadcast %198 : vector<1x8xf32> to vector<2x8xf32>
    %201 = arith.mulf %199, %200 : vector<2x8xf32>
    %202 = arith.addf %184, %201 : vector<2x8xf32>
    %203 = vector.extract_strided_slice %17 {offsets = [1, 0], sizes = [1, 8], strides = [1, 1]} : vector<8x8xf32> to vector<1x8xf32>
    %204 = vector.broadcast %197 : vector<2x1xf32> to vector<2x8xf32>
    %205 = vector.broadcast %203 : vector<1x8xf32> to vector<2x8xf32>
    %206 = arith.mulf %204, %205 : vector<2x8xf32>
    %207 = arith.addf %190, %206 : vector<2x8xf32>
    %208 = vector.extract_strided_slice %18 {offsets = [1, 0], sizes = [1, 8], strides = [1, 1]} : vector<8x8xf32> to vector<1x8xf32>
    %209 = vector.broadcast %197 : vector<2x1xf32> to vector<2x8xf32>
    %210 = vector.broadcast %208 : vector<1x8xf32> to vector<2x8xf32>
    %211 = arith.mulf %209, %210 : vector<2x8xf32>
    %212 = arith.addf %196, %211 : vector<2x8xf32>
    %213 = vector.extract_strided_slice %176 {offsets = [0, 2], sizes = [2, 1], strides = [1, 1]} : vector<2x8xf32> to vector<2x1xf32>
    %214 = vector.extract_strided_slice %16 {offsets = [2, 0], sizes = [1, 8], strides = [1, 1]} : vector<8x8xf32> to vector<1x8xf32>
    %215 = vector.broadcast %213 : vector<2x1xf32> to vector<2x8xf32>
    %216 = vector.broadcast %214 : vector<1x8xf32> to vector<2x8xf32>
    %217 = arith.mulf %215, %216 : vector<2x8xf32>
    %218 = arith.addf %202, %217 : vector<2x8xf32>
    %219 = vector.extract_strided_slice %17 {offsets = [2, 0], sizes = [1, 8], strides = [1, 1]} : vector<8x8xf32> to vector<1x8xf32>
    %220 = vector.broadcast %213 : vector<2x1xf32> to vector<2x8xf32>
    %221 = vector.broadcast %219 : vector<1x8xf32> to vector<2x8xf32>
    %222 = arith.mulf %220, %221 : vector<2x8xf32>
    %223 = arith.addf %207, %222 : vector<2x8xf32>
    %224 = vector.extract_strided_slice %18 {offsets = [2, 0], sizes = [1, 8], strides = [1, 1]} : vector<8x8xf32> to vector<1x8xf32>
    %225 = vector.broadcast %213 : vector<2x1xf32> to vector<2x8xf32>
    %226 = vector.broadcast %224 : vector<1x8xf32> to vector<2x8xf32>
    %227 = arith.mulf %225, %226 : vector<2x8xf32>
    %228 = arith.addf %212, %227 : vector<2x8xf32>
    %229 = vector.extract_strided_slice %176 {offsets = [0, 3], sizes = [2, 1], strides = [1, 1]} : vector<2x8xf32> to vector<2x1xf32>
    %230 = vector.extract_strided_slice %16 {offsets = [3, 0], sizes = [1, 8], strides = [1, 1]} : vector<8x8xf32> to vector<1x8xf32>
    %231 = vector.broadcast %229 : vector<2x1xf32> to vector<2x8xf32>
    %232 = vector.broadcast %230 : vector<1x8xf32> to vector<2x8xf32>
    %233 = arith.mulf %231, %232 : vector<2x8xf32>
    %234 = arith.addf %218, %233 : vector<2x8xf32>
    %235 = vector.extract_strided_slice %17 {offsets = [3, 0], sizes = [1, 8], strides = [1, 1]} : vector<8x8xf32> to vector<1x8xf32>
    %236 = vector.broadcast %229 : vector<2x1xf32> to vector<2x8xf32>
    %237 = vector.broadcast %235 : vector<1x8xf32> to vector<2x8xf32>
    %238 = arith.mulf %236, %237 : vector<2x8xf32>
    %239 = arith.addf %223, %238 : vector<2x8xf32>
    %240 = vector.extract_strided_slice %18 {offsets = [3, 0], sizes = [1, 8], strides = [1, 1]} : vector<8x8xf32> to vector<1x8xf32>
    %241 = vector.broadcast %229 : vector<2x1xf32> to vector<2x8xf32>
    %242 = vector.broadcast %240 : vector<1x8xf32> to vector<2x8xf32>
    %243 = arith.mulf %241, %242 : vector<2x8xf32>
    %244 = arith.addf %228, %243 : vector<2x8xf32>
    %245 = vector.extract_strided_slice %176 {offsets = [0, 4], sizes = [2, 1], strides = [1, 1]} : vector<2x8xf32> to vector<2x1xf32>
    %246 = vector.extract_strided_slice %16 {offsets = [4, 0], sizes = [1, 8], strides = [1, 1]} : vector<8x8xf32> to vector<1x8xf32>
    %247 = vector.broadcast %245 : vector<2x1xf32> to vector<2x8xf32>
    %248 = vector.broadcast %246 : vector<1x8xf32> to vector<2x8xf32>
    %249 = arith.mulf %247, %248 : vector<2x8xf32>
    %250 = arith.addf %234, %249 : vector<2x8xf32>
    %251 = vector.extract_strided_slice %17 {offsets = [4, 0], sizes = [1, 8], strides = [1, 1]} : vector<8x8xf32> to vector<1x8xf32>
    %252 = vector.broadcast %245 : vector<2x1xf32> to vector<2x8xf32>
    %253 = vector.broadcast %251 : vector<1x8xf32> to vector<2x8xf32>
    %254 = arith.mulf %252, %253 : vector<2x8xf32>
    %255 = arith.addf %239, %254 : vector<2x8xf32>
    %256 = vector.extract_strided_slice %18 {offsets = [4, 0], sizes = [1, 8], strides = [1, 1]} : vector<8x8xf32> to vector<1x8xf32>
    %257 = vector.broadcast %245 : vector<2x1xf32> to vector<2x8xf32>
    %258 = vector.broadcast %256 : vector<1x8xf32> to vector<2x8xf32>
    %259 = arith.mulf %257, %258 : vector<2x8xf32>
    %260 = arith.addf %244, %259 : vector<2x8xf32>
    %261 = vector.extract_strided_slice %176 {offsets = [0, 5], sizes = [2, 1], strides = [1, 1]} : vector<2x8xf32> to vector<2x1xf32>
    %262 = vector.extract_strided_slice %16 {offsets = [5, 0], sizes = [1, 8], strides = [1, 1]} : vector<8x8xf32> to vector<1x8xf32>
    %263 = vector.broadcast %261 : vector<2x1xf32> to vector<2x8xf32>
    %264 = vector.broadcast %262 : vector<1x8xf32> to vector<2x8xf32>
    %265 = arith.mulf %263, %264 : vector<2x8xf32>
    %266 = arith.addf %250, %265 : vector<2x8xf32>
    %267 = vector.extract_strided_slice %17 {offsets = [5, 0], sizes = [1, 8], strides = [1, 1]} : vector<8x8xf32> to vector<1x8xf32>
    %268 = vector.broadcast %261 : vector<2x1xf32> to vector<2x8xf32>
    %269 = vector.broadcast %267 : vector<1x8xf32> to vector<2x8xf32>
    %270 = arith.mulf %268, %269 : vector<2x8xf32>
    %271 = arith.addf %255, %270 : vector<2x8xf32>
    %272 = vector.extract_strided_slice %18 {offsets = [5, 0], sizes = [1, 8], strides = [1, 1]} : vector<8x8xf32> to vector<1x8xf32>
    %273 = vector.broadcast %261 : vector<2x1xf32> to vector<2x8xf32>
    %274 = vector.broadcast %272 : vector<1x8xf32> to vector<2x8xf32>
    %275 = arith.mulf %273, %274 : vector<2x8xf32>
    %276 = arith.addf %260, %275 : vector<2x8xf32>
    %277 = vector.extract_strided_slice %176 {offsets = [0, 6], sizes = [2, 1], strides = [1, 1]} : vector<2x8xf32> to vector<2x1xf32>
    %278 = vector.extract_strided_slice %16 {offsets = [6, 0], sizes = [1, 8], strides = [1, 1]} : vector<8x8xf32> to vector<1x8xf32>
    %279 = vector.broadcast %277 : vector<2x1xf32> to vector<2x8xf32>
    %280 = vector.broadcast %278 : vector<1x8xf32> to vector<2x8xf32>
    %281 = arith.mulf %279, %280 : vector<2x8xf32>
    %282 = arith.addf %266, %281 : vector<2x8xf32>
    %283 = vector.extract_strided_slice %17 {offsets = [6, 0], sizes = [1, 8], strides = [1, 1]} : vector<8x8xf32> to vector<1x8xf32>
    %284 = vector.broadcast %277 : vector<2x1xf32> to vector<2x8xf32>
    %285 = vector.broadcast %283 : vector<1x8xf32> to vector<2x8xf32>
    %286 = arith.mulf %284, %285 : vector<2x8xf32>
    %287 = arith.addf %271, %286 : vector<2x8xf32>
    %288 = vector.extract_strided_slice %18 {offsets = [6, 0], sizes = [1, 8], strides = [1, 1]} : vector<8x8xf32> to vector<1x8xf32>
    %289 = vector.broadcast %277 : vector<2x1xf32> to vector<2x8xf32>
    %290 = vector.broadcast %288 : vector<1x8xf32> to vector<2x8xf32>
    %291 = arith.mulf %289, %290 : vector<2x8xf32>
    %292 = arith.addf %276, %291 : vector<2x8xf32>
    %293 = vector.extract_strided_slice %176 {offsets = [0, 7], sizes = [2, 1], strides = [1, 1]} : vector<2x8xf32> to vector<2x1xf32>
    %294 = vector.extract_strided_slice %16 {offsets = [7, 0], sizes = [1, 8], strides = [1, 1]} : vector<8x8xf32> to vector<1x8xf32>
    %295 = vector.broadcast %293 : vector<2x1xf32> to vector<2x8xf32>
    %296 = vector.broadcast %294 : vector<1x8xf32> to vector<2x8xf32>
    %297 = arith.mulf %295, %296 : vector<2x8xf32>
    %298 = arith.addf %282, %297 : vector<2x8xf32>
    %299 = vector.extract_strided_slice %17 {offsets = [7, 0], sizes = [1, 8], strides = [1, 1]} : vector<8x8xf32> to vector<1x8xf32>
    %300 = vector.broadcast %293 : vector<2x1xf32> to vector<2x8xf32>
    %301 = vector.broadcast %299 : vector<1x8xf32> to vector<2x8xf32>
    %302 = arith.mulf %300, %301 : vector<2x8xf32>
    %303 = arith.addf %287, %302 : vector<2x8xf32>
    %304 = vector.extract_strided_slice %18 {offsets = [7, 0], sizes = [1, 8], strides = [1, 1]} : vector<8x8xf32> to vector<1x8xf32>
    %305 = vector.broadcast %293 : vector<2x1xf32> to vector<2x8xf32>
    %306 = vector.broadcast %304 : vector<1x8xf32> to vector<2x8xf32>
    %307 = arith.mulf %305, %306 : vector<2x8xf32>
    %308 = arith.addf %292, %307 : vector<2x8xf32>
    %309 = vector.extract_strided_slice %5 {offsets = [2, 0], sizes = [2, 8], strides = [1, 1]} : vector<16x8xf32> to vector<2x8xf32>
    %310 = arith.addf %309, %298 : vector<2x8xf32>
    %311 = arith.negf %310 : vector<2x8xf32>
    %312 = math.exp %311 : vector<2x8xf32>
    %cst_34 = arith.constant 1.000000e+00 : f32
    %313 = vector.broadcast %cst_34 : f32 to vector<2x8xf32>
    %314 = arith.addf %313, %312 : vector<2x8xf32>
    %315 = arith.divf %313, %314 : vector<2x8xf32>
    %316 = vector.extract_strided_slice %10 {offsets = [2, 0], sizes = [2, 8], strides = [1, 1]} : vector<16x8xf32> to vector<2x8xf32>
    %317 = arith.addf %316, %303 : vector<2x8xf32>
    %318 = arith.negf %317 : vector<2x8xf32>
    %319 = math.exp %318 : vector<2x8xf32>
    %cst_35 = arith.constant 1.000000e+00 : f32
    %320 = vector.broadcast %cst_35 : f32 to vector<2x8xf32>
    %321 = arith.addf %320, %319 : vector<2x8xf32>
    %322 = arith.divf %320, %321 : vector<2x8xf32>
    %323 = vector.extract_strided_slice %15 {offsets = [2, 0], sizes = [2, 8], strides = [1, 1]} : vector<16x8xf32> to vector<2x8xf32>
    %324 = arith.mulf %315, %308 : vector<2x8xf32>
    %325 = arith.addf %323, %324 : vector<2x8xf32>
    %326 = math.tanh %325 : vector<2x8xf32>
    %cst_36 = arith.constant 1.000000e+00 : f32
    %327 = vector.broadcast %cst_36 : f32 to vector<2x8xf32>
    %328 = arith.subf %327, %322 : vector<2x8xf32>
    %329 = arith.mulf %328, %326 : vector<2x8xf32>
    %330 = arith.mulf %322, %176 : vector<2x8xf32>
    %331 = arith.addf %329, %330 : vector<2x8xf32>
    %c2 = arith.constant 2 : index
    %c0_37 = arith.constant 0 : index
    %332 = vector.load %arg21[%c2, %c0_37] : memref<16x8xf32, #tpu.memory_space<vmem>>, vector<2x8xf32>
    tpu.vector_store %arg21[%c2, %c0_37], %331 {strides = array<i32>} : memref<16x8xf32, #tpu.memory_space<vmem>>, vector<2x8xf32>,
    %333 = vector.extract_strided_slice %331 {offsets = [0, 0], sizes = [2, 1], strides = [1, 1]} : vector<2x8xf32> to vector<2x1xf32>
    %334 = vector.extract_strided_slice %16 {offsets = [0, 0], sizes = [1, 8], strides = [1, 1]} : vector<8x8xf32> to vector<1x8xf32>
    %335 = vector.broadcast %333 : vector<2x1xf32> to vector<2x8xf32>
    %336 = vector.broadcast %334 : vector<1x8xf32> to vector<2x8xf32>
    %337 = arith.mulf %335, %336 : vector<2x8xf32>
    %338 = vector.broadcast %19 : vector<1x8xf32> to vector<2x8xf32>
    %339 = arith.addf %338, %337 : vector<2x8xf32>
    %340 = vector.extract_strided_slice %17 {offsets = [0, 0], sizes = [1, 8], strides = [1, 1]} : vector<8x8xf32> to vector<1x8xf32>
    %341 = vector.broadcast %333 : vector<2x1xf32> to vector<2x8xf32>
    %342 = vector.broadcast %340 : vector<1x8xf32> to vector<2x8xf32>
    %343 = arith.mulf %341, %342 : vector<2x8xf32>
    %344 = vector.broadcast %20 : vector<1x8xf32> to vector<2x8xf32>
    %345 = arith.addf %344, %343 : vector<2x8xf32>
    %346 = vector.extract_strided_slice %18 {offsets = [0, 0], sizes = [1, 8], strides = [1, 1]} : vector<8x8xf32> to vector<1x8xf32>
    %347 = vector.broadcast %333 : vector<2x1xf32> to vector<2x8xf32>
    %348 = vector.broadcast %346 : vector<1x8xf32> to vector<2x8xf32>
    %349 = arith.mulf %347, %348 : vector<2x8xf32>
    %350 = vector.broadcast %21 : vector<1x8xf32> to vector<2x8xf32>
    %351 = arith.addf %350, %349 : vector<2x8xf32>
    %352 = vector.extract_strided_slice %331 {offsets = [0, 1], sizes = [2, 1], strides = [1, 1]} : vector<2x8xf32> to vector<2x1xf32>
    %353 = vector.extract_strided_slice %16 {offsets = [1, 0], sizes = [1, 8], strides = [1, 1]} : vector<8x8xf32> to vector<1x8xf32>
    %354 = vector.broadcast %352 : vector<2x1xf32> to vector<2x8xf32>
    %355 = vector.broadcast %353 : vector<1x8xf32> to vector<2x8xf32>
    %356 = arith.mulf %354, %355 : vector<2x8xf32>
    %357 = arith.addf %339, %356 : vector<2x8xf32>
    %358 = vector.extract_strided_slice %17 {offsets = [1, 0], sizes = [1, 8], strides = [1, 1]} : vector<8x8xf32> to vector<1x8xf32>
    %359 = vector.broadcast %352 : vector<2x1xf32> to vector<2x8xf32>
    %360 = vector.broadcast %358 : vector<1x8xf32> to vector<2x8xf32>
    %361 = arith.mulf %359, %360 : vector<2x8xf32>
    %362 = arith.addf %345, %361 : vector<2x8xf32>
    %363 = vector.extract_strided_slice %18 {offsets = [1, 0], sizes = [1, 8], strides = [1, 1]} : vector<8x8xf32> to vector<1x8xf32>
    %364 = vector.broadcast %352 : vector<2x1xf32> to vector<2x8xf32>
    %365 = vector.broadcast %363 : vector<1x8xf32> to vector<2x8xf32>
    %366 = arith.mulf %364, %365 : vector<2x8xf32>
    %367 = arith.addf %351, %366 : vector<2x8xf32>
    %368 = vector.extract_strided_slice %331 {offsets = [0, 2], sizes = [2, 1], strides = [1, 1]} : vector<2x8xf32> to vector<2x1xf32>
    %369 = vector.extract_strided_slice %16 {offsets = [2, 0], sizes = [1, 8], strides = [1, 1]} : vector<8x8xf32> to vector<1x8xf32>
    %370 = vector.broadcast %368 : vector<2x1xf32> to vector<2x8xf32>
    %371 = vector.broadcast %369 : vector<1x8xf32> to vector<2x8xf32>
    %372 = arith.mulf %370, %371 : vector<2x8xf32>
    %373 = arith.addf %357, %372 : vector<2x8xf32>
    %374 = vector.extract_strided_slice %17 {offsets = [2, 0], sizes = [1, 8], strides = [1, 1]} : vector<8x8xf32> to vector<1x8xf32>
    %375 = vector.broadcast %368 : vector<2x1xf32> to vector<2x8xf32>
    %376 = vector.broadcast %374 : vector<1x8xf32> to vector<2x8xf32>
    %377 = arith.mulf %375, %376 : vector<2x8xf32>
    %378 = arith.addf %362, %377 : vector<2x8xf32>
    %379 = vector.extract_strided_slice %18 {offsets = [2, 0], sizes = [1, 8], strides = [1, 1]} : vector<8x8xf32> to vector<1x8xf32>
    %380 = vector.broadcast %368 : vector<2x1xf32> to vector<2x8xf32>
    %381 = vector.broadcast %379 : vector<1x8xf32> to vector<2x8xf32>
    %382 = arith.mulf %380, %381 : vector<2x8xf32>
    %383 = arith.addf %367, %382 : vector<2x8xf32>
    %384 = vector.extract_strided_slice %331 {offsets = [0, 3], sizes = [2, 1], strides = [1, 1]} : vector<2x8xf32> to vector<2x1xf32>
    %385 = vector.extract_strided_slice %16 {offsets = [3, 0], sizes = [1, 8], strides = [1, 1]} : vector<8x8xf32> to vector<1x8xf32>
    %386 = vector.broadcast %384 : vector<2x1xf32> to vector<2x8xf32>
    %387 = vector.broadcast %385 : vector<1x8xf32> to vector<2x8xf32>
    %388 = arith.mulf %386, %387 : vector<2x8xf32>
    %389 = arith.addf %373, %388 : vector<2x8xf32>
    %390 = vector.extract_strided_slice %17 {offsets = [3, 0], sizes = [1, 8], strides = [1, 1]} : vector<8x8xf32> to vector<1x8xf32>
    %391 = vector.broadcast %384 : vector<2x1xf32> to vector<2x8xf32>
    %392 = vector.broadcast %390 : vector<1x8xf32> to vector<2x8xf32>
    %393 = arith.mulf %391, %392 : vector<2x8xf32>
    %394 = arith.addf %378, %393 : vector<2x8xf32>
    %395 = vector.extract_strided_slice %18 {offsets = [3, 0], sizes = [1, 8], strides = [1, 1]} : vector<8x8xf32> to vector<1x8xf32>
    %396 = vector.broadcast %384 : vector<2x1xf32> to vector<2x8xf32>
    %397 = vector.broadcast %395 : vector<1x8xf32> to vector<2x8xf32>
    %398 = arith.mulf %396, %397 : vector<2x8xf32>
    %399 = arith.addf %383, %398 : vector<2x8xf32>
    %400 = vector.extract_strided_slice %331 {offsets = [0, 4], sizes = [2, 1], strides = [1, 1]} : vector<2x8xf32> to vector<2x1xf32>
    %401 = vector.extract_strided_slice %16 {offsets = [4, 0], sizes = [1, 8], strides = [1, 1]} : vector<8x8xf32> to vector<1x8xf32>
    %402 = vector.broadcast %400 : vector<2x1xf32> to vector<2x8xf32>
    %403 = vector.broadcast %401 : vector<1x8xf32> to vector<2x8xf32>
    %404 = arith.mulf %402, %403 : vector<2x8xf32>
    %405 = arith.addf %389, %404 : vector<2x8xf32>
    %406 = vector.extract_strided_slice %17 {offsets = [4, 0], sizes = [1, 8], strides = [1, 1]} : vector<8x8xf32> to vector<1x8xf32>
    %407 = vector.broadcast %400 : vector<2x1xf32> to vector<2x8xf32>
    %408 = vector.broadcast %406 : vector<1x8xf32> to vector<2x8xf32>
    %409 = arith.mulf %407, %408 : vector<2x8xf32>
    %410 = arith.addf %394, %409 : vector<2x8xf32>
    %411 = vector.extract_strided_slice %18 {offsets = [4, 0], sizes = [1, 8], strides = [1, 1]} : vector<8x8xf32> to vector<1x8xf32>
    %412 = vector.broadcast %400 : vector<2x1xf32> to vector<2x8xf32>
    %413 = vector.broadcast %411 : vector<1x8xf32> to vector<2x8xf32>
    %414 = arith.mulf %412, %413 : vector<2x8xf32>
    %415 = arith.addf %399, %414 : vector<2x8xf32>
    %416 = vector.extract_strided_slice %331 {offsets = [0, 5], sizes = [2, 1], strides = [1, 1]} : vector<2x8xf32> to vector<2x1xf32>
    %417 = vector.extract_strided_slice %16 {offsets = [5, 0], sizes = [1, 8], strides = [1, 1]} : vector<8x8xf32> to vector<1x8xf32>
    %418 = vector.broadcast %416 : vector<2x1xf32> to vector<2x8xf32>
    %419 = vector.broadcast %417 : vector<1x8xf32> to vector<2x8xf32>
    %420 = arith.mulf %418, %419 : vector<2x8xf32>
    %421 = arith.addf %405, %420 : vector<2x8xf32>
    %422 = vector.extract_strided_slice %17 {offsets = [5, 0], sizes = [1, 8], strides = [1, 1]} : vector<8x8xf32> to vector<1x8xf32>
    %423 = vector.broadcast %416 : vector<2x1xf32> to vector<2x8xf32>
    %424 = vector.broadcast %422 : vector<1x8xf32> to vector<2x8xf32>
    %425 = arith.mulf %423, %424 : vector<2x8xf32>
    %426 = arith.addf %410, %425 : vector<2x8xf32>
    %427 = vector.extract_strided_slice %18 {offsets = [5, 0], sizes = [1, 8], strides = [1, 1]} : vector<8x8xf32> to vector<1x8xf32>
    %428 = vector.broadcast %416 : vector<2x1xf32> to vector<2x8xf32>
    %429 = vector.broadcast %427 : vector<1x8xf32> to vector<2x8xf32>
    %430 = arith.mulf %428, %429 : vector<2x8xf32>
    %431 = arith.addf %415, %430 : vector<2x8xf32>
    %432 = vector.extract_strided_slice %331 {offsets = [0, 6], sizes = [2, 1], strides = [1, 1]} : vector<2x8xf32> to vector<2x1xf32>
    %433 = vector.extract_strided_slice %16 {offsets = [6, 0], sizes = [1, 8], strides = [1, 1]} : vector<8x8xf32> to vector<1x8xf32>
    %434 = vector.broadcast %432 : vector<2x1xf32> to vector<2x8xf32>
    %435 = vector.broadcast %433 : vector<1x8xf32> to vector<2x8xf32>
    %436 = arith.mulf %434, %435 : vector<2x8xf32>
    %437 = arith.addf %421, %436 : vector<2x8xf32>
    %438 = vector.extract_strided_slice %17 {offsets = [6, 0], sizes = [1, 8], strides = [1, 1]} : vector<8x8xf32> to vector<1x8xf32>
    %439 = vector.broadcast %432 : vector<2x1xf32> to vector<2x8xf32>
    %440 = vector.broadcast %438 : vector<1x8xf32> to vector<2x8xf32>
    %441 = arith.mulf %439, %440 : vector<2x8xf32>
    %442 = arith.addf %426, %441 : vector<2x8xf32>
    %443 = vector.extract_strided_slice %18 {offsets = [6, 0], sizes = [1, 8], strides = [1, 1]} : vector<8x8xf32> to vector<1x8xf32>
    %444 = vector.broadcast %432 : vector<2x1xf32> to vector<2x8xf32>
    %445 = vector.broadcast %443 : vector<1x8xf32> to vector<2x8xf32>
    %446 = arith.mulf %444, %445 : vector<2x8xf32>
    %447 = arith.addf %431, %446 : vector<2x8xf32>
    %448 = vector.extract_strided_slice %331 {offsets = [0, 7], sizes = [2, 1], strides = [1, 1]} : vector<2x8xf32> to vector<2x1xf32>
    %449 = vector.extract_strided_slice %16 {offsets = [7, 0], sizes = [1, 8], strides = [1, 1]} : vector<8x8xf32> to vector<1x8xf32>
    %450 = vector.broadcast %448 : vector<2x1xf32> to vector<2x8xf32>
    %451 = vector.broadcast %449 : vector<1x8xf32> to vector<2x8xf32>
    %452 = arith.mulf %450, %451 : vector<2x8xf32>
    %453 = arith.addf %437, %452 : vector<2x8xf32>
    %454 = vector.extract_strided_slice %17 {offsets = [7, 0], sizes = [1, 8], strides = [1, 1]} : vector<8x8xf32> to vector<1x8xf32>
    %455 = vector.broadcast %448 : vector<2x1xf32> to vector<2x8xf32>
    %456 = vector.broadcast %454 : vector<1x8xf32> to vector<2x8xf32>
    %457 = arith.mulf %455, %456 : vector<2x8xf32>
    %458 = arith.addf %442, %457 : vector<2x8xf32>
    %459 = vector.extract_strided_slice %18 {offsets = [7, 0], sizes = [1, 8], strides = [1, 1]} : vector<8x8xf32> to vector<1x8xf32>
    %460 = vector.broadcast %448 : vector<2x1xf32> to vector<2x8xf32>
    %461 = vector.broadcast %459 : vector<1x8xf32> to vector<2x8xf32>
    %462 = arith.mulf %460, %461 : vector<2x8xf32>
    %463 = arith.addf %447, %462 : vector<2x8xf32>
    %464 = vector.extract_strided_slice %5 {offsets = [4, 0], sizes = [2, 8], strides = [1, 1]} : vector<16x8xf32> to vector<2x8xf32>
    %465 = arith.addf %464, %453 : vector<2x8xf32>
    %466 = arith.negf %465 : vector<2x8xf32>
    %467 = math.exp %466 : vector<2x8xf32>
    %cst_38 = arith.constant 1.000000e+00 : f32
    %468 = vector.broadcast %cst_38 : f32 to vector<2x8xf32>
    %469 = arith.addf %468, %467 : vector<2x8xf32>
    %470 = arith.divf %468, %469 : vector<2x8xf32>
    %471 = vector.extract_strided_slice %10 {offsets = [4, 0], sizes = [2, 8], strides = [1, 1]} : vector<16x8xf32> to vector<2x8xf32>
    %472 = arith.addf %471, %458 : vector<2x8xf32>
    %473 = arith.negf %472 : vector<2x8xf32>
    %474 = math.exp %473 : vector<2x8xf32>
    %cst_39 = arith.constant 1.000000e+00 : f32
    %475 = vector.broadcast %cst_39 : f32 to vector<2x8xf32>
    %476 = arith.addf %475, %474 : vector<2x8xf32>
    %477 = arith.divf %475, %476 : vector<2x8xf32>
    %478 = vector.extract_strided_slice %15 {offsets = [4, 0], sizes = [2, 8], strides = [1, 1]} : vector<16x8xf32> to vector<2x8xf32>
    %479 = arith.mulf %470, %463 : vector<2x8xf32>
    %480 = arith.addf %478, %479 : vector<2x8xf32>
    %481 = math.tanh %480 : vector<2x8xf32>
    %cst_40 = arith.constant 1.000000e+00 : f32
    %482 = vector.broadcast %cst_40 : f32 to vector<2x8xf32>
    %483 = arith.subf %482, %477 : vector<2x8xf32>
    %484 = arith.mulf %483, %481 : vector<2x8xf32>
    %485 = arith.mulf %477, %331 : vector<2x8xf32>
    %486 = arith.addf %484, %485 : vector<2x8xf32>
    %c4 = arith.constant 4 : index
    %c0_41 = arith.constant 0 : index
    %487 = vector.load %arg21[%c4, %c0_41] : memref<16x8xf32, #tpu.memory_space<vmem>>, vector<2x8xf32>
    tpu.vector_store %arg21[%c4, %c0_41], %486 {strides = array<i32>} : memref<16x8xf32, #tpu.memory_space<vmem>>, vector<2x8xf32>,
    %488 = vector.extract_strided_slice %486 {offsets = [0, 0], sizes = [2, 1], strides = [1, 1]} : vector<2x8xf32> to vector<2x1xf32>
    %489 = vector.extract_strided_slice %16 {offsets = [0, 0], sizes = [1, 8], strides = [1, 1]} : vector<8x8xf32> to vector<1x8xf32>
    %490 = vector.broadcast %488 : vector<2x1xf32> to vector<2x8xf32>
    %491 = vector.broadcast %489 : vector<1x8xf32> to vector<2x8xf32>
    %492 = arith.mulf %490, %491 : vector<2x8xf32>
    %493 = vector.broadcast %19 : vector<1x8xf32> to vector<2x8xf32>
    %494 = arith.addf %493, %492 : vector<2x8xf32>
    %495 = vector.extract_strided_slice %17 {offsets = [0, 0], sizes = [1, 8], strides = [1, 1]} : vector<8x8xf32> to vector<1x8xf32>
    %496 = vector.broadcast %488 : vector<2x1xf32> to vector<2x8xf32>
    %497 = vector.broadcast %495 : vector<1x8xf32> to vector<2x8xf32>
    %498 = arith.mulf %496, %497 : vector<2x8xf32>
    %499 = vector.broadcast %20 : vector<1x8xf32> to vector<2x8xf32>
    %500 = arith.addf %499, %498 : vector<2x8xf32>
    %501 = vector.extract_strided_slice %18 {offsets = [0, 0], sizes = [1, 8], strides = [1, 1]} : vector<8x8xf32> to vector<1x8xf32>
    %502 = vector.broadcast %488 : vector<2x1xf32> to vector<2x8xf32>
    %503 = vector.broadcast %501 : vector<1x8xf32> to vector<2x8xf32>
    %504 = arith.mulf %502, %503 : vector<2x8xf32>
    %505 = vector.broadcast %21 : vector<1x8xf32> to vector<2x8xf32>
    %506 = arith.addf %505, %504 : vector<2x8xf32>
    %507 = vector.extract_strided_slice %486 {offsets = [0, 1], sizes = [2, 1], strides = [1, 1]} : vector<2x8xf32> to vector<2x1xf32>
    %508 = vector.extract_strided_slice %16 {offsets = [1, 0], sizes = [1, 8], strides = [1, 1]} : vector<8x8xf32> to vector<1x8xf32>
    %509 = vector.broadcast %507 : vector<2x1xf32> to vector<2x8xf32>
    %510 = vector.broadcast %508 : vector<1x8xf32> to vector<2x8xf32>
    %511 = arith.mulf %509, %510 : vector<2x8xf32>
    %512 = arith.addf %494, %511 : vector<2x8xf32>
    %513 = vector.extract_strided_slice %17 {offsets = [1, 0], sizes = [1, 8], strides = [1, 1]} : vector<8x8xf32> to vector<1x8xf32>
    %514 = vector.broadcast %507 : vector<2x1xf32> to vector<2x8xf32>
    %515 = vector.broadcast %513 : vector<1x8xf32> to vector<2x8xf32>
    %516 = arith.mulf %514, %515 : vector<2x8xf32>
    %517 = arith.addf %500, %516 : vector<2x8xf32>
    %518 = vector.extract_strided_slice %18 {offsets = [1, 0], sizes = [1, 8], strides = [1, 1]} : vector<8x8xf32> to vector<1x8xf32>
    %519 = vector.broadcast %507 : vector<2x1xf32> to vector<2x8xf32>
    %520 = vector.broadcast %518 : vector<1x8xf32> to vector<2x8xf32>
    %521 = arith.mulf %519, %520 : vector<2x8xf32>
    %522 = arith.addf %506, %521 : vector<2x8xf32>
    %523 = vector.extract_strided_slice %486 {offsets = [0, 2], sizes = [2, 1], strides = [1, 1]} : vector<2x8xf32> to vector<2x1xf32>
    %524 = vector.extract_strided_slice %16 {offsets = [2, 0], sizes = [1, 8], strides = [1, 1]} : vector<8x8xf32> to vector<1x8xf32>
    %525 = vector.broadcast %523 : vector<2x1xf32> to vector<2x8xf32>
    %526 = vector.broadcast %524 : vector<1x8xf32> to vector<2x8xf32>
    %527 = arith.mulf %525, %526 : vector<2x8xf32>
    %528 = arith.addf %512, %527 : vector<2x8xf32>
    %529 = vector.extract_strided_slice %17 {offsets = [2, 0], sizes = [1, 8], strides = [1, 1]} : vector<8x8xf32> to vector<1x8xf32>
    %530 = vector.broadcast %523 : vector<2x1xf32> to vector<2x8xf32>
    %531 = vector.broadcast %529 : vector<1x8xf32> to vector<2x8xf32>
    %532 = arith.mulf %530, %531 : vector<2x8xf32>
    %533 = arith.addf %517, %532 : vector<2x8xf32>
    %534 = vector.extract_strided_slice %18 {offsets = [2, 0], sizes = [1, 8], strides = [1, 1]} : vector<8x8xf32> to vector<1x8xf32>
    %535 = vector.broadcast %523 : vector<2x1xf32> to vector<2x8xf32>
    %536 = vector.broadcast %534 : vector<1x8xf32> to vector<2x8xf32>
    %537 = arith.mulf %535, %536 : vector<2x8xf32>
    %538 = arith.addf %522, %537 : vector<2x8xf32>
    %539 = vector.extract_strided_slice %486 {offsets = [0, 3], sizes = [2, 1], strides = [1, 1]} : vector<2x8xf32> to vector<2x1xf32>
    %540 = vector.extract_strided_slice %16 {offsets = [3, 0], sizes = [1, 8], strides = [1, 1]} : vector<8x8xf32> to vector<1x8xf32>
    %541 = vector.broadcast %539 : vector<2x1xf32> to vector<2x8xf32>
    %542 = vector.broadcast %540 : vector<1x8xf32> to vector<2x8xf32>
    %543 = arith.mulf %541, %542 : vector<2x8xf32>
    %544 = arith.addf %528, %543 : vector<2x8xf32>
    %545 = vector.extract_strided_slice %17 {offsets = [3, 0], sizes = [1, 8], strides = [1, 1]} : vector<8x8xf32> to vector<1x8xf32>
    %546 = vector.broadcast %539 : vector<2x1xf32> to vector<2x8xf32>
    %547 = vector.broadcast %545 : vector<1x8xf32> to vector<2x8xf32>
    %548 = arith.mulf %546, %547 : vector<2x8xf32>
    %549 = arith.addf %533, %548 : vector<2x8xf32>
    %550 = vector.extract_strided_slice %18 {offsets = [3, 0], sizes = [1, 8], strides = [1, 1]} : vector<8x8xf32> to vector<1x8xf32>
    %551 = vector.broadcast %539 : vector<2x1xf32> to vector<2x8xf32>
    %552 = vector.broadcast %550 : vector<1x8xf32> to vector<2x8xf32>
    %553 = arith.mulf %551, %552 : vector<2x8xf32>
    %554 = arith.addf %538, %553 : vector<2x8xf32>
    %555 = vector.extract_strided_slice %486 {offsets = [0, 4], sizes = [2, 1], strides = [1, 1]} : vector<2x8xf32> to vector<2x1xf32>
    %556 = vector.extract_strided_slice %16 {offsets = [4, 0], sizes = [1, 8], strides = [1, 1]} : vector<8x8xf32> to vector<1x8xf32>
    %557 = vector.broadcast %555 : vector<2x1xf32> to vector<2x8xf32>
    %558 = vector.broadcast %556 : vector<1x8xf32> to vector<2x8xf32>
    %559 = arith.mulf %557, %558 : vector<2x8xf32>
    %560 = arith.addf %544, %559 : vector<2x8xf32>
    %561 = vector.extract_strided_slice %17 {offsets = [4, 0], sizes = [1, 8], strides = [1, 1]} : vector<8x8xf32> to vector<1x8xf32>
    %562 = vector.broadcast %555 : vector<2x1xf32> to vector<2x8xf32>
    %563 = vector.broadcast %561 : vector<1x8xf32> to vector<2x8xf32>
    %564 = arith.mulf %562, %563 : vector<2x8xf32>
    %565 = arith.addf %549, %564 : vector<2x8xf32>
    %566 = vector.extract_strided_slice %18 {offsets = [4, 0], sizes = [1, 8], strides = [1, 1]} : vector<8x8xf32> to vector<1x8xf32>
    %567 = vector.broadcast %555 : vector<2x1xf32> to vector<2x8xf32>
    %568 = vector.broadcast %566 : vector<1x8xf32> to vector<2x8xf32>
    %569 = arith.mulf %567, %568 : vector<2x8xf32>
    %570 = arith.addf %554, %569 : vector<2x8xf32>
    %571 = vector.extract_strided_slice %486 {offsets = [0, 5], sizes = [2, 1], strides = [1, 1]} : vector<2x8xf32> to vector<2x1xf32>
    %572 = vector.extract_strided_slice %16 {offsets = [5, 0], sizes = [1, 8], strides = [1, 1]} : vector<8x8xf32> to vector<1x8xf32>
    %573 = vector.broadcast %571 : vector<2x1xf32> to vector<2x8xf32>
    %574 = vector.broadcast %572 : vector<1x8xf32> to vector<2x8xf32>
    %575 = arith.mulf %573, %574 : vector<2x8xf32>
    %576 = arith.addf %560, %575 : vector<2x8xf32>
    %577 = vector.extract_strided_slice %17 {offsets = [5, 0], sizes = [1, 8], strides = [1, 1]} : vector<8x8xf32> to vector<1x8xf32>
    %578 = vector.broadcast %571 : vector<2x1xf32> to vector<2x8xf32>
    %579 = vector.broadcast %577 : vector<1x8xf32> to vector<2x8xf32>
    %580 = arith.mulf %578, %579 : vector<2x8xf32>
    %581 = arith.addf %565, %580 : vector<2x8xf32>
    %582 = vector.extract_strided_slice %18 {offsets = [5, 0], sizes = [1, 8], strides = [1, 1]} : vector<8x8xf32> to vector<1x8xf32>
    %583 = vector.broadcast %571 : vector<2x1xf32> to vector<2x8xf32>
    %584 = vector.broadcast %582 : vector<1x8xf32> to vector<2x8xf32>
    %585 = arith.mulf %583, %584 : vector<2x8xf32>
    %586 = arith.addf %570, %585 : vector<2x8xf32>
    %587 = vector.extract_strided_slice %486 {offsets = [0, 6], sizes = [2, 1], strides = [1, 1]} : vector<2x8xf32> to vector<2x1xf32>
    %588 = vector.extract_strided_slice %16 {offsets = [6, 0], sizes = [1, 8], strides = [1, 1]} : vector<8x8xf32> to vector<1x8xf32>
    %589 = vector.broadcast %587 : vector<2x1xf32> to vector<2x8xf32>
    %590 = vector.broadcast %588 : vector<1x8xf32> to vector<2x8xf32>
    %591 = arith.mulf %589, %590 : vector<2x8xf32>
    %592 = arith.addf %576, %591 : vector<2x8xf32>
    %593 = vector.extract_strided_slice %17 {offsets = [6, 0], sizes = [1, 8], strides = [1, 1]} : vector<8x8xf32> to vector<1x8xf32>
    %594 = vector.broadcast %587 : vector<2x1xf32> to vector<2x8xf32>
    %595 = vector.broadcast %593 : vector<1x8xf32> to vector<2x8xf32>
    %596 = arith.mulf %594, %595 : vector<2x8xf32>
    %597 = arith.addf %581, %596 : vector<2x8xf32>
    %598 = vector.extract_strided_slice %18 {offsets = [6, 0], sizes = [1, 8], strides = [1, 1]} : vector<8x8xf32> to vector<1x8xf32>
    %599 = vector.broadcast %587 : vector<2x1xf32> to vector<2x8xf32>
    %600 = vector.broadcast %598 : vector<1x8xf32> to vector<2x8xf32>
    %601 = arith.mulf %599, %600 : vector<2x8xf32>
    %602 = arith.addf %586, %601 : vector<2x8xf32>
    %603 = vector.extract_strided_slice %486 {offsets = [0, 7], sizes = [2, 1], strides = [1, 1]} : vector<2x8xf32> to vector<2x1xf32>
    %604 = vector.extract_strided_slice %16 {offsets = [7, 0], sizes = [1, 8], strides = [1, 1]} : vector<8x8xf32> to vector<1x8xf32>
    %605 = vector.broadcast %603 : vector<2x1xf32> to vector<2x8xf32>
    %606 = vector.broadcast %604 : vector<1x8xf32> to vector<2x8xf32>
    %607 = arith.mulf %605, %606 : vector<2x8xf32>
    %608 = arith.addf %592, %607 : vector<2x8xf32>
    %609 = vector.extract_strided_slice %17 {offsets = [7, 0], sizes = [1, 8], strides = [1, 1]} : vector<8x8xf32> to vector<1x8xf32>
    %610 = vector.broadcast %603 : vector<2x1xf32> to vector<2x8xf32>
    %611 = vector.broadcast %609 : vector<1x8xf32> to vector<2x8xf32>
    %612 = arith.mulf %610, %611 : vector<2x8xf32>
    %613 = arith.addf %597, %612 : vector<2x8xf32>
    %614 = vector.extract_strided_slice %18 {offsets = [7, 0], sizes = [1, 8], strides = [1, 1]} : vector<8x8xf32> to vector<1x8xf32>
    %615 = vector.broadcast %603 : vector<2x1xf32> to vector<2x8xf32>
    %616 = vector.broadcast %614 : vector<1x8xf32> to vector<2x8xf32>
    %617 = arith.mulf %615, %616 : vector<2x8xf32>
    %618 = arith.addf %602, %617 : vector<2x8xf32>
    %619 = vector.extract_strided_slice %5 {offsets = [6, 0], sizes = [2, 8], strides = [1, 1]} : vector<16x8xf32> to vector<2x8xf32>
    %620 = arith.addf %619, %608 : vector<2x8xf32>
    %621 = arith.negf %620 : vector<2x8xf32>
    %622 = math.exp %621 : vector<2x8xf32>
    %cst_42 = arith.constant 1.000000e+00 : f32
    %623 = vector.broadcast %cst_42 : f32 to vector<2x8xf32>
    %624 = arith.addf %623, %622 : vector<2x8xf32>
    %625 = arith.divf %623, %624 : vector<2x8xf32>
    %626 = vector.extract_strided_slice %10 {offsets = [6, 0], sizes = [2, 8], strides = [1, 1]} : vector<16x8xf32> to vector<2x8xf32>
    %627 = arith.addf %626, %613 : vector<2x8xf32>
    %628 = arith.negf %627 : vector<2x8xf32>
    %629 = math.exp %628 : vector<2x8xf32>
    %cst_43 = arith.constant 1.000000e+00 : f32
    %630 = vector.broadcast %cst_43 : f32 to vector<2x8xf32>
    %631 = arith.addf %630, %629 : vector<2x8xf32>
    %632 = arith.divf %630, %631 : vector<2x8xf32>
    %633 = vector.extract_strided_slice %15 {offsets = [6, 0], sizes = [2, 8], strides = [1, 1]} : vector<16x8xf32> to vector<2x8xf32>
    %634 = arith.mulf %625, %618 : vector<2x8xf32>
    %635 = arith.addf %633, %634 : vector<2x8xf32>
    %636 = math.tanh %635 : vector<2x8xf32>
    %cst_44 = arith.constant 1.000000e+00 : f32
    %637 = vector.broadcast %cst_44 : f32 to vector<2x8xf32>
    %638 = arith.subf %637, %632 : vector<2x8xf32>
    %639 = arith.mulf %638, %636 : vector<2x8xf32>
    %640 = arith.mulf %632, %486 : vector<2x8xf32>
    %641 = arith.addf %639, %640 : vector<2x8xf32>
    %c6 = arith.constant 6 : index
    %c0_45 = arith.constant 0 : index
    %642 = vector.load %arg21[%c6, %c0_45] : memref<16x8xf32, #tpu.memory_space<vmem>>, vector<2x8xf32>
    tpu.vector_store %arg21[%c6, %c0_45], %641 {strides = array<i32>} : memref<16x8xf32, #tpu.memory_space<vmem>>, vector<2x8xf32>,
    %643 = vector.extract_strided_slice %641 {offsets = [0, 0], sizes = [2, 1], strides = [1, 1]} : vector<2x8xf32> to vector<2x1xf32>
    %644 = vector.extract_strided_slice %16 {offsets = [0, 0], sizes = [1, 8], strides = [1, 1]} : vector<8x8xf32> to vector<1x8xf32>
    %645 = vector.broadcast %643 : vector<2x1xf32> to vector<2x8xf32>
    %646 = vector.broadcast %644 : vector<1x8xf32> to vector<2x8xf32>
    %647 = arith.mulf %645, %646 : vector<2x8xf32>
    %648 = vector.broadcast %19 : vector<1x8xf32> to vector<2x8xf32>
    %649 = arith.addf %648, %647 : vector<2x8xf32>
    %650 = vector.extract_strided_slice %17 {offsets = [0, 0], sizes = [1, 8], strides = [1, 1]} : vector<8x8xf32> to vector<1x8xf32>
    %651 = vector.broadcast %643 : vector<2x1xf32> to vector<2x8xf32>
    %652 = vector.broadcast %650 : vector<1x8xf32> to vector<2x8xf32>
    %653 = arith.mulf %651, %652 : vector<2x8xf32>
    %654 = vector.broadcast %20 : vector<1x8xf32> to vector<2x8xf32>
    %655 = arith.addf %654, %653 : vector<2x8xf32>
    %656 = vector.extract_strided_slice %18 {offsets = [0, 0], sizes = [1, 8], strides = [1, 1]} : vector<8x8xf32> to vector<1x8xf32>
    %657 = vector.broadcast %643 : vector<2x1xf32> to vector<2x8xf32>
    %658 = vector.broadcast %656 : vector<1x8xf32> to vector<2x8xf32>
    %659 = arith.mulf %657, %658 : vector<2x8xf32>
    %660 = vector.broadcast %21 : vector<1x8xf32> to vector<2x8xf32>
    %661 = arith.addf %660, %659 : vector<2x8xf32>
    %662 = vector.extract_strided_slice %641 {offsets = [0, 1], sizes = [2, 1], strides = [1, 1]} : vector<2x8xf32> to vector<2x1xf32>
    %663 = vector.extract_strided_slice %16 {offsets = [1, 0], sizes = [1, 8], strides = [1, 1]} : vector<8x8xf32> to vector<1x8xf32>
    %664 = vector.broadcast %662 : vector<2x1xf32> to vector<2x8xf32>
    %665 = vector.broadcast %663 : vector<1x8xf32> to vector<2x8xf32>
    %666 = arith.mulf %664, %665 : vector<2x8xf32>
    %667 = arith.addf %649, %666 : vector<2x8xf32>
    %668 = vector.extract_strided_slice %17 {offsets = [1, 0], sizes = [1, 8], strides = [1, 1]} : vector<8x8xf32> to vector<1x8xf32>
    %669 = vector.broadcast %662 : vector<2x1xf32> to vector<2x8xf32>
    %670 = vector.broadcast %668 : vector<1x8xf32> to vector<2x8xf32>
    %671 = arith.mulf %669, %670 : vector<2x8xf32>
    %672 = arith.addf %655, %671 : vector<2x8xf32>
    %673 = vector.extract_strided_slice %18 {offsets = [1, 0], sizes = [1, 8], strides = [1, 1]} : vector<8x8xf32> to vector<1x8xf32>
    %674 = vector.broadcast %662 : vector<2x1xf32> to vector<2x8xf32>
    %675 = vector.broadcast %673 : vector<1x8xf32> to vector<2x8xf32>
    %676 = arith.mulf %674, %675 : vector<2x8xf32>
    %677 = arith.addf %661, %676 : vector<2x8xf32>
    %678 = vector.extract_strided_slice %641 {offsets = [0, 2], sizes = [2, 1], strides = [1, 1]} : vector<2x8xf32> to vector<2x1xf32>
    %679 = vector.extract_strided_slice %16 {offsets = [2, 0], sizes = [1, 8], strides = [1, 1]} : vector<8x8xf32> to vector<1x8xf32>
    %680 = vector.broadcast %678 : vector<2x1xf32> to vector<2x8xf32>
    %681 = vector.broadcast %679 : vector<1x8xf32> to vector<2x8xf32>
    %682 = arith.mulf %680, %681 : vector<2x8xf32>
    %683 = arith.addf %667, %682 : vector<2x8xf32>
    %684 = vector.extract_strided_slice %17 {offsets = [2, 0], sizes = [1, 8], strides = [1, 1]} : vector<8x8xf32> to vector<1x8xf32>
    %685 = vector.broadcast %678 : vector<2x1xf32> to vector<2x8xf32>
    %686 = vector.broadcast %684 : vector<1x8xf32> to vector<2x8xf32>
    %687 = arith.mulf %685, %686 : vector<2x8xf32>
    %688 = arith.addf %672, %687 : vector<2x8xf32>
    %689 = vector.extract_strided_slice %18 {offsets = [2, 0], sizes = [1, 8], strides = [1, 1]} : vector<8x8xf32> to vector<1x8xf32>
    %690 = vector.broadcast %678 : vector<2x1xf32> to vector<2x8xf32>
    %691 = vector.broadcast %689 : vector<1x8xf32> to vector<2x8xf32>
    %692 = arith.mulf %690, %691 : vector<2x8xf32>
    %693 = arith.addf %677, %692 : vector<2x8xf32>
    %694 = vector.extract_strided_slice %641 {offsets = [0, 3], sizes = [2, 1], strides = [1, 1]} : vector<2x8xf32> to vector<2x1xf32>
    %695 = vector.extract_strided_slice %16 {offsets = [3, 0], sizes = [1, 8], strides = [1, 1]} : vector<8x8xf32> to vector<1x8xf32>
    %696 = vector.broadcast %694 : vector<2x1xf32> to vector<2x8xf32>
    %697 = vector.broadcast %695 : vector<1x8xf32> to vector<2x8xf32>
    %698 = arith.mulf %696, %697 : vector<2x8xf32>
    %699 = arith.addf %683, %698 : vector<2x8xf32>
    %700 = vector.extract_strided_slice %17 {offsets = [3, 0], sizes = [1, 8], strides = [1, 1]} : vector<8x8xf32> to vector<1x8xf32>
    %701 = vector.broadcast %694 : vector<2x1xf32> to vector<2x8xf32>
    %702 = vector.broadcast %700 : vector<1x8xf32> to vector<2x8xf32>
    %703 = arith.mulf %701, %702 : vector<2x8xf32>
    %704 = arith.addf %688, %703 : vector<2x8xf32>
    %705 = vector.extract_strided_slice %18 {offsets = [3, 0], sizes = [1, 8], strides = [1, 1]} : vector<8x8xf32> to vector<1x8xf32>
    %706 = vector.broadcast %694 : vector<2x1xf32> to vector<2x8xf32>
    %707 = vector.broadcast %705 : vector<1x8xf32> to vector<2x8xf32>
    %708 = arith.mulf %706, %707 : vector<2x8xf32>
    %709 = arith.addf %693, %708 : vector<2x8xf32>
    %710 = vector.extract_strided_slice %641 {offsets = [0, 4], sizes = [2, 1], strides = [1, 1]} : vector<2x8xf32> to vector<2x1xf32>
    %711 = vector.extract_strided_slice %16 {offsets = [4, 0], sizes = [1, 8], strides = [1, 1]} : vector<8x8xf32> to vector<1x8xf32>
    %712 = vector.broadcast %710 : vector<2x1xf32> to vector<2x8xf32>
    %713 = vector.broadcast %711 : vector<1x8xf32> to vector<2x8xf32>
    %714 = arith.mulf %712, %713 : vector<2x8xf32>
    %715 = arith.addf %699, %714 : vector<2x8xf32>
    %716 = vector.extract_strided_slice %17 {offsets = [4, 0], sizes = [1, 8], strides = [1, 1]} : vector<8x8xf32> to vector<1x8xf32>
    %717 = vector.broadcast %710 : vector<2x1xf32> to vector<2x8xf32>
    %718 = vector.broadcast %716 : vector<1x8xf32> to vector<2x8xf32>
    %719 = arith.mulf %717, %718 : vector<2x8xf32>
    %720 = arith.addf %704, %719 : vector<2x8xf32>
    %721 = vector.extract_strided_slice %18 {offsets = [4, 0], sizes = [1, 8], strides = [1, 1]} : vector<8x8xf32> to vector<1x8xf32>
    %722 = vector.broadcast %710 : vector<2x1xf32> to vector<2x8xf32>
    %723 = vector.broadcast %721 : vector<1x8xf32> to vector<2x8xf32>
    %724 = arith.mulf %722, %723 : vector<2x8xf32>
    %725 = arith.addf %709, %724 : vector<2x8xf32>
    %726 = vector.extract_strided_slice %641 {offsets = [0, 5], sizes = [2, 1], strides = [1, 1]} : vector<2x8xf32> to vector<2x1xf32>
    %727 = vector.extract_strided_slice %16 {offsets = [5, 0], sizes = [1, 8], strides = [1, 1]} : vector<8x8xf32> to vector<1x8xf32>
    %728 = vector.broadcast %726 : vector<2x1xf32> to vector<2x8xf32>
    %729 = vector.broadcast %727 : vector<1x8xf32> to vector<2x8xf32>
    %730 = arith.mulf %728, %729 : vector<2x8xf32>
    %731 = arith.addf %715, %730 : vector<2x8xf32>
    %732 = vector.extract_strided_slice %17 {offsets = [5, 0], sizes = [1, 8], strides = [1, 1]} : vector<8x8xf32> to vector<1x8xf32>
    %733 = vector.broadcast %726 : vector<2x1xf32> to vector<2x8xf32>
    %734 = vector.broadcast %732 : vector<1x8xf32> to vector<2x8xf32>
    %735 = arith.mulf %733, %734 : vector<2x8xf32>
    %736 = arith.addf %720, %735 : vector<2x8xf32>
    %737 = vector.extract_strided_slice %18 {offsets = [5, 0], sizes = [1, 8], strides = [1, 1]} : vector<8x8xf32> to vector<1x8xf32>
    %738 = vector.broadcast %726 : vector<2x1xf32> to vector<2x8xf32>
    %739 = vector.broadcast %737 : vector<1x8xf32> to vector<2x8xf32>
    %740 = arith.mulf %738, %739 : vector<2x8xf32>
    %741 = arith.addf %725, %740 : vector<2x8xf32>
    %742 = vector.extract_strided_slice %641 {offsets = [0, 6], sizes = [2, 1], strides = [1, 1]} : vector<2x8xf32> to vector<2x1xf32>
    %743 = vector.extract_strided_slice %16 {offsets = [6, 0], sizes = [1, 8], strides = [1, 1]} : vector<8x8xf32> to vector<1x8xf32>
    %744 = vector.broadcast %742 : vector<2x1xf32> to vector<2x8xf32>
    %745 = vector.broadcast %743 : vector<1x8xf32> to vector<2x8xf32>
    %746 = arith.mulf %744, %745 : vector<2x8xf32>
    %747 = arith.addf %731, %746 : vector<2x8xf32>
    %748 = vector.extract_strided_slice %17 {offsets = [6, 0], sizes = [1, 8], strides = [1, 1]} : vector<8x8xf32> to vector<1x8xf32>
    %749 = vector.broadcast %742 : vector<2x1xf32> to vector<2x8xf32>
    %750 = vector.broadcast %748 : vector<1x8xf32> to vector<2x8xf32>
    %751 = arith.mulf %749, %750 : vector<2x8xf32>
    %752 = arith.addf %736, %751 : vector<2x8xf32>
    %753 = vector.extract_strided_slice %18 {offsets = [6, 0], sizes = [1, 8], strides = [1, 1]} : vector<8x8xf32> to vector<1x8xf32>
    %754 = vector.broadcast %742 : vector<2x1xf32> to vector<2x8xf32>
    %755 = vector.broadcast %753 : vector<1x8xf32> to vector<2x8xf32>
    %756 = arith.mulf %754, %755 : vector<2x8xf32>
    %757 = arith.addf %741, %756 : vector<2x8xf32>
    %758 = vector.extract_strided_slice %641 {offsets = [0, 7], sizes = [2, 1], strides = [1, 1]} : vector<2x8xf32> to vector<2x1xf32>
    %759 = vector.extract_strided_slice %16 {offsets = [7, 0], sizes = [1, 8], strides = [1, 1]} : vector<8x8xf32> to vector<1x8xf32>
    %760 = vector.broadcast %758 : vector<2x1xf32> to vector<2x8xf32>
    %761 = vector.broadcast %759 : vector<1x8xf32> to vector<2x8xf32>
    %762 = arith.mulf %760, %761 : vector<2x8xf32>
    %763 = arith.addf %747, %762 : vector<2x8xf32>
    %764 = vector.extract_strided_slice %17 {offsets = [7, 0], sizes = [1, 8], strides = [1, 1]} : vector<8x8xf32> to vector<1x8xf32>
    %765 = vector.broadcast %758 : vector<2x1xf32> to vector<2x8xf32>
    %766 = vector.broadcast %764 : vector<1x8xf32> to vector<2x8xf32>
    %767 = arith.mulf %765, %766 : vector<2x8xf32>
    %768 = arith.addf %752, %767 : vector<2x8xf32>
    %769 = vector.extract_strided_slice %18 {offsets = [7, 0], sizes = [1, 8], strides = [1, 1]} : vector<8x8xf32> to vector<1x8xf32>
    %770 = vector.broadcast %758 : vector<2x1xf32> to vector<2x8xf32>
    %771 = vector.broadcast %769 : vector<1x8xf32> to vector<2x8xf32>
    %772 = arith.mulf %770, %771 : vector<2x8xf32>
    %773 = arith.addf %757, %772 : vector<2x8xf32>
    %774 = vector.extract_strided_slice %5 {offsets = [8, 0], sizes = [2, 8], strides = [1, 1]} : vector<16x8xf32> to vector<2x8xf32>
    %775 = arith.addf %774, %763 : vector<2x8xf32>
    %776 = arith.negf %775 : vector<2x8xf32>
    %777 = math.exp %776 : vector<2x8xf32>
    %cst_46 = arith.constant 1.000000e+00 : f32
    %778 = vector.broadcast %cst_46 : f32 to vector<2x8xf32>
    %779 = arith.addf %778, %777 : vector<2x8xf32>
    %780 = arith.divf %778, %779 : vector<2x8xf32>
    %781 = vector.extract_strided_slice %10 {offsets = [8, 0], sizes = [2, 8], strides = [1, 1]} : vector<16x8xf32> to vector<2x8xf32>
    %782 = arith.addf %781, %768 : vector<2x8xf32>
    %783 = arith.negf %782 : vector<2x8xf32>
    %784 = math.exp %783 : vector<2x8xf32>
    %cst_47 = arith.constant 1.000000e+00 : f32
    %785 = vector.broadcast %cst_47 : f32 to vector<2x8xf32>
    %786 = arith.addf %785, %784 : vector<2x8xf32>
    %787 = arith.divf %785, %786 : vector<2x8xf32>
    %788 = vector.extract_strided_slice %15 {offsets = [8, 0], sizes = [2, 8], strides = [1, 1]} : vector<16x8xf32> to vector<2x8xf32>
    %789 = arith.mulf %780, %773 : vector<2x8xf32>
    %790 = arith.addf %788, %789 : vector<2x8xf32>
    %791 = math.tanh %790 : vector<2x8xf32>
    %cst_48 = arith.constant 1.000000e+00 : f32
    %792 = vector.broadcast %cst_48 : f32 to vector<2x8xf32>
    %793 = arith.subf %792, %787 : vector<2x8xf32>
    %794 = arith.mulf %793, %791 : vector<2x8xf32>
    %795 = arith.mulf %787, %641 : vector<2x8xf32>
    %796 = arith.addf %794, %795 : vector<2x8xf32>
    %c8 = arith.constant 8 : index
    %c0_49 = arith.constant 0 : index
    %797 = vector.load %arg21[%c8, %c0_49] : memref<16x8xf32, #tpu.memory_space<vmem>>, vector<2x8xf32>
    tpu.vector_store %arg21[%c8, %c0_49], %796 {strides = array<i32>} : memref<16x8xf32, #tpu.memory_space<vmem>>, vector<2x8xf32>,
    %798 = vector.extract_strided_slice %796 {offsets = [0, 0], sizes = [2, 1], strides = [1, 1]} : vector<2x8xf32> to vector<2x1xf32>
    %799 = vector.extract_strided_slice %16 {offsets = [0, 0], sizes = [1, 8], strides = [1, 1]} : vector<8x8xf32> to vector<1x8xf32>
    %800 = vector.broadcast %798 : vector<2x1xf32> to vector<2x8xf32>
    %801 = vector.broadcast %799 : vector<1x8xf32> to vector<2x8xf32>
    %802 = arith.mulf %800, %801 : vector<2x8xf32>
    %803 = vector.broadcast %19 : vector<1x8xf32> to vector<2x8xf32>
    %804 = arith.addf %803, %802 : vector<2x8xf32>
    %805 = vector.extract_strided_slice %17 {offsets = [0, 0], sizes = [1, 8], strides = [1, 1]} : vector<8x8xf32> to vector<1x8xf32>
    %806 = vector.broadcast %798 : vector<2x1xf32> to vector<2x8xf32>
    %807 = vector.broadcast %805 : vector<1x8xf32> to vector<2x8xf32>
    %808 = arith.mulf %806, %807 : vector<2x8xf32>
    %809 = vector.broadcast %20 : vector<1x8xf32> to vector<2x8xf32>
    %810 = arith.addf %809, %808 : vector<2x8xf32>
    %811 = vector.extract_strided_slice %18 {offsets = [0, 0], sizes = [1, 8], strides = [1, 1]} : vector<8x8xf32> to vector<1x8xf32>
    %812 = vector.broadcast %798 : vector<2x1xf32> to vector<2x8xf32>
    %813 = vector.broadcast %811 : vector<1x8xf32> to vector<2x8xf32>
    %814 = arith.mulf %812, %813 : vector<2x8xf32>
    %815 = vector.broadcast %21 : vector<1x8xf32> to vector<2x8xf32>
    %816 = arith.addf %815, %814 : vector<2x8xf32>
    %817 = vector.extract_strided_slice %796 {offsets = [0, 1], sizes = [2, 1], strides = [1, 1]} : vector<2x8xf32> to vector<2x1xf32>
    %818 = vector.extract_strided_slice %16 {offsets = [1, 0], sizes = [1, 8], strides = [1, 1]} : vector<8x8xf32> to vector<1x8xf32>
    %819 = vector.broadcast %817 : vector<2x1xf32> to vector<2x8xf32>
    %820 = vector.broadcast %818 : vector<1x8xf32> to vector<2x8xf32>
    %821 = arith.mulf %819, %820 : vector<2x8xf32>
    %822 = arith.addf %804, %821 : vector<2x8xf32>
    %823 = vector.extract_strided_slice %17 {offsets = [1, 0], sizes = [1, 8], strides = [1, 1]} : vector<8x8xf32> to vector<1x8xf32>
    %824 = vector.broadcast %817 : vector<2x1xf32> to vector<2x8xf32>
    %825 = vector.broadcast %823 : vector<1x8xf32> to vector<2x8xf32>
    %826 = arith.mulf %824, %825 : vector<2x8xf32>
    %827 = arith.addf %810, %826 : vector<2x8xf32>
    %828 = vector.extract_strided_slice %18 {offsets = [1, 0], sizes = [1, 8], strides = [1, 1]} : vector<8x8xf32> to vector<1x8xf32>
    %829 = vector.broadcast %817 : vector<2x1xf32> to vector<2x8xf32>
    %830 = vector.broadcast %828 : vector<1x8xf32> to vector<2x8xf32>
    %831 = arith.mulf %829, %830 : vector<2x8xf32>
    %832 = arith.addf %816, %831 : vector<2x8xf32>
    %833 = vector.extract_strided_slice %796 {offsets = [0, 2], sizes = [2, 1], strides = [1, 1]} : vector<2x8xf32> to vector<2x1xf32>
    %834 = vector.extract_strided_slice %16 {offsets = [2, 0], sizes = [1, 8], strides = [1, 1]} : vector<8x8xf32> to vector<1x8xf32>
    %835 = vector.broadcast %833 : vector<2x1xf32> to vector<2x8xf32>
    %836 = vector.broadcast %834 : vector<1x8xf32> to vector<2x8xf32>
    %837 = arith.mulf %835, %836 : vector<2x8xf32>
    %838 = arith.addf %822, %837 : vector<2x8xf32>
    %839 = vector.extract_strided_slice %17 {offsets = [2, 0], sizes = [1, 8], strides = [1, 1]} : vector<8x8xf32> to vector<1x8xf32>
    %840 = vector.broadcast %833 : vector<2x1xf32> to vector<2x8xf32>
    %841 = vector.broadcast %839 : vector<1x8xf32> to vector<2x8xf32>
    %842 = arith.mulf %840, %841 : vector<2x8xf32>
    %843 = arith.addf %827, %842 : vector<2x8xf32>
    %844 = vector.extract_strided_slice %18 {offsets = [2, 0], sizes = [1, 8], strides = [1, 1]} : vector<8x8xf32> to vector<1x8xf32>
    %845 = vector.broadcast %833 : vector<2x1xf32> to vector<2x8xf32>
    %846 = vector.broadcast %844 : vector<1x8xf32> to vector<2x8xf32>
    %847 = arith.mulf %845, %846 : vector<2x8xf32>
    %848 = arith.addf %832, %847 : vector<2x8xf32>
    %849 = vector.extract_strided_slice %796 {offsets = [0, 3], sizes = [2, 1], strides = [1, 1]} : vector<2x8xf32> to vector<2x1xf32>
    %850 = vector.extract_strided_slice %16 {offsets = [3, 0], sizes = [1, 8], strides = [1, 1]} : vector<8x8xf32> to vector<1x8xf32>
    %851 = vector.broadcast %849 : vector<2x1xf32> to vector<2x8xf32>
    %852 = vector.broadcast %850 : vector<1x8xf32> to vector<2x8xf32>
    %853 = arith.mulf %851, %852 : vector<2x8xf32>
    %854 = arith.addf %838, %853 : vector<2x8xf32>
    %855 = vector.extract_strided_slice %17 {offsets = [3, 0], sizes = [1, 8], strides = [1, 1]} : vector<8x8xf32> to vector<1x8xf32>
    %856 = vector.broadcast %849 : vector<2x1xf32> to vector<2x8xf32>
    %857 = vector.broadcast %855 : vector<1x8xf32> to vector<2x8xf32>
    %858 = arith.mulf %856, %857 : vector<2x8xf32>
    %859 = arith.addf %843, %858 : vector<2x8xf32>
    %860 = vector.extract_strided_slice %18 {offsets = [3, 0], sizes = [1, 8], strides = [1, 1]} : vector<8x8xf32> to vector<1x8xf32>
    %861 = vector.broadcast %849 : vector<2x1xf32> to vector<2x8xf32>
    %862 = vector.broadcast %860 : vector<1x8xf32> to vector<2x8xf32>
    %863 = arith.mulf %861, %862 : vector<2x8xf32>
    %864 = arith.addf %848, %863 : vector<2x8xf32>
    %865 = vector.extract_strided_slice %796 {offsets = [0, 4], sizes = [2, 1], strides = [1, 1]} : vector<2x8xf32> to vector<2x1xf32>
    %866 = vector.extract_strided_slice %16 {offsets = [4, 0], sizes = [1, 8], strides = [1, 1]} : vector<8x8xf32> to vector<1x8xf32>
    %867 = vector.broadcast %865 : vector<2x1xf32> to vector<2x8xf32>
    %868 = vector.broadcast %866 : vector<1x8xf32> to vector<2x8xf32>
    %869 = arith.mulf %867, %868 : vector<2x8xf32>
    %870 = arith.addf %854, %869 : vector<2x8xf32>
    %871 = vector.extract_strided_slice %17 {offsets = [4, 0], sizes = [1, 8], strides = [1, 1]} : vector<8x8xf32> to vector<1x8xf32>
    %872 = vector.broadcast %865 : vector<2x1xf32> to vector<2x8xf32>
    %873 = vector.broadcast %871 : vector<1x8xf32> to vector<2x8xf32>
    %874 = arith.mulf %872, %873 : vector<2x8xf32>
    %875 = arith.addf %859, %874 : vector<2x8xf32>
    %876 = vector.extract_strided_slice %18 {offsets = [4, 0], sizes = [1, 8], strides = [1, 1]} : vector<8x8xf32> to vector<1x8xf32>
    %877 = vector.broadcast %865 : vector<2x1xf32> to vector<2x8xf32>
    %878 = vector.broadcast %876 : vector<1x8xf32> to vector<2x8xf32>
    %879 = arith.mulf %877, %878 : vector<2x8xf32>
    %880 = arith.addf %864, %879 : vector<2x8xf32>
    %881 = vector.extract_strided_slice %796 {offsets = [0, 5], sizes = [2, 1], strides = [1, 1]} : vector<2x8xf32> to vector<2x1xf32>
    %882 = vector.extract_strided_slice %16 {offsets = [5, 0], sizes = [1, 8], strides = [1, 1]} : vector<8x8xf32> to vector<1x8xf32>
    %883 = vector.broadcast %881 : vector<2x1xf32> to vector<2x8xf32>
    %884 = vector.broadcast %882 : vector<1x8xf32> to vector<2x8xf32>
    %885 = arith.mulf %883, %884 : vector<2x8xf32>
    %886 = arith.addf %870, %885 : vector<2x8xf32>
    %887 = vector.extract_strided_slice %17 {offsets = [5, 0], sizes = [1, 8], strides = [1, 1]} : vector<8x8xf32> to vector<1x8xf32>
    %888 = vector.broadcast %881 : vector<2x1xf32> to vector<2x8xf32>
    %889 = vector.broadcast %887 : vector<1x8xf32> to vector<2x8xf32>
    %890 = arith.mulf %888, %889 : vector<2x8xf32>
    %891 = arith.addf %875, %890 : vector<2x8xf32>
    %892 = vector.extract_strided_slice %18 {offsets = [5, 0], sizes = [1, 8], strides = [1, 1]} : vector<8x8xf32> to vector<1x8xf32>
    %893 = vector.broadcast %881 : vector<2x1xf32> to vector<2x8xf32>
    %894 = vector.broadcast %892 : vector<1x8xf32> to vector<2x8xf32>
    %895 = arith.mulf %893, %894 : vector<2x8xf32>
    %896 = arith.addf %880, %895 : vector<2x8xf32>
    %897 = vector.extract_strided_slice %796 {offsets = [0, 6], sizes = [2, 1], strides = [1, 1]} : vector<2x8xf32> to vector<2x1xf32>
    %898 = vector.extract_strided_slice %16 {offsets = [6, 0], sizes = [1, 8], strides = [1, 1]} : vector<8x8xf32> to vector<1x8xf32>
    %899 = vector.broadcast %897 : vector<2x1xf32> to vector<2x8xf32>
    %900 = vector.broadcast %898 : vector<1x8xf32> to vector<2x8xf32>
    %901 = arith.mulf %899, %900 : vector<2x8xf32>
    %902 = arith.addf %886, %901 : vector<2x8xf32>
    %903 = vector.extract_strided_slice %17 {offsets = [6, 0], sizes = [1, 8], strides = [1, 1]} : vector<8x8xf32> to vector<1x8xf32>
    %904 = vector.broadcast %897 : vector<2x1xf32> to vector<2x8xf32>
    %905 = vector.broadcast %903 : vector<1x8xf32> to vector<2x8xf32>
    %906 = arith.mulf %904, %905 : vector<2x8xf32>
    %907 = arith.addf %891, %906 : vector<2x8xf32>
    %908 = vector.extract_strided_slice %18 {offsets = [6, 0], sizes = [1, 8], strides = [1, 1]} : vector<8x8xf32> to vector<1x8xf32>
    %909 = vector.broadcast %897 : vector<2x1xf32> to vector<2x8xf32>
    %910 = vector.broadcast %908 : vector<1x8xf32> to vector<2x8xf32>
    %911 = arith.mulf %909, %910 : vector<2x8xf32>
    %912 = arith.addf %896, %911 : vector<2x8xf32>
    %913 = vector.extract_strided_slice %796 {offsets = [0, 7], sizes = [2, 1], strides = [1, 1]} : vector<2x8xf32> to vector<2x1xf32>
    %914 = vector.extract_strided_slice %16 {offsets = [7, 0], sizes = [1, 8], strides = [1, 1]} : vector<8x8xf32> to vector<1x8xf32>
    %915 = vector.broadcast %913 : vector<2x1xf32> to vector<2x8xf32>
    %916 = vector.broadcast %914 : vector<1x8xf32> to vector<2x8xf32>
    %917 = arith.mulf %915, %916 : vector<2x8xf32>
    %918 = arith.addf %902, %917 : vector<2x8xf32>
    %919 = vector.extract_strided_slice %17 {offsets = [7, 0], sizes = [1, 8], strides = [1, 1]} : vector<8x8xf32> to vector<1x8xf32>
    %920 = vector.broadcast %913 : vector<2x1xf32> to vector<2x8xf32>
    %921 = vector.broadcast %919 : vector<1x8xf32> to vector<2x8xf32>
    %922 = arith.mulf %920, %921 : vector<2x8xf32>
    %923 = arith.addf %907, %922 : vector<2x8xf32>
    %924 = vector.extract_strided_slice %18 {offsets = [7, 0], sizes = [1, 8], strides = [1, 1]} : vector<8x8xf32> to vector<1x8xf32>
    %925 = vector.broadcast %913 : vector<2x1xf32> to vector<2x8xf32>
    %926 = vector.broadcast %924 : vector<1x8xf32> to vector<2x8xf32>
    %927 = arith.mulf %925, %926 : vector<2x8xf32>
    %928 = arith.addf %912, %927 : vector<2x8xf32>
    %929 = vector.extract_strided_slice %5 {offsets = [10, 0], sizes = [2, 8], strides = [1, 1]} : vector<16x8xf32> to vector<2x8xf32>
    %930 = arith.addf %929, %918 : vector<2x8xf32>
    %931 = arith.negf %930 : vector<2x8xf32>
    %932 = math.exp %931 : vector<2x8xf32>
    %cst_50 = arith.constant 1.000000e+00 : f32
    %933 = vector.broadcast %cst_50 : f32 to vector<2x8xf32>
    %934 = arith.addf %933, %932 : vector<2x8xf32>
    %935 = arith.divf %933, %934 : vector<2x8xf32>
    %936 = vector.extract_strided_slice %10 {offsets = [10, 0], sizes = [2, 8], strides = [1, 1]} : vector<16x8xf32> to vector<2x8xf32>
    %937 = arith.addf %936, %923 : vector<2x8xf32>
    %938 = arith.negf %937 : vector<2x8xf32>
    %939 = math.exp %938 : vector<2x8xf32>
    %cst_51 = arith.constant 1.000000e+00 : f32
    %940 = vector.broadcast %cst_51 : f32 to vector<2x8xf32>
    %941 = arith.addf %940, %939 : vector<2x8xf32>
    %942 = arith.divf %940, %941 : vector<2x8xf32>
    %943 = vector.extract_strided_slice %15 {offsets = [10, 0], sizes = [2, 8], strides = [1, 1]} : vector<16x8xf32> to vector<2x8xf32>
    %944 = arith.mulf %935, %928 : vector<2x8xf32>
    %945 = arith.addf %943, %944 : vector<2x8xf32>
    %946 = math.tanh %945 : vector<2x8xf32>
    %cst_52 = arith.constant 1.000000e+00 : f32
    %947 = vector.broadcast %cst_52 : f32 to vector<2x8xf32>
    %948 = arith.subf %947, %942 : vector<2x8xf32>
    %949 = arith.mulf %948, %946 : vector<2x8xf32>
    %950 = arith.mulf %942, %796 : vector<2x8xf32>
    %951 = arith.addf %949, %950 : vector<2x8xf32>
    %c10 = arith.constant 10 : index
    %c0_53 = arith.constant 0 : index
    %952 = vector.load %arg21[%c10, %c0_53] : memref<16x8xf32, #tpu.memory_space<vmem>>, vector<2x8xf32>
    tpu.vector_store %arg21[%c10, %c0_53], %951 {strides = array<i32>} : memref<16x8xf32, #tpu.memory_space<vmem>>, vector<2x8xf32>,
    %953 = vector.extract_strided_slice %951 {offsets = [0, 0], sizes = [2, 1], strides = [1, 1]} : vector<2x8xf32> to vector<2x1xf32>
    %954 = vector.extract_strided_slice %16 {offsets = [0, 0], sizes = [1, 8], strides = [1, 1]} : vector<8x8xf32> to vector<1x8xf32>
    %955 = vector.broadcast %953 : vector<2x1xf32> to vector<2x8xf32>
    %956 = vector.broadcast %954 : vector<1x8xf32> to vector<2x8xf32>
    %957 = arith.mulf %955, %956 : vector<2x8xf32>
    %958 = vector.broadcast %19 : vector<1x8xf32> to vector<2x8xf32>
    %959 = arith.addf %958, %957 : vector<2x8xf32>
    %960 = vector.extract_strided_slice %17 {offsets = [0, 0], sizes = [1, 8], strides = [1, 1]} : vector<8x8xf32> to vector<1x8xf32>
    %961 = vector.broadcast %953 : vector<2x1xf32> to vector<2x8xf32>
    %962 = vector.broadcast %960 : vector<1x8xf32> to vector<2x8xf32>
    %963 = arith.mulf %961, %962 : vector<2x8xf32>
    %964 = vector.broadcast %20 : vector<1x8xf32> to vector<2x8xf32>
    %965 = arith.addf %964, %963 : vector<2x8xf32>
    %966 = vector.extract_strided_slice %18 {offsets = [0, 0], sizes = [1, 8], strides = [1, 1]} : vector<8x8xf32> to vector<1x8xf32>
    %967 = vector.broadcast %953 : vector<2x1xf32> to vector<2x8xf32>
    %968 = vector.broadcast %966 : vector<1x8xf32> to vector<2x8xf32>
    %969 = arith.mulf %967, %968 : vector<2x8xf32>
    %970 = vector.broadcast %21 : vector<1x8xf32> to vector<2x8xf32>
    %971 = arith.addf %970, %969 : vector<2x8xf32>
    %972 = vector.extract_strided_slice %951 {offsets = [0, 1], sizes = [2, 1], strides = [1, 1]} : vector<2x8xf32> to vector<2x1xf32>
    %973 = vector.extract_strided_slice %16 {offsets = [1, 0], sizes = [1, 8], strides = [1, 1]} : vector<8x8xf32> to vector<1x8xf32>
    %974 = vector.broadcast %972 : vector<2x1xf32> to vector<2x8xf32>
    %975 = vector.broadcast %973 : vector<1x8xf32> to vector<2x8xf32>
    %976 = arith.mulf %974, %975 : vector<2x8xf32>
    %977 = arith.addf %959, %976 : vector<2x8xf32>
    %978 = vector.extract_strided_slice %17 {offsets = [1, 0], sizes = [1, 8], strides = [1, 1]} : vector<8x8xf32> to vector<1x8xf32>
    %979 = vector.broadcast %972 : vector<2x1xf32> to vector<2x8xf32>
    %980 = vector.broadcast %978 : vector<1x8xf32> to vector<2x8xf32>
    %981 = arith.mulf %979, %980 : vector<2x8xf32>
    %982 = arith.addf %965, %981 : vector<2x8xf32>
    %983 = vector.extract_strided_slice %18 {offsets = [1, 0], sizes = [1, 8], strides = [1, 1]} : vector<8x8xf32> to vector<1x8xf32>
    %984 = vector.broadcast %972 : vector<2x1xf32> to vector<2x8xf32>
    %985 = vector.broadcast %983 : vector<1x8xf32> to vector<2x8xf32>
    %986 = arith.mulf %984, %985 : vector<2x8xf32>
    %987 = arith.addf %971, %986 : vector<2x8xf32>
    %988 = vector.extract_strided_slice %951 {offsets = [0, 2], sizes = [2, 1], strides = [1, 1]} : vector<2x8xf32> to vector<2x1xf32>
    %989 = vector.extract_strided_slice %16 {offsets = [2, 0], sizes = [1, 8], strides = [1, 1]} : vector<8x8xf32> to vector<1x8xf32>
    %990 = vector.broadcast %988 : vector<2x1xf32> to vector<2x8xf32>
    %991 = vector.broadcast %989 : vector<1x8xf32> to vector<2x8xf32>
    %992 = arith.mulf %990, %991 : vector<2x8xf32>
    %993 = arith.addf %977, %992 : vector<2x8xf32>
    %994 = vector.extract_strided_slice %17 {offsets = [2, 0], sizes = [1, 8], strides = [1, 1]} : vector<8x8xf32> to vector<1x8xf32>
    %995 = vector.broadcast %988 : vector<2x1xf32> to vector<2x8xf32>
    %996 = vector.broadcast %994 : vector<1x8xf32> to vector<2x8xf32>
    %997 = arith.mulf %995, %996 : vector<2x8xf32>
    %998 = arith.addf %982, %997 : vector<2x8xf32>
    %999 = vector.extract_strided_slice %18 {offsets = [2, 0], sizes = [1, 8], strides = [1, 1]} : vector<8x8xf32> to vector<1x8xf32>
    %1000 = vector.broadcast %988 : vector<2x1xf32> to vector<2x8xf32>
    %1001 = vector.broadcast %999 : vector<1x8xf32> to vector<2x8xf32>
    %1002 = arith.mulf %1000, %1001 : vector<2x8xf32>
    %1003 = arith.addf %987, %1002 : vector<2x8xf32>
    %1004 = vector.extract_strided_slice %951 {offsets = [0, 3], sizes = [2, 1], strides = [1, 1]} : vector<2x8xf32> to vector<2x1xf32>
    %1005 = vector.extract_strided_slice %16 {offsets = [3, 0], sizes = [1, 8], strides = [1, 1]} : vector<8x8xf32> to vector<1x8xf32>
    %1006 = vector.broadcast %1004 : vector<2x1xf32> to vector<2x8xf32>
    %1007 = vector.broadcast %1005 : vector<1x8xf32> to vector<2x8xf32>
    %1008 = arith.mulf %1006, %1007 : vector<2x8xf32>
    %1009 = arith.addf %993, %1008 : vector<2x8xf32>
    %1010 = vector.extract_strided_slice %17 {offsets = [3, 0], sizes = [1, 8], strides = [1, 1]} : vector<8x8xf32> to vector<1x8xf32>
    %1011 = vector.broadcast %1004 : vector<2x1xf32> to vector<2x8xf32>
    %1012 = vector.broadcast %1010 : vector<1x8xf32> to vector<2x8xf32>
    %1013 = arith.mulf %1011, %1012 : vector<2x8xf32>
    %1014 = arith.addf %998, %1013 : vector<2x8xf32>
    %1015 = vector.extract_strided_slice %18 {offsets = [3, 0], sizes = [1, 8], strides = [1, 1]} : vector<8x8xf32> to vector<1x8xf32>
    %1016 = vector.broadcast %1004 : vector<2x1xf32> to vector<2x8xf32>
    %1017 = vector.broadcast %1015 : vector<1x8xf32> to vector<2x8xf32>
    %1018 = arith.mulf %1016, %1017 : vector<2x8xf32>
    %1019 = arith.addf %1003, %1018 : vector<2x8xf32>
    %1020 = vector.extract_strided_slice %951 {offsets = [0, 4], sizes = [2, 1], strides = [1, 1]} : vector<2x8xf32> to vector<2x1xf32>
    %1021 = vector.extract_strided_slice %16 {offsets = [4, 0], sizes = [1, 8], strides = [1, 1]} : vector<8x8xf32> to vector<1x8xf32>
    %1022 = vector.broadcast %1020 : vector<2x1xf32> to vector<2x8xf32>
    %1023 = vector.broadcast %1021 : vector<1x8xf32> to vector<2x8xf32>
    %1024 = arith.mulf %1022, %1023 : vector<2x8xf32>
    %1025 = arith.addf %1009, %1024 : vector<2x8xf32>
    %1026 = vector.extract_strided_slice %17 {offsets = [4, 0], sizes = [1, 8], strides = [1, 1]} : vector<8x8xf32> to vector<1x8xf32>
    %1027 = vector.broadcast %1020 : vector<2x1xf32> to vector<2x8xf32>
    %1028 = vector.broadcast %1026 : vector<1x8xf32> to vector<2x8xf32>
    %1029 = arith.mulf %1027, %1028 : vector<2x8xf32>
    %1030 = arith.addf %1014, %1029 : vector<2x8xf32>
    %1031 = vector.extract_strided_slice %18 {offsets = [4, 0], sizes = [1, 8], strides = [1, 1]} : vector<8x8xf32> to vector<1x8xf32>
    %1032 = vector.broadcast %1020 : vector<2x1xf32> to vector<2x8xf32>
    %1033 = vector.broadcast %1031 : vector<1x8xf32> to vector<2x8xf32>
    %1034 = arith.mulf %1032, %1033 : vector<2x8xf32>
    %1035 = arith.addf %1019, %1034 : vector<2x8xf32>
    %1036 = vector.extract_strided_slice %951 {offsets = [0, 5], sizes = [2, 1], strides = [1, 1]} : vector<2x8xf32> to vector<2x1xf32>
    %1037 = vector.extract_strided_slice %16 {offsets = [5, 0], sizes = [1, 8], strides = [1, 1]} : vector<8x8xf32> to vector<1x8xf32>
    %1038 = vector.broadcast %1036 : vector<2x1xf32> to vector<2x8xf32>
    %1039 = vector.broadcast %1037 : vector<1x8xf32> to vector<2x8xf32>
    %1040 = arith.mulf %1038, %1039 : vector<2x8xf32>
    %1041 = arith.addf %1025, %1040 : vector<2x8xf32>
    %1042 = vector.extract_strided_slice %17 {offsets = [5, 0], sizes = [1, 8], strides = [1, 1]} : vector<8x8xf32> to vector<1x8xf32>
    %1043 = vector.broadcast %1036 : vector<2x1xf32> to vector<2x8xf32>
    %1044 = vector.broadcast %1042 : vector<1x8xf32> to vector<2x8xf32>
    %1045 = arith.mulf %1043, %1044 : vector<2x8xf32>
    %1046 = arith.addf %1030, %1045 : vector<2x8xf32>
    %1047 = vector.extract_strided_slice %18 {offsets = [5, 0], sizes = [1, 8], strides = [1, 1]} : vector<8x8xf32> to vector<1x8xf32>
    %1048 = vector.broadcast %1036 : vector<2x1xf32> to vector<2x8xf32>
    %1049 = vector.broadcast %1047 : vector<1x8xf32> to vector<2x8xf32>
    %1050 = arith.mulf %1048, %1049 : vector<2x8xf32>
    %1051 = arith.addf %1035, %1050 : vector<2x8xf32>
    %1052 = vector.extract_strided_slice %951 {offsets = [0, 6], sizes = [2, 1], strides = [1, 1]} : vector<2x8xf32> to vector<2x1xf32>
    %1053 = vector.extract_strided_slice %16 {offsets = [6, 0], sizes = [1, 8], strides = [1, 1]} : vector<8x8xf32> to vector<1x8xf32>
    %1054 = vector.broadcast %1052 : vector<2x1xf32> to vector<2x8xf32>
    %1055 = vector.broadcast %1053 : vector<1x8xf32> to vector<2x8xf32>
    %1056 = arith.mulf %1054, %1055 : vector<2x8xf32>
    %1057 = arith.addf %1041, %1056 : vector<2x8xf32>
    %1058 = vector.extract_strided_slice %17 {offsets = [6, 0], sizes = [1, 8], strides = [1, 1]} : vector<8x8xf32> to vector<1x8xf32>
    %1059 = vector.broadcast %1052 : vector<2x1xf32> to vector<2x8xf32>
    %1060 = vector.broadcast %1058 : vector<1x8xf32> to vector<2x8xf32>
    %1061 = arith.mulf %1059, %1060 : vector<2x8xf32>
    %1062 = arith.addf %1046, %1061 : vector<2x8xf32>
    %1063 = vector.extract_strided_slice %18 {offsets = [6, 0], sizes = [1, 8], strides = [1, 1]} : vector<8x8xf32> to vector<1x8xf32>
    %1064 = vector.broadcast %1052 : vector<2x1xf32> to vector<2x8xf32>
    %1065 = vector.broadcast %1063 : vector<1x8xf32> to vector<2x8xf32>
    %1066 = arith.mulf %1064, %1065 : vector<2x8xf32>
    %1067 = arith.addf %1051, %1066 : vector<2x8xf32>
    %1068 = vector.extract_strided_slice %951 {offsets = [0, 7], sizes = [2, 1], strides = [1, 1]} : vector<2x8xf32> to vector<2x1xf32>
    %1069 = vector.extract_strided_slice %16 {offsets = [7, 0], sizes = [1, 8], strides = [1, 1]} : vector<8x8xf32> to vector<1x8xf32>
    %1070 = vector.broadcast %1068 : vector<2x1xf32> to vector<2x8xf32>
    %1071 = vector.broadcast %1069 : vector<1x8xf32> to vector<2x8xf32>
    %1072 = arith.mulf %1070, %1071 : vector<2x8xf32>
    %1073 = arith.addf %1057, %1072 : vector<2x8xf32>
    %1074 = vector.extract_strided_slice %17 {offsets = [7, 0], sizes = [1, 8], strides = [1, 1]} : vector<8x8xf32> to vector<1x8xf32>
    %1075 = vector.broadcast %1068 : vector<2x1xf32> to vector<2x8xf32>
    %1076 = vector.broadcast %1074 : vector<1x8xf32> to vector<2x8xf32>
    %1077 = arith.mulf %1075, %1076 : vector<2x8xf32>
    %1078 = arith.addf %1062, %1077 : vector<2x8xf32>
    %1079 = vector.extract_strided_slice %18 {offsets = [7, 0], sizes = [1, 8], strides = [1, 1]} : vector<8x8xf32> to vector<1x8xf32>
    %1080 = vector.broadcast %1068 : vector<2x1xf32> to vector<2x8xf32>
    %1081 = vector.broadcast %1079 : vector<1x8xf32> to vector<2x8xf32>
    %1082 = arith.mulf %1080, %1081 : vector<2x8xf32>
    %1083 = arith.addf %1067, %1082 : vector<2x8xf32>
    %1084 = vector.extract_strided_slice %5 {offsets = [12, 0], sizes = [2, 8], strides = [1, 1]} : vector<16x8xf32> to vector<2x8xf32>
    %1085 = arith.addf %1084, %1073 : vector<2x8xf32>
    %1086 = arith.negf %1085 : vector<2x8xf32>
    %1087 = math.exp %1086 : vector<2x8xf32>
    %cst_54 = arith.constant 1.000000e+00 : f32
    %1088 = vector.broadcast %cst_54 : f32 to vector<2x8xf32>
    %1089 = arith.addf %1088, %1087 : vector<2x8xf32>
    %1090 = arith.divf %1088, %1089 : vector<2x8xf32>
    %1091 = vector.extract_strided_slice %10 {offsets = [12, 0], sizes = [2, 8], strides = [1, 1]} : vector<16x8xf32> to vector<2x8xf32>
    %1092 = arith.addf %1091, %1078 : vector<2x8xf32>
    %1093 = arith.negf %1092 : vector<2x8xf32>
    %1094 = math.exp %1093 : vector<2x8xf32>
    %cst_55 = arith.constant 1.000000e+00 : f32
    %1095 = vector.broadcast %cst_55 : f32 to vector<2x8xf32>
    %1096 = arith.addf %1095, %1094 : vector<2x8xf32>
    %1097 = arith.divf %1095, %1096 : vector<2x8xf32>
    %1098 = vector.extract_strided_slice %15 {offsets = [12, 0], sizes = [2, 8], strides = [1, 1]} : vector<16x8xf32> to vector<2x8xf32>
    %1099 = arith.mulf %1090, %1083 : vector<2x8xf32>
    %1100 = arith.addf %1098, %1099 : vector<2x8xf32>
    %1101 = math.tanh %1100 : vector<2x8xf32>
    %cst_56 = arith.constant 1.000000e+00 : f32
    %1102 = vector.broadcast %cst_56 : f32 to vector<2x8xf32>
    %1103 = arith.subf %1102, %1097 : vector<2x8xf32>
    %1104 = arith.mulf %1103, %1101 : vector<2x8xf32>
    %1105 = arith.mulf %1097, %951 : vector<2x8xf32>
    %1106 = arith.addf %1104, %1105 : vector<2x8xf32>
    %c12 = arith.constant 12 : index
    %c0_57 = arith.constant 0 : index
    %1107 = vector.load %arg21[%c12, %c0_57] : memref<16x8xf32, #tpu.memory_space<vmem>>, vector<2x8xf32>
    tpu.vector_store %arg21[%c12, %c0_57], %1106 {strides = array<i32>} : memref<16x8xf32, #tpu.memory_space<vmem>>, vector<2x8xf32>,
    %1108 = vector.extract_strided_slice %1106 {offsets = [0, 0], sizes = [2, 1], strides = [1, 1]} : vector<2x8xf32> to vector<2x1xf32>
    %1109 = vector.extract_strided_slice %16 {offsets = [0, 0], sizes = [1, 8], strides = [1, 1]} : vector<8x8xf32> to vector<1x8xf32>
    %1110 = vector.broadcast %1108 : vector<2x1xf32> to vector<2x8xf32>
    %1111 = vector.broadcast %1109 : vector<1x8xf32> to vector<2x8xf32>
    %1112 = arith.mulf %1110, %1111 : vector<2x8xf32>
    %1113 = vector.broadcast %19 : vector<1x8xf32> to vector<2x8xf32>
    %1114 = arith.addf %1113, %1112 : vector<2x8xf32>
    %1115 = vector.extract_strided_slice %17 {offsets = [0, 0], sizes = [1, 8], strides = [1, 1]} : vector<8x8xf32> to vector<1x8xf32>
    %1116 = vector.broadcast %1108 : vector<2x1xf32> to vector<2x8xf32>
    %1117 = vector.broadcast %1115 : vector<1x8xf32> to vector<2x8xf32>
    %1118 = arith.mulf %1116, %1117 : vector<2x8xf32>
    %1119 = vector.broadcast %20 : vector<1x8xf32> to vector<2x8xf32>
    %1120 = arith.addf %1119, %1118 : vector<2x8xf32>
    %1121 = vector.extract_strided_slice %18 {offsets = [0, 0], sizes = [1, 8], strides = [1, 1]} : vector<8x8xf32> to vector<1x8xf32>
    %1122 = vector.broadcast %1108 : vector<2x1xf32> to vector<2x8xf32>
    %1123 = vector.broadcast %1121 : vector<1x8xf32> to vector<2x8xf32>
    %1124 = arith.mulf %1122, %1123 : vector<2x8xf32>
    %1125 = vector.broadcast %21 : vector<1x8xf32> to vector<2x8xf32>
    %1126 = arith.addf %1125, %1124 : vector<2x8xf32>
    %1127 = vector.extract_strided_slice %1106 {offsets = [0, 1], sizes = [2, 1], strides = [1, 1]} : vector<2x8xf32> to vector<2x1xf32>
    %1128 = vector.extract_strided_slice %16 {offsets = [1, 0], sizes = [1, 8], strides = [1, 1]} : vector<8x8xf32> to vector<1x8xf32>
    %1129 = vector.broadcast %1127 : vector<2x1xf32> to vector<2x8xf32>
    %1130 = vector.broadcast %1128 : vector<1x8xf32> to vector<2x8xf32>
    %1131 = arith.mulf %1129, %1130 : vector<2x8xf32>
    %1132 = arith.addf %1114, %1131 : vector<2x8xf32>
    %1133 = vector.extract_strided_slice %17 {offsets = [1, 0], sizes = [1, 8], strides = [1, 1]} : vector<8x8xf32> to vector<1x8xf32>
    %1134 = vector.broadcast %1127 : vector<2x1xf32> to vector<2x8xf32>
    %1135 = vector.broadcast %1133 : vector<1x8xf32> to vector<2x8xf32>
    %1136 = arith.mulf %1134, %1135 : vector<2x8xf32>
    %1137 = arith.addf %1120, %1136 : vector<2x8xf32>
    %1138 = vector.extract_strided_slice %18 {offsets = [1, 0], sizes = [1, 8], strides = [1, 1]} : vector<8x8xf32> to vector<1x8xf32>
    %1139 = vector.broadcast %1127 : vector<2x1xf32> to vector<2x8xf32>
    %1140 = vector.broadcast %1138 : vector<1x8xf32> to vector<2x8xf32>
    %1141 = arith.mulf %1139, %1140 : vector<2x8xf32>
    %1142 = arith.addf %1126, %1141 : vector<2x8xf32>
    %1143 = vector.extract_strided_slice %1106 {offsets = [0, 2], sizes = [2, 1], strides = [1, 1]} : vector<2x8xf32> to vector<2x1xf32>
    %1144 = vector.extract_strided_slice %16 {offsets = [2, 0], sizes = [1, 8], strides = [1, 1]} : vector<8x8xf32> to vector<1x8xf32>
    %1145 = vector.broadcast %1143 : vector<2x1xf32> to vector<2x8xf32>
    %1146 = vector.broadcast %1144 : vector<1x8xf32> to vector<2x8xf32>
    %1147 = arith.mulf %1145, %1146 : vector<2x8xf32>
    %1148 = arith.addf %1132, %1147 : vector<2x8xf32>
    %1149 = vector.extract_strided_slice %17 {offsets = [2, 0], sizes = [1, 8], strides = [1, 1]} : vector<8x8xf32> to vector<1x8xf32>
    %1150 = vector.broadcast %1143 : vector<2x1xf32> to vector<2x8xf32>
    %1151 = vector.broadcast %1149 : vector<1x8xf32> to vector<2x8xf32>
    %1152 = arith.mulf %1150, %1151 : vector<2x8xf32>
    %1153 = arith.addf %1137, %1152 : vector<2x8xf32>
    %1154 = vector.extract_strided_slice %18 {offsets = [2, 0], sizes = [1, 8], strides = [1, 1]} : vector<8x8xf32> to vector<1x8xf32>
    %1155 = vector.broadcast %1143 : vector<2x1xf32> to vector<2x8xf32>
    %1156 = vector.broadcast %1154 : vector<1x8xf32> to vector<2x8xf32>
    %1157 = arith.mulf %1155, %1156 : vector<2x8xf32>
    %1158 = arith.addf %1142, %1157 : vector<2x8xf32>
    %1159 = vector.extract_strided_slice %1106 {offsets = [0, 3], sizes = [2, 1], strides = [1, 1]} : vector<2x8xf32> to vector<2x1xf32>
    %1160 = vector.extract_strided_slice %16 {offsets = [3, 0], sizes = [1, 8], strides = [1, 1]} : vector<8x8xf32> to vector<1x8xf32>
    %1161 = vector.broadcast %1159 : vector<2x1xf32> to vector<2x8xf32>
    %1162 = vector.broadcast %1160 : vector<1x8xf32> to vector<2x8xf32>
    %1163 = arith.mulf %1161, %1162 : vector<2x8xf32>
    %1164 = arith.addf %1148, %1163 : vector<2x8xf32>
    %1165 = vector.extract_strided_slice %17 {offsets = [3, 0], sizes = [1, 8], strides = [1, 1]} : vector<8x8xf32> to vector<1x8xf32>
    %1166 = vector.broadcast %1159 : vector<2x1xf32> to vector<2x8xf32>
    %1167 = vector.broadcast %1165 : vector<1x8xf32> to vector<2x8xf32>
    %1168 = arith.mulf %1166, %1167 : vector<2x8xf32>
    %1169 = arith.addf %1153, %1168 : vector<2x8xf32>
    %1170 = vector.extract_strided_slice %18 {offsets = [3, 0], sizes = [1, 8], strides = [1, 1]} : vector<8x8xf32> to vector<1x8xf32>
    %1171 = vector.broadcast %1159 : vector<2x1xf32> to vector<2x8xf32>
    %1172 = vector.broadcast %1170 : vector<1x8xf32> to vector<2x8xf32>
    %1173 = arith.mulf %1171, %1172 : vector<2x8xf32>
    %1174 = arith.addf %1158, %1173 : vector<2x8xf32>
    %1175 = vector.extract_strided_slice %1106 {offsets = [0, 4], sizes = [2, 1], strides = [1, 1]} : vector<2x8xf32> to vector<2x1xf32>
    %1176 = vector.extract_strided_slice %16 {offsets = [4, 0], sizes = [1, 8], strides = [1, 1]} : vector<8x8xf32> to vector<1x8xf32>
    %1177 = vector.broadcast %1175 : vector<2x1xf32> to vector<2x8xf32>
    %1178 = vector.broadcast %1176 : vector<1x8xf32> to vector<2x8xf32>
    %1179 = arith.mulf %1177, %1178 : vector<2x8xf32>
    %1180 = arith.addf %1164, %1179 : vector<2x8xf32>
    %1181 = vector.extract_strided_slice %17 {offsets = [4, 0], sizes = [1, 8], strides = [1, 1]} : vector<8x8xf32> to vector<1x8xf32>
    %1182 = vector.broadcast %1175 : vector<2x1xf32> to vector<2x8xf32>
    %1183 = vector.broadcast %1181 : vector<1x8xf32> to vector<2x8xf32>
    %1184 = arith.mulf %1182, %1183 : vector<2x8xf32>
    %1185 = arith.addf %1169, %1184 : vector<2x8xf32>
    %1186 = vector.extract_strided_slice %18 {offsets = [4, 0], sizes = [1, 8], strides = [1, 1]} : vector<8x8xf32> to vector<1x8xf32>
    %1187 = vector.broadcast %1175 : vector<2x1xf32> to vector<2x8xf32>
    %1188 = vector.broadcast %1186 : vector<1x8xf32> to vector<2x8xf32>
    %1189 = arith.mulf %1187, %1188 : vector<2x8xf32>
    %1190 = arith.addf %1174, %1189 : vector<2x8xf32>
    %1191 = vector.extract_strided_slice %1106 {offsets = [0, 5], sizes = [2, 1], strides = [1, 1]} : vector<2x8xf32> to vector<2x1xf32>
    %1192 = vector.extract_strided_slice %16 {offsets = [5, 0], sizes = [1, 8], strides = [1, 1]} : vector<8x8xf32> to vector<1x8xf32>
    %1193 = vector.broadcast %1191 : vector<2x1xf32> to vector<2x8xf32>
    %1194 = vector.broadcast %1192 : vector<1x8xf32> to vector<2x8xf32>
    %1195 = arith.mulf %1193, %1194 : vector<2x8xf32>
    %1196 = arith.addf %1180, %1195 : vector<2x8xf32>
    %1197 = vector.extract_strided_slice %17 {offsets = [5, 0], sizes = [1, 8], strides = [1, 1]} : vector<8x8xf32> to vector<1x8xf32>
    %1198 = vector.broadcast %1191 : vector<2x1xf32> to vector<2x8xf32>
    %1199 = vector.broadcast %1197 : vector<1x8xf32> to vector<2x8xf32>
    %1200 = arith.mulf %1198, %1199 : vector<2x8xf32>
    %1201 = arith.addf %1185, %1200 : vector<2x8xf32>
    %1202 = vector.extract_strided_slice %18 {offsets = [5, 0], sizes = [1, 8], strides = [1, 1]} : vector<8x8xf32> to vector<1x8xf32>
    %1203 = vector.broadcast %1191 : vector<2x1xf32> to vector<2x8xf32>
    %1204 = vector.broadcast %1202 : vector<1x8xf32> to vector<2x8xf32>
    %1205 = arith.mulf %1203, %1204 : vector<2x8xf32>
    %1206 = arith.addf %1190, %1205 : vector<2x8xf32>
    %1207 = vector.extract_strided_slice %1106 {offsets = [0, 6], sizes = [2, 1], strides = [1, 1]} : vector<2x8xf32> to vector<2x1xf32>
    %1208 = vector.extract_strided_slice %16 {offsets = [6, 0], sizes = [1, 8], strides = [1, 1]} : vector<8x8xf32> to vector<1x8xf32>
    %1209 = vector.broadcast %1207 : vector<2x1xf32> to vector<2x8xf32>
    %1210 = vector.broadcast %1208 : vector<1x8xf32> to vector<2x8xf32>
    %1211 = arith.mulf %1209, %1210 : vector<2x8xf32>
    %1212 = arith.addf %1196, %1211 : vector<2x8xf32>
    %1213 = vector.extract_strided_slice %17 {offsets = [6, 0], sizes = [1, 8], strides = [1, 1]} : vector<8x8xf32> to vector<1x8xf32>
    %1214 = vector.broadcast %1207 : vector<2x1xf32> to vector<2x8xf32>
    %1215 = vector.broadcast %1213 : vector<1x8xf32> to vector<2x8xf32>
    %1216 = arith.mulf %1214, %1215 : vector<2x8xf32>
    %1217 = arith.addf %1201, %1216 : vector<2x8xf32>
    %1218 = vector.extract_strided_slice %18 {offsets = [6, 0], sizes = [1, 8], strides = [1, 1]} : vector<8x8xf32> to vector<1x8xf32>
    %1219 = vector.broadcast %1207 : vector<2x1xf32> to vector<2x8xf32>
    %1220 = vector.broadcast %1218 : vector<1x8xf32> to vector<2x8xf32>
    %1221 = arith.mulf %1219, %1220 : vector<2x8xf32>
    %1222 = arith.addf %1206, %1221 : vector<2x8xf32>
    %1223 = vector.extract_strided_slice %1106 {offsets = [0, 7], sizes = [2, 1], strides = [1, 1]} : vector<2x8xf32> to vector<2x1xf32>
    %1224 = vector.extract_strided_slice %16 {offsets = [7, 0], sizes = [1, 8], strides = [1, 1]} : vector<8x8xf32> to vector<1x8xf32>
    %1225 = vector.broadcast %1223 : vector<2x1xf32> to vector<2x8xf32>
    %1226 = vector.broadcast %1224 : vector<1x8xf32> to vector<2x8xf32>
    %1227 = arith.mulf %1225, %1226 : vector<2x8xf32>
    %1228 = arith.addf %1212, %1227 : vector<2x8xf32>
    %1229 = vector.extract_strided_slice %17 {offsets = [7, 0], sizes = [1, 8], strides = [1, 1]} : vector<8x8xf32> to vector<1x8xf32>
    %1230 = vector.broadcast %1223 : vector<2x1xf32> to vector<2x8xf32>
    %1231 = vector.broadcast %1229 : vector<1x8xf32> to vector<2x8xf32>
    %1232 = arith.mulf %1230, %1231 : vector<2x8xf32>
    %1233 = arith.addf %1217, %1232 : vector<2x8xf32>
    %1234 = vector.extract_strided_slice %18 {offsets = [7, 0], sizes = [1, 8], strides = [1, 1]} : vector<8x8xf32> to vector<1x8xf32>
    %1235 = vector.broadcast %1223 : vector<2x1xf32> to vector<2x8xf32>
    %1236 = vector.broadcast %1234 : vector<1x8xf32> to vector<2x8xf32>
    %1237 = arith.mulf %1235, %1236 : vector<2x8xf32>
    %1238 = arith.addf %1222, %1237 : vector<2x8xf32>
    %1239 = vector.extract_strided_slice %5 {offsets = [14, 0], sizes = [2, 8], strides = [1, 1]} : vector<16x8xf32> to vector<2x8xf32>
    %1240 = arith.addf %1239, %1228 : vector<2x8xf32>
    %1241 = arith.negf %1240 : vector<2x8xf32>
    %1242 = math.exp %1241 : vector<2x8xf32>
    %cst_58 = arith.constant 1.000000e+00 : f32
    %1243 = vector.broadcast %cst_58 : f32 to vector<2x8xf32>
    %1244 = arith.addf %1243, %1242 : vector<2x8xf32>
    %1245 = arith.divf %1243, %1244 : vector<2x8xf32>
    %1246 = vector.extract_strided_slice %10 {offsets = [14, 0], sizes = [2, 8], strides = [1, 1]} : vector<16x8xf32> to vector<2x8xf32>
    %1247 = arith.addf %1246, %1233 : vector<2x8xf32>
    %1248 = arith.negf %1247 : vector<2x8xf32>
    %1249 = math.exp %1248 : vector<2x8xf32>
    %cst_59 = arith.constant 1.000000e+00 : f32
    %1250 = vector.broadcast %cst_59 : f32 to vector<2x8xf32>
    %1251 = arith.addf %1250, %1249 : vector<2x8xf32>
    %1252 = arith.divf %1250, %1251 : vector<2x8xf32>
    %1253 = vector.extract_strided_slice %15 {offsets = [14, 0], sizes = [2, 8], strides = [1, 1]} : vector<16x8xf32> to vector<2x8xf32>
    %1254 = arith.mulf %1245, %1238 : vector<2x8xf32>
    %1255 = arith.addf %1253, %1254 : vector<2x8xf32>
    %1256 = math.tanh %1255 : vector<2x8xf32>
    %cst_60 = arith.constant 1.000000e+00 : f32
    %1257 = vector.broadcast %cst_60 : f32 to vector<2x8xf32>
    %1258 = arith.subf %1257, %1252 : vector<2x8xf32>
    %1259 = arith.mulf %1258, %1256 : vector<2x8xf32>
    %1260 = arith.mulf %1252, %1106 : vector<2x8xf32>
    %1261 = arith.addf %1259, %1260 : vector<2x8xf32>
    %c14 = arith.constant 14 : index
    %c0_61 = arith.constant 0 : index
    %1262 = vector.load %arg21[%c14, %c0_61] : memref<16x8xf32, #tpu.memory_space<vmem>>, vector<2x8xf32>
    tpu.vector_store %arg21[%c14, %c0_61], %1261 {strides = array<i32>} : memref<16x8xf32, #tpu.memory_space<vmem>>, vector<2x8xf32>,
    %c0_62 = arith.constant 0 : index
    %c0_63 = arith.constant 0 : index
    %1263 = vector.load %arg21[%c0_62, %c0_63] : memref<16x8xf32, #tpu.memory_space<vmem>>, vector<16x8xf32>
    %c0_64 = arith.constant 0 : index
    %c0_65 = arith.constant 0 : index
    %1264 = vector.load %arg14[%c0_64, %c0_65] : memref<8x128xf32, #tpu.memory_space<vmem>>, vector<8x128xf32>
    %cst_66 = arith.constant dense<0.000000e+00> : vector<16x128xf32>
    %1265 = tpu.matmul %1263, %1264, %cst_66 {dimension_numbers = #tpu.dot_dimension_numbers<[1], [0], [0], [1], [0, 0, 1, 1], [], []>} : vector<16x8xf32>, vector<8x128xf32>, vector<16x128xf32> -> vector<16x128xf32>
    %c0_67 = arith.constant 0 : index
    %c0_68 = arith.constant 0 : index
    %1266 = vector.load %arg15[%c0_67, %c0_68] : memref<1x128xf32, #tpu.memory_space<vmem>>, vector<1x128xf32>
    %1267 = vector.broadcast %1266 : vector<1x128xf32> to vector<16x128xf32>
    %1268 = arith.addf %1265, %1267 : vector<16x128xf32>
    %cst_69 = arith.constant 0.000000e+00 : f32
    %1269 = vector.broadcast %cst_69 : f32 to vector<16x128xf32>
    %1270 = arith.maximumf %1268, %1269 : vector<16x128xf32>
    %c0_70 = arith.constant 0 : index
    %c0_71 = arith.constant 0 : index
    %1271 = vector.load %arg16[%c0_70, %c0_71] : memref<128x128xf32, #tpu.memory_space<vmem>>, vector<128x128xf32>
    %cst_72 = arith.constant dense<0.000000e+00> : vector<16x128xf32>
    %1272 = tpu.matmul %1270, %1271, %cst_72 {dimension_numbers = #tpu.dot_dimension_numbers<[1], [0], [0], [1], [0, 0, 1, 1], [], []>} : vector<16x128xf32>, vector<128x128xf32>, vector<16x128xf32> -> vector<16x128xf32>
    %c0_73 = arith.constant 0 : index
    %c0_74 = arith.constant 0 : index
    %1273 = vector.load %arg17[%c0_73, %c0_74] : memref<1x128xf32, #tpu.memory_space<vmem>>, vector<1x128xf32>
    %1274 = vector.broadcast %1273 : vector<1x128xf32> to vector<16x128xf32>
    %1275 = arith.addf %1272, %1274 : vector<16x128xf32>
    %cst_75 = arith.constant 0.000000e+00 : f32
    %1276 = vector.broadcast %cst_75 : f32 to vector<16x128xf32>
    %1277 = arith.maximumf %1275, %1276 : vector<16x128xf32>
    %c0_76 = arith.constant 0 : index
    %c0_77 = arith.constant 0 : index
    %1278 = vector.load %arg18[%c0_76, %c0_77] : memref<128x128xf32, #tpu.memory_space<vmem>>, vector<128x128xf32>
    %cst_78 = arith.constant dense<0.000000e+00> : vector<16x128xf32>
    %1279 = tpu.matmul %1277, %1278, %cst_78 {dimension_numbers = #tpu.dot_dimension_numbers<[1], [0], [0], [1], [0, 0, 1, 1], [], []>} : vector<16x128xf32>, vector<128x128xf32>, vector<16x128xf32> -> vector<16x128xf32>
    %c0_79 = arith.constant 0 : index
    %c0_80 = arith.constant 0 : index
    %1280 = vector.load %arg19[%c0_79, %c0_80] : memref<1x128xf32, #tpu.memory_space<vmem>>, vector<1x128xf32>
    %1281 = vector.broadcast %1280 : vector<1x128xf32> to vector<16x128xf32>
    %1282 = arith.addf %1279, %1281 : vector<16x128xf32>
    %c0_81 = arith.constant 0 : index
    %c0_82 = arith.constant 0 : index
    %1283 = vector.load %arg20[%c0_81, %c0_82] : memref<16x128xf32, #tpu.memory_space<vmem>>, vector<16x128xf32>
    tpu.vector_store %arg20[%c0_81, %c0_82], %1282 {strides = array<i32>} : memref<16x128xf32, #tpu.memory_space<vmem>>, vector<16x128xf32>,
    return
  }
}

</mosaic_0001>

<llo_original>
// kernel: tpu_custom_call.1
$region0: #{tpu_custom_call.1}
  #allocation0 [shape = 'u32[]', space=smem, size = 0x4, offset = 0x4, fixed_abs, tag = 'smem constant byte address 0x4 - core index']
  #allocation1 [shape = 'u32[72,128]{1,0:T(1,128)}', space=vmem, size = 0x9000, scoped, tag = 'internal scratch']
  %s0 = inlined_call_operand.vmem [shape: f32[16,3], index: 0, kind: input, shape index: {}]
  %s1 = inlined_call_operand.hbm [shape: f32[2,8], index: 1, kind: input, shape index: {}]
  %s2 = inlined_call_operand.hbm [shape: f32[3,8], index: 2, kind: input, shape index: {}]
  %s3 = inlined_call_operand.hbm [shape: f32[3,8], index: 3, kind: input, shape index: {}]
  %s4 = inlined_call_operand.hbm [shape: f32[3,8], index: 4, kind: input, shape index: {}]
  %s5 = inlined_call_operand.hbm [shape: f32[1,8], index: 5, kind: input, shape index: {}]
  %s6 = inlined_call_operand.hbm [shape: f32[1,8], index: 6, kind: input, shape index: {}]
  %s7 = inlined_call_operand.hbm [shape: f32[1,8], index: 7, kind: input, shape index: {}]
  %s8 = inlined_call_operand.vmem [shape: f32[8,8], index: 8, kind: input, shape index: {}]
  %s9 = inlined_call_operand.vmem [shape: f32[8,8], index: 9, kind: input, shape index: {}]
  %s10 = inlined_call_operand.vmem [shape: f32[8,8], index: 10, kind: input, shape index: {}]
  %s11 = inlined_call_operand.hbm [shape: f32[1,8], index: 11, kind: input, shape index: {}]
  %s12 = inlined_call_operand.hbm [shape: f32[1,8], index: 12, kind: input, shape index: {}]
  %s13 = inlined_call_operand.hbm [shape: f32[1,8], index: 13, kind: input, shape index: {}]
  %s14 = inlined_call_operand.vmem [shape: f32[8,128], index: 14, kind: input, shape index: {}]
  %s15 = inlined_call_operand.vmem [shape: f32[1,128], index: 15, kind: input, shape index: {}]
  %s16 = inlined_call_operand.hbm [shape: f32[128,128], index: 16, kind: input, shape index: {}]
  %s17 = inlined_call_operand.vmem [shape: f32[1,128], index: 17, kind: input, shape index: {}]
  %s18 = inlined_call_operand.hbm [shape: f32[128,128], index: 18, kind: input, shape index: {}]
  %s19 = inlined_call_operand.vmem [shape: f32[1,128], index: 19, kind: input, shape index: {}]
  %s20 = inlined_call_operand.hbm [shape: f32[16,128], index: 20, kind: output, shape index: {0}]
  %s21 = inlined_call_operand.vmem [shape: f32[16,8], index: 21, kind: output, shape index: {1}]
  %22 = xla_tuple %s20, %s21
  %s23 = sld [smem:[#allocation0]]
  $region146: #{tpu_custom_call.1} parent=0
    _
  %s25 = ssub.s32 1, %s23
  %s26 = scalar_select 0, %s25, %s23
  $region1: #{tpu_custom_call.1} parent=0
    #allocation2 [shape = 'u8[1024]{0}', space=vmem, size = 0x400, scoped, tag = 'input window, operand 1, single buffered']
    #allocation3 [shape = 's32[1]{0}', space=sflag, size = 0x4, scoped, tag = 'scoped memory for tpu_custom_call.1']
    #allocation4 [shape = 's32[1]{0}', space=sflag, size = 0x4, scoped, tag = 'scoped memory for tpu_custom_call.1']
    #allocation5 [shape = 'u8[2048]{0}', space=vmem, size = 0x800, scoped, tag = 'input window, operand 2, single buffered']
    #allocation6 [shape = 's32[1]{0}', space=sflag, size = 0x4, scoped, tag = 'scoped memory for tpu_custom_call.1']
    #allocation7 [shape = 'u8[2048]{0}', space=vmem, size = 0x800, scoped, tag = 'input window, operand 3, single buffered']
    #allocation8 [shape = 'u8[2048]{0}', space=vmem, size = 0x800, scoped, tag = 'input window, operand 4, single buffered']
    #allocation9 [shape = 's32[1]{0}', space=sflag, size = 0x4, scoped, tag = 'scoped memory for tpu_custom_call.1']
    #allocation10 [shape = 'u8[512]{0}', space=vmem, size = 0x400, scoped, tag = 'input window, operand 5, single buffered']
    #allocation11 [shape = 'u8[512]{0}', space=vmem, size = 0x400, scoped, tag = 'input window, operand 6, single buffered']
    #allocation12 [shape = 's32[1]{0}', space=sflag, size = 0x4, scoped, tag = 'scoped memory for tpu_custom_call.1']
    #allocation13 [shape = 'u8[512]{0}', space=vmem, size = 0x400, scoped, tag = 'input window, operand 7, single buffered']
    #allocation14 [shape = 'u8[512]{0}', space=vmem, size = 0x400, scoped, tag = 'input window, operand 11, single buffered']
    #allocation15 [shape = 's32[1]{0}', space=sflag, size = 0x4, scoped, tag = 'scoped memory for tpu_custom_call.1']
    #allocation16 [shape = 'u8[512]{0}', space=vmem, size = 0x400, scoped, tag = 'input window, operand 12, single buffered']
    #allocation17 [shape = 'u8[512]{0}', space=vmem, size = 0x400, scoped, tag = 'input window, operand 13, single buffered']
    #allocation18 [shape = 's32[1]{0}', space=sflag, size = 0x4, scoped, tag = 'scoped memory for tpu_custom_call.1']
    #allocation19 [shape = 'u8[65536]{0}', space=vmem, size = 0x10000, scoped, tag = 'input window, operand 16, single buffered']
    #allocation20 [shape = 'u8[65536]{0}', space=vmem, size = 0x10000, scoped, tag = 'input window, operand 18, single buffered']
    #allocation21 [shape = 's32[1]{0}', space=sflag, size = 0x4, scoped, tag = 'scoped memory for tpu_custom_call.1']
    #allocation22 [shape = 'u8[8192]{0}', space=vmem, size = 0x2000, scoped, tag = 'output window, operand 0, single buffered']
    %27 = vsyncpa [#allocation3], 0
    %28 = vsyncpa [#allocation6], 0
    %29 = vsyncpa [#allocation9], 0
    %30 = vsyncpa [#allocation12], 0
    %31 = vsyncpa [#allocation15], 0
    %32 = vsyncpa [#allocation18], 0
    %33 = vsyncpa [#allocation21], 0
    %34 = vsyncpa [#allocation4], 0
    // Predicated region
    $region2: #{tpu_custom_call.1} parent=1 // pred_check
      _
    $region3: #{tpu_custom_call.1} parent=1 // pred_check_branch
      %36 = sbr.rel (0) target = $region5
    $region4: #{tpu_custom_call.1} parent=1 // pred_region
      _
    $region5: #{tpu_custom_call.1} parent=1 // pred_fallthru
      _
    // Predicated region
    $region6: #{tpu_custom_call.1} parent=1 // pred_check
      _
    $region7: #{tpu_custom_call.1} parent=1 // pred_check_branch
      %38 = sbr.rel (0) target = $region9
    $region8: #{tpu_custom_call.1} parent=1 // pred_region
      %40 = vsyncadd [#allocation3], 0
      %s42 = sshll.u32 %s1, 4
      %s43 = int_to_ptr.hbm [resolvable:$true] %s42
      %s44 = sshll.u32 [#allocation2], 4
      %s45 = int_to_ptr.vmem [resolvable:$true] %s44
      %47 = dma.hbm_to_vmem [thread:$0]  %s43, 32, %s45, [#allocation3]
    $region9: #{tpu_custom_call.1} parent=1 // pred_fallthru
      _
    // Predicated region
    $region10: #{tpu_custom_call.1} parent=1 // pred_check
      _
    $region11: #{tpu_custom_call.1} parent=1 // pred_check_branch
      %49 = sbr.rel (0) target = $region13
    $region12: #{tpu_custom_call.1} parent=1 // pred_region
      %51 = vsyncadd [#allocation6], 0
      %s53 = sshll.u32 %s2, 4
      %s54 = int_to_ptr.hbm [resolvable:$true] %s53
      %s55 = sshll.u32 [#allocation5], 4
      %s56 = int_to_ptr.vmem [resolvable:$true] %s55
      %58 = dma.hbm_to_vmem [thread:$0]  %s54, 64, %s56, [#allocation6]
    $region13: #{tpu_custom_call.1} parent=1 // pred_fallthru
      _
    // Predicated region
    $region14: #{tpu_custom_call.1} parent=1 // pred_check
      _
    $region15: #{tpu_custom_call.1} parent=1 // pred_check_branch
      %60 = sbr.rel (0) target = $region17
    $region16: #{tpu_custom_call.1} parent=1 // pred_region
      %62 = vsyncadd [#allocation6], 0
      %s64 = sshll.u32 %s3, 4
      %s65 = int_to_ptr.hbm [resolvable:$true] %s64
      %s66 = sshll.u32 [#allocation7], 4
      %s67 = int_to_ptr.vmem [resolvable:$true] %s66
      %69 = dma.hbm_to_vmem [thread:$0]  %s65, 64, %s67, [#allocation6]
    $region17: #{tpu_custom_call.1} parent=1 // pred_fallthru
      _
    // Predicated region
    $region18: #{tpu_custom_call.1} parent=1 // pred_check
      _
    $region19: #{tpu_custom_call.1} parent=1 // pred_check_branch
      %71 = sbr.rel (0) target = $region21
    $region20: #{tpu_custom_call.1} parent=1 // pred_region
      %73 = vsyncadd [#allocation9], 0
      %s75 = sshll.u32 %s4, 4
      %s76 = int_to_ptr.hbm [resolvable:$true] %s75
      %s77 = sshll.u32 [#allocation8], 4
      %s78 = int_to_ptr.vmem [resolvable:$true] %s77
      %80 = dma.hbm_to_vmem [thread:$0]  %s76, 64, %s78, [#allocation9]
    $region21: #{tpu_custom_call.1} parent=1 // pred_fallthru
      _
    // Predicated region
    $region22: #{tpu_custom_call.1} parent=1 // pred_check
      _
    $region23: #{tpu_custom_call.1} parent=1 // pred_check_branch
      %82 = sbr.rel (0) target = $region25
    $region24: #{tpu_custom_call.1} parent=1 // pred_region
      %84 = vsyncadd [#allocation9], 0
      %s86 = sshll.u32 %s5, 4
      %s87 = int_to_ptr.hbm [resolvable:$true] %s86
      %s88 = sshll.u32 [#allocation10], 4
      %s89 = int_to_ptr.vmem [resolvable:$true] %s88
      %91 = dma.hbm_to_vmem [thread:$0]  %s87, 16, %s89, [#allocation9]
    $region25: #{tpu_custom_call.1} parent=1 // pred_fallthru
      _
    // Predicated region
    $region26: #{tpu_custom_call.1} parent=1 // pred_check
      _
    $region27: #{tpu_custom_call.1} parent=1 // pred_check_branch
      %93 = sbr.rel (0) target = $region29
    $region28: #{tpu_custom_call.1} parent=1 // pred_region
      %95 = vsyncadd [#allocation12], 0
      %s97 = sshll.u32 %s6, 4
      %s98 = int_to_ptr.hbm [resolvable:$true] %s97
      %s99 = sshll.u32 [#allocation11], 4
      %s100 = int_to_ptr.vmem [resolvable:$true] %s99
      %102 = dma.hbm_to_vmem [thread:$0]  %s98, 16, %s100, [#allocation12]
    $region29: #{tpu_custom_call.1} parent=1 // pred_fallthru
      _
    // Predicated region
    $region30: #{tpu_custom_call.1} parent=1 // pred_check
      _
    $region31: #{tpu_custom_call.1} parent=1 // pred_check_branch
      %104 = sbr.rel (0) target = $region33
    $region32: #{tpu_custom_call.1} parent=1 // pred_region
      %106 = vsyncadd [#allocation12], 0
      %s108 = sshll.u32 %s7, 4
      %s109 = int_to_ptr.hbm [resolvable:$true] %s108
      %s110 = sshll.u32 [#allocation13], 4
      %s111 = int_to_ptr.vmem [resolvable:$true] %s110
      %113 = dma.hbm_to_vmem [thread:$0]  %s109, 16, %s111, [#allocation12]
    $region33: #{tpu_custom_call.1} parent=1 // pred_fallthru
      _
    // Predicated region
    $region34: #{tpu_custom_call.1} parent=1 // pred_check
      _
    $region35: #{tpu_custom_call.1} parent=1 // pred_check_branch
      %115 = sbr.rel (0) target = $region37
    $region36: #{tpu_custom_call.1} parent=1 // pred_region
      _
    $region37: #{tpu_custom_call.1} parent=1 // pred_fallthru
      _
    // Predicated region
    $region38: #{tpu_custom_call.1} parent=1 // pred_check
      _
    $region39: #{tpu_custom_call.1} parent=1 // pred_check_branch
      %117 = sbr.rel (0) target = $region41
    $region40: #{tpu_custom_call.1} parent=1 // pred_region
      _
    $region41: #{tpu_custom_call.1} parent=1 // pred_fallthru
      _
    // Predicated region
    $region42: #{tpu_custom_call.1} parent=1 // pred_check
      _
    $region43: #{tpu_custom_call.1} parent=1 // pred_check_branch
      %119 = sbr.rel (0) target = $region45
    $region44: #{tpu_custom_call.1} parent=1 // pred_region
      _
    $region45: #{tpu_custom_call.1} parent=1 // pred_fallthru
      _
    // Predicated region
    $region46: #{tpu_custom_call.1} parent=1 // pred_check
      _
    $region47: #{tpu_custom_call.1} parent=1 // pred_check_branch
      %121 = sbr.rel (0) target = $region49
    $region48: #{tpu_custom_call.1} parent=1 // pred_region
      %123 = vsyncadd [#allocation15], 0
      %s125 = sshll.u32 %s11, 4
      %s126 = int_to_ptr.hbm [resolvable:$true] %s125
      %s127 = sshll.u32 [#allocation14], 4
      %s128 = int_to_ptr.vmem [resolvable:$true] %s127
      %130 = dma.hbm_to_vmem [thread:$0]  %s126, 16, %s128, [#allocation15]
    $region49: #{tpu_custom_call.1} parent=1 // pred_fallthru
      _
    // Predicated region
    $region50: #{tpu_custom_call.1} parent=1 // pred_check
      _
    $region51: #{tpu_custom_call.1} parent=1 // pred_check_branch
      %132 = sbr.rel (0) target = $region53
    $region52: #{tpu_custom_call.1} parent=1 // pred_region
      %134 = vsyncadd [#allocation15], 0
      %s136 = sshll.u32 %s12, 4
      %s137 = int_to_ptr.hbm [resolvable:$true] %s136
      %s138 = sshll.u32 [#allocation16], 4
      %s139 = int_to_ptr.vmem [resolvable:$true] %s138
      %141 = dma.hbm_to_vmem [thread:$0]  %s137, 16, %s139, [#allocation15]
    $region53: #{tpu_custom_call.1} parent=1 // pred_fallthru
      _
    // Predicated region
    $region54: #{tpu_custom_call.1} parent=1 // pred_check
      _
    $region55: #{tpu_custom_call.1} parent=1 // pred_check_branch
      %143 = sbr.rel (0) target = $region57
    $region56: #{tpu_custom_call.1} parent=1 // pred_region
      %145 = vsyncadd [#allocation18], 0
      %s147 = sshll.u32 %s13, 4
      %s148 = int_to_ptr.hbm [resolvable:$true] %s147
      %s149 = sshll.u32 [#allocation17], 4
      %s150 = int_to_ptr.vmem [resolvable:$true] %s149
      %152 = dma.hbm_to_vmem [thread:$0]  %s148, 16, %s150, [#allocation18]
    $region57: #{tpu_custom_call.1} parent=1 // pred_fallthru
      _
    // Predicated region
    $region58: #{tpu_custom_call.1} parent=1 // pred_check
      _
    $region59: #{tpu_custom_call.1} parent=1 // pred_check_branch
      %154 = sbr.rel (0) target = $region61
    $region60: #{tpu_custom_call.1} parent=1 // pred_region
      _
    $region61: #{tpu_custom_call.1} parent=1 // pred_fallthru
      _
    // Predicated region
    $region62: #{tpu_custom_call.1} parent=1 // pred_check
      _
    $region63: #{tpu_custom_call.1} parent=1 // pred_check_branch
      %156 = sbr.rel (0) target = $region65
    $region64: #{tpu_custom_call.1} parent=1 // pred_region
      _
    $region65: #{tpu_custom_call.1} parent=1 // pred_fallthru
      _
    // Predicated region
    $region66: #{tpu_custom_call.1} parent=1 // pred_check
      _
    $region67: #{tpu_custom_call.1} parent=1 // pred_check_branch
      %158 = sbr.rel (0) target = $region69
    $region68: #{tpu_custom_call.1} parent=1 // pred_region
      %160 = vsyncadd [#allocation18], 0
      %s161 = sshll.u32 %s16, 4
      %s162 = int_to_ptr.hbm [resolvable:$true] %s161
      %s163 = sshll.u32 [#allocation19], 4
      %s164 = int_to_ptr.vmem [resolvable:$true] %s163
      %169 = dma.hbm_to_vmem [thread:$0]  %s162, 2048, %s164, [#allocation18], 128, 128, 8
    $region69: #{tpu_custom_call.1} parent=1 // pred_fallthru
      _
    // Predicated region
    $region70: #{tpu_custom_call.1} parent=1 // pred_check
      _
    $region71: #{tpu_custom_call.1} parent=1 // pred_check_branch
      %171 = sbr.rel (0) target = $region73
    $region72: #{tpu_custom_call.1} parent=1 // pred_region
      _
    $region73: #{tpu_custom_call.1} parent=1 // pred_fallthru
      _
    // Predicated region
    $region74: #{tpu_custom_call.1} parent=1 // pred_check
      _
    $region75: #{tpu_custom_call.1} parent=1 // pred_check_branch
      %173 = sbr.rel (0) target = $region77
    $region76: #{tpu_custom_call.1} parent=1 // pred_region
      %175 = vsyncadd [#allocation21], 0
      %s176 = sshll.u32 %s18, 4
      %s177 = int_to_ptr.hbm [resolvable:$true] %s176
      %s178 = sshll.u32 [#allocation20], 4
      %s179 = int_to_ptr.vmem [resolvable:$true] %s178
      %184 = dma.hbm_to_vmem [thread:$0]  %s177, 2048, %s179, [#allocation21], 128, 128, 8
    $region77: #{tpu_custom_call.1} parent=1 // pred_fallthru
      _
    // Predicated region
    $region78: #{tpu_custom_call.1} parent=1 // pred_check
      _
    $region79: #{tpu_custom_call.1} parent=1 // pred_check_branch
      %186 = sbr.rel (0) target = $region81
    $region80: #{tpu_custom_call.1} parent=1 // pred_region
      _
    $region81: #{tpu_custom_call.1} parent=1 // pred_fallthru
      _
    // Predicated region
    $region82: #{tpu_custom_call.1} parent=1 // pred_check
      _
    $region83: #{tpu_custom_call.1} parent=1 // pred_check_branch
      %188 = sbr.rel (0) target = $region85
    $region84: #{tpu_custom_call.1} parent=1 // pred_region
      %190 = dma.done [#allocation3], 32
    $region85: #{tpu_custom_call.1} parent=1 // pred_fallthru
      _
    // Predicated region
    $region86: #{tpu_custom_call.1} parent=1 // pred_check
      _
    $region87: #{tpu_custom_call.1} parent=1 // pred_check_branch
      %192 = sbr.rel (0) target = $region89
    $region88: #{tpu_custom_call.1} parent=1 // pred_region
      %194 = dma.done [#allocation6], 64
    $region89: #{tpu_custom_call.1} parent=1 // pred_fallthru
      _
    // Predicated region
    $region90: #{tpu_custom_call.1} parent=1 // pred_check
      _
    $region91: #{tpu_custom_call.1} parent=1 // pred_check_branch
      %196 = sbr.rel (0) target = $region93
    $region92: #{tpu_custom_call.1} parent=1 // pred_region
      %198 = dma.done [#allocation6], 64
    $region93: #{tpu_custom_call.1} parent=1 // pred_fallthru
      _
    // Predicated region
    $region94: #{tpu_custom_call.1} parent=1 // pred_check
      _
    $region95: #{tpu_custom_call.1} parent=1 // pred_check_branch
      %200 = sbr.rel (0) target = $region97
    $region96: #{tpu_custom_call.1} parent=1 // pred_region
      %202 = dma.done [#allocation9], 64
    $region97: #{tpu_custom_call.1} parent=1 // pred_fallthru
      _
    // Predicated region
    $region98: #{tpu_custom_call.1} parent=1 // pred_check
      _
    $region99: #{tpu_custom_call.1} parent=1 // pred_check_branch
      %204 = sbr.rel (0) target = $region101
    $region100: #{tpu_custom_call.1} parent=1 // pred_region
      %206 = dma.done [#allocation9], 16
    $region101: #{tpu_custom_call.1} parent=1 // pred_fallthru
      _
    // Predicated region
    $region102: #{tpu_custom_call.1} parent=1 // pred_check
      _
    $region103: #{tpu_custom_call.1} parent=1 // pred_check_branch
      %208 = sbr.rel (0) target = $region105
    $region104: #{tpu_custom_call.1} parent=1 // pred_region
      %210 = dma.done [#allocation12], 16
    $region105: #{tpu_custom_call.1} parent=1 // pred_fallthru
      _
    // Predicated region
    $region106: #{tpu_custom_call.1} parent=1 // pred_check
      _
    $region107: #{tpu_custom_call.1} parent=1 // pred_check_branch
      %212 = sbr.rel (0) target = $region109
    $region108: #{tpu_custom_call.1} parent=1 // pred_region
      %214 = dma.done [#allocation12], 16
    $region109: #{tpu_custom_call.1} parent=1 // pred_fallthru
      _
    // Predicated region
    $region110: #{tpu_custom_call.1} parent=1 // pred_check
      _
    $region111: #{tpu_custom_call.1} parent=1 // pred_check_branch
      %216 = sbr.rel (0) target = $region113
    $region112: #{tpu_custom_call.1} parent=1 // pred_region
      %218 = dma.done [#allocation15], 16
    $region113: #{tpu_custom_call.1} parent=1 // pred_fallthru
      _
    // Predicated region
    $region114: #{tpu_custom_call.1} parent=1 // pred_check
      _
    $region115: #{tpu_custom_call.1} parent=1 // pred_check_branch
      %220 = sbr.rel (0) target = $region117
    $region116: #{tpu_custom_call.1} parent=1 // pred_region
      %222 = dma.done [#allocation15], 16
    $region117: #{tpu_custom_call.1} parent=1 // pred_fallthru
      _
    // Predicated region
    $region118: #{tpu_custom_call.1} parent=1 // pred_check
      _
    $region119: #{tpu_custom_call.1} parent=1 // pred_check_branch
      %224 = sbr.rel (0) target = $region121
    $region120: #{tpu_custom_call.1} parent=1 // pred_region
      %226 = dma.done [#allocation18], 16
    $region121: #{tpu_custom_call.1} parent=1 // pred_fallthru
      _
    // Predicated region
    $region122: #{tpu_custom_call.1} parent=1 // pred_check
      _
    $region123: #{tpu_custom_call.1} parent=1 // pred_check_branch
      %228 = sbr.rel (0) target = $region125
    $region124: #{tpu_custom_call.1} parent=1 // pred_region
      %230 = dma.done [#allocation18], 2048
    $region125: #{tpu_custom_call.1} parent=1 // pred_fallthru
      _
    // Predicated region
    $region126: #{tpu_custom_call.1} parent=1 // pred_check
      _
    $region127: #{tpu_custom_call.1} parent=1 // pred_check_branch
      %232 = sbr.rel (0) target = $region129
    $region128: #{tpu_custom_call.1} parent=1 // pred_region
      %234 = dma.done [#allocation21], 2048
    $region129: #{tpu_custom_call.1} parent=1 // pred_fallthru
      _
    %v235 = vld [vmem:[%s0] sm:$0xff]
    %v236 = vld [vmem:[%s0 + $0x8] sm:$0xff]
    %v237 = vld [vmem:[#allocation5] sm:$0x7]
    %v238 = vld [vmem:[#allocation10] sm:$0x1]
    %v240 = vperm.slane %v238, 0
    %vm242 = vcmask 23552
    %v244 = vsel %vm242, %v235, 0
    %v247 = vsel %vm242, %v236, 0
    %vm249 = vcmask 1042432
    %v251 = vsel %vm249, %v237, 0
    %253 = vmatpush.msra.mxu0 0.0
    %254 = vmatpush.msra.mxu0 0.0
    %255 = vmatpush.msra.mxu0 0.0
    %256 = vmatpush.msra.mxu0 0.0
    %257 = vmatpush.msra.mxu0 0.0
    %258 = vmatpush.msra.mxu0 0.0
    %259 = vmatpush.msra.mxu0 0.0
    %260 = vmatpush.msra.mxu0 0.0
    %261 = vmatpush.msra.mxu0 0.0
    %262 = vmatpush.msra.mxu0 0.0
    %263 = vmatpush.msra.mxu0 0.0
    %264 = vmatpush.msra.mxu0 0.0
    %265 = vmatpush.msra.mxu0 0.0
    %266 = vmatpush.msra.mxu0 0.0
    %267 = vmatpush.msra.mxu0 0.0
    %268 = vmatpush.msra.mxu0 %v251
    %269 = vmatmul.f32.gmra.mxu0 %v244
    %v270 = vpop.f32.mrf.mxu0
    %v271 = vadd.f32 %v240, %v270
    %272 = vmatmul.f32.gmra.mxu0 %v247
    %v273 = vpop.f32.mrf.mxu0
    %v274 = vadd.f32 %v240, %v273
    %275 = vdwg.mxu0
    %v276 = vld [vmem:[#allocation7] sm:$0x7]
    %v277 = vld [vmem:[#allocation11] sm:$0x1]
    %v279 = vperm.slane %v277, 0
    %v282 = vsel %vm249, %v276, 0
    %284 = vmatpush.msra.mxu0 0.0
    %285 = vmatpush.msra.mxu0 0.0
    %286 = vmatpush.msra.mxu0 0.0
    %287 = vmatpush.msra.mxu0 0.0
    %288 = vmatpush.msra.mxu0 0.0
    %289 = vmatpush.msra.mxu0 0.0
    %290 = vmatpush.msra.mxu0 0.0
    %291 = vmatpush.msra.mxu0 0.0
    %292 = vmatpush.msra.mxu0 0.0
    %293 = vmatpush.msra.mxu0 0.0
    %294 = vmatpush.msra.mxu0 0.0
    %295 = vmatpush.msra.mxu0 0.0
    %296 = vmatpush.msra.mxu0 0.0
    %297 = vmatpush.msra.mxu0 0.0
    %298 = vmatpush.msra.mxu0 0.0
    %299 = vmatpush.msra.mxu0 %v282
    %300 = vmatmul.f32.gmra.mxu0 %v244
    %v301 = vpop.f32.mrf.mxu0
    %v302 = vadd.f32 %v279, %v301
    %303 = vmatmul.f32.gmra.mxu0 %v247
    %v304 = vpop.f32.mrf.mxu0
    %v305 = vadd.f32 %v279, %v304
    %306 = vdwg.mxu0
    %v307 = vld [vmem:[#allocation8] sm:$0x7]
    %v308 = vld [vmem:[#allocation13] sm:$0x1]
    %v310 = vperm.slane %v308, 0
    %v313 = vsel %vm249, %v307, 0
    %315 = vmatpush.msra.mxu0 0.0
    %316 = vmatpush.msra.mxu0 0.0
    %317 = vmatpush.msra.mxu0 0.0
    %318 = vmatpush.msra.mxu0 0.0
    %319 = vmatpush.msra.mxu0 0.0
    %320 = vmatpush.msra.mxu0 0.0
    %321 = vmatpush.msra.mxu0 0.0
    %322 = vmatpush.msra.mxu0 0.0
    %323 = vmatpush.msra.mxu0 0.0
    %324 = vmatpush.msra.mxu0 0.0
    %325 = vmatpush.msra.mxu0 0.0
    %326 = vmatpush.msra.mxu0 0.0
    %327 = vmatpush.msra.mxu0 0.0
    %328 = vmatpush.msra.mxu0 0.0
    %329 = vmatpush.msra.mxu0 0.0
    %330 = vmatpush.msra.mxu0 %v313
    %331 = vmatmul.f32.gmra.mxu0 %v244
    %v332 = vpop.f32.mrf.mxu0
    %v333 = vadd.f32 %v310, %v332
    %334 = vmatmul.f32.gmra.mxu0 %v247
    %v335 = vpop.f32.mrf.mxu0
    %v336 = vadd.f32 %v310, %v335
    %337 = vdwg.mxu0
    %v338 = vld [vmem:[%s8] sm:$0xff]
    %v339 = vld [vmem:[%s9] sm:$0xff]
    %v340 = vld [vmem:[%s10] sm:$0xff]
    %v341 = vld [vmem:[#allocation14] sm:$0x1]
    %v342 = vld [vmem:[#allocation16] sm:$0x1]
    %v343 = vld [vmem:[#allocation17] sm:$0x1]
    %v344 = vld [vmem:[#allocation2] sm:$0x3]
    %346 = vset.pattern.permute.xlu0 0
    %347 = vperm.xlu0 %346, %v344
    %v348 = vpop.permute.xlu0 %347
    %v350 = vperm.slane %v338, 0
    %v351 = vmul.f32 %v348, %v350
    %v353 = vperm.slane %v341, 0
    %v355 = vadd.f32 %v353, %v351
    %v356 = vperm.slane %v339, 0
    %v357 = vmul.f32 %v348, %v356
    %v359 = vperm.slane %v342, 0
    %v361 = vadd.f32 %v359, %v357
    %v362 = vperm.slane %v340, 0
    %v363 = vmul.f32 %v348, %v362
    %v365 = vperm.slane %v343, 0
    %v367 = vadd.f32 %v365, %v363
    %368 = vset.pattern.permute.xlu0 1
    %369 = vperm.xlu0 %368, %v344
    %v370 = vpop.permute.xlu0 %369
    %v372 = vperm.slane %v338, 1
    %v373 = vmul.f32 %v370, %v372
    %v374 = vadd.f32 %v355, %v373
    %v375 = vperm.slane %v339, 1
    %v376 = vmul.f32 %v370, %v375
    %v377 = vadd.f32 %v361, %v376
    %v378 = vperm.slane %v340, 1
    %v379 = vmul.f32 %v370, %v378
    %v380 = vadd.f32 %v367, %v379
    %381 = vset.pattern.permute.xlu0 2
    %382 = vperm.xlu0 %381, %v344
    %v383 = vpop.permute.xlu0 %382
    %v385 = vperm.slane %v338, 2
    %v386 = vmul.f32 %v383, %v385
    %v387 = vadd.f32 %v374, %v386
    %v388 = vperm.slane %v339, 2
    %v389 = vmul.f32 %v383, %v388
    %v390 = vadd.f32 %v377, %v389
    %v391 = vperm.slane %v340, 2
    %v392 = vmul.f32 %v383, %v391
    %v393 = vadd.f32 %v380, %v392
    %394 = vset.pattern.permute.xlu0 3
    %395 = vperm.xlu0 %394, %v344
    %v396 = vpop.permute.xlu0 %395
    %v398 = vperm.slane %v338, 3
    %v399 = vmul.f32 %v396, %v398
    %v400 = vadd.f32 %v387, %v399
    %v401 = vperm.slane %v339, 3
    %v402 = vmul.f32 %v396, %v401
    %v403 = vadd.f32 %v390, %v402
    %v404 = vperm.slane %v340, 3
    %v405 = vmul.f32 %v396, %v404
    %v406 = vadd.f32 %v393, %v405
    %407 = vset.pattern.permute.xlu0 4
    %408 = vperm.xlu0 %407, %v344
    %v409 = vpop.permute.xlu0 %408
    %v411 = vperm.slane %v338, 4
    %v412 = vmul.f32 %v409, %v411
    %v413 = vadd.f32 %v400, %v412
    %v414 = vperm.slane %v339, 4
    %v415 = vmul.f32 %v409, %v414
    %v416 = vadd.f32 %v403, %v415
    %v417 = vperm.slane %v340, 4
    %v418 = vmul.f32 %v409, %v417
    %v419 = vadd.f32 %v406, %v418
    %420 = vset.pattern.permute.xlu0 5
    %421 = vperm.xlu0 %420, %v344
    %v422 = vpop.permute.xlu0 %421
    %v424 = vperm.slane %v338, 5
    %v425 = vmul.f32 %v422, %v424
    %v426 = vadd.f32 %v413, %v425
    %v427 = vperm.slane %v339, 5
    %v428 = vmul.f32 %v422, %v427
    %v429 = vadd.f32 %v416, %v428
    %v430 = vperm.slane %v340, 5
    %v431 = vmul.f32 %v422, %v430
    %v432 = vadd.f32 %v419, %v431
    %433 = vset.pattern.permute.xlu0 6
    %434 = vperm.xlu0 %433, %v344
    %v435 = vpop.permute.xlu0 %434
    %v437 = vperm.slane %v338, 6
    %v438 = vmul.f32 %v435, %v437
    %v439 = vadd.f32 %v426, %v438
    %v440 = vperm.slane %v339, 6
    %v441 = vmul.f32 %v435, %v440
    %v442 = vadd.f32 %v429, %v441
    %v443 = vperm.slane %v340, 6
    %v444 = vmul.f32 %v435, %v443
    %v445 = vadd.f32 %v432, %v444
    %446 = vset.pattern.permute.xlu0 7
    %447 = vperm.xlu0 %446, %v344
    %v448 = vpop.permute.xlu0 %447
    %v450 = vperm.slane %v338, 7
    %v451 = vmul.f32 %v448, %v450
    %v452 = vadd.f32 %v439, %v451
    %v453 = vperm.slane %v339, 7
    %v454 = vmul.f32 %v448, %v453
    %v455 = vadd.f32 %v442, %v454
    %v456 = vperm.slane %v340, 7
    %v457 = vmul.f32 %v448, %v456
    %v458 = vadd.f32 %v445, %v457
    %v459 = vadd.f32 %v271, %v452
    %v460 = vxor.u32 %v459, 2147483648
    %v461 = vmul.f32 %v460, 1.442695
    %v462 = vpow.pop %v461
    %v463 = vadd.f32 %v462, 1.0
    %v464 = vrcp.pop %v463
    %v465 = vmul.f32 %v463, %v464
    %v466 = vsub.f32 1.0, %v465
    %v467 = vmul.f32 %v464, %v466
    %v468 = vadd.f32 %v464, %v467
    %vm469 = vweird.f32 %v463
    %vm470 = vweird.f32 %v464
    %vm471 = vmor %vm469, %vm470
    %v472 = vsel %vm471, %v464, %v468
    %v473 = vand.u32 2147483647, %v463
    %vm474 = vcmp.eq.f32.partialorder %v473, 8.507059e+37
    %v475 = vand.u32 %v463, 2147483648
    %v476 = vor.u32 1.1754944e-38, %v475
    %v477 = vsel %vm474, %v476, %v472
    %v478 = vmul.f32 1.0, %v477
    %v479 = vadd.f32 %v302, %v455
    %v480 = vxor.u32 %v479, 2147483648
    %v481 = vmul.f32 %v480, 1.442695
    %v482 = vpow.pop %v481
    %v483 = vadd.f32 %v482, 1.0
    %v484 = vrcp.pop %v483
    %v485 = vmul.f32 %v483, %v484
    %v486 = vsub.f32 1.0, %v485
    %v487 = vmul.f32 %v484, %v486
    %v488 = vadd.f32 %v484, %v487
    %vm489 = vweird.f32 %v483
    %vm490 = vweird.f32 %v484
    %vm491 = vmor %vm489, %vm490
    %v492 = vsel %vm491, %v484, %v488
    %v493 = vand.u32 2147483647, %v483
    %vm494 = vcmp.eq.f32.partialorder %v493, 8.507059e+37
    %v495 = vand.u32 %v483, 2147483648
    %v496 = vor.u32 1.1754944e-38, %v495
    %v497 = vsel %vm494, %v496, %v492
    %v498 = vmul.f32 1.0, %v497
    %v499 = vmul.f32 %v478, %v458
    %v500 = vadd.f32 %v333, %v499
    %v501 = vtanh.pop %v500
    %v502 = vsub.f32 1.0, %v498
    %v503 = vmul.f32 %v502, %v501
    %v504 = vmul.f32 %v498, %v344
    %v505 = vadd.f32 %v503, %v504
    %vm506 = vcmask 58368
    %507 = vst.msk [vmem:[%s21] sm:$0x3] %vm506, %v505
    %509 = vset.pattern.permute.xlu0 0
    %510 = vperm.xlu0 %509, %v505
    %v511 = vpop.permute.xlu0 %510
    %v513 = vmul.f32 %v511, %v350
    %v514 = vadd.f32 %v353, %v513
    %v515 = vmul.f32 %v511, %v356
    %v516 = vadd.f32 %v359, %v515
    %v517 = vmul.f32 %v511, %v362
    %v518 = vadd.f32 %v365, %v517
    %519 = vset.pattern.permute.xlu0 1
    %520 = vperm.xlu0 %519, %v505
    %v521 = vpop.permute.xlu0 %520
    %v523 = vmul.f32 %v521, %v372
    %v524 = vadd.f32 %v514, %v523
    %v525 = vmul.f32 %v521, %v375
    %v526 = vadd.f32 %v516, %v525
    %v527 = vmul.f32 %v521, %v378
    %v528 = vadd.f32 %v518, %v527
    %529 = vset.pattern.permute.xlu0 2
    %530 = vperm.xlu0 %529, %v505
    %v531 = vpop.permute.xlu0 %530
    %v533 = vmul.f32 %v531, %v385
    %v534 = vadd.f32 %v524, %v533
    %v535 = vmul.f32 %v531, %v388
    %v536 = vadd.f32 %v526, %v535
    %v537 = vmul.f32 %v531, %v391
    %v538 = vadd.f32 %v528, %v537
    %539 = vset.pattern.permute.xlu0 3
    %540 = vperm.xlu0 %539, %v505
    %v541 = vpop.permute.xlu0 %540
    %v543 = vmul.f32 %v541, %v398
    %v544 = vadd.f32 %v534, %v543
    %v545 = vmul.f32 %v541, %v401
    %v546 = vadd.f32 %v536, %v545
    %v547 = vmul.f32 %v541, %v404
    %v548 = vadd.f32 %v538, %v547
    %549 = vset.pattern.permute.xlu0 4
    %550 = vperm.xlu0 %549, %v505
    %v551 = vpop.permute.xlu0 %550
    %v553 = vmul.f32 %v551, %v411
    %v554 = vadd.f32 %v544, %v553
    %v555 = vmul.f32 %v551, %v414
    %v556 = vadd.f32 %v546, %v555
    %v557 = vmul.f32 %v551, %v417
    %v558 = vadd.f32 %v548, %v557
    %559 = vset.pattern.permute.xlu0 5
    %560 = vperm.xlu0 %559, %v505
    %v561 = vpop.permute.xlu0 %560
    %v563 = vmul.f32 %v561, %v424
    %v564 = vadd.f32 %v554, %v563
    %v565 = vmul.f32 %v561, %v427
    %v566 = vadd.f32 %v556, %v565
    %v567 = vmul.f32 %v561, %v430
    %v568 = vadd.f32 %v558, %v567
    %569 = vset.pattern.permute.xlu0 6
    %570 = vperm.xlu0 %569, %v505
    %v571 = vpop.permute.xlu0 %570
    %v573 = vmul.f32 %v571, %v437
    %v574 = vadd.f32 %v564, %v573
    %v575 = vmul.f32 %v571, %v440
    %v576 = vadd.f32 %v566, %v575
    %v577 = vmul.f32 %v571, %v443
    %v578 = vadd.f32 %v568, %v577
    %579 = vset.pattern.permute.xlu0 7
    %580 = vperm.xlu0 %579, %v505
    %v581 = vpop.permute.xlu0 %580
    %v583 = vmul.f32 %v581, %v450
    %v584 = vadd.f32 %v574, %v583
    %v585 = vmul.f32 %v581, %v453
    %v586 = vadd.f32 %v576, %v585
    %v587 = vmul.f32 %v581, %v456
    %v588 = vadd.f32 %v578, %v587
    %v590 = vrot.slane %v584, 6
    %v592 = vadd.f32 %v271, %v590
    %v593 = vxor.u32 %v592, 2147483648
    %v594 = vmul.f32 %v593, 1.442695
    %v595 = vpow.pop %v594
    %v596 = vadd.f32 %v595, 1.0
    %v597 = vrcp.pop %v596
    %v598 = vmul.f32 %v596, %v597
    %v599 = vsub.f32 1.0, %v598
    %v600 = vmul.f32 %v597, %v599
    %v601 = vadd.f32 %v597, %v600
    %vm602 = vweird.f32 %v596
    %vm603 = vweird.f32 %v597
    %vm604 = vmor %vm602, %vm603
    %v605 = vsel %vm604, %v597, %v601
    %v606 = vand.u32 2147483647, %v596
    %vm607 = vcmp.eq.f32.partialorder %v606, 8.507059e+37
    %v608 = vand.u32 %v596, 2147483648
    %v609 = vor.u32 1.1754944e-38, %v608
    %v610 = vsel %vm607, %v609, %v605
    %v611 = vmul.f32 1.0, %v610
    %v613 = vrot.slane %v586, 6
    %v615 = vadd.f32 %v302, %v613
    %v616 = vxor.u32 %v615, 2147483648
    %v617 = vmul.f32 %v616, 1.442695
    %v618 = vpow.pop %v617
    %v619 = vadd.f32 %v618, 1.0
    %v620 = vrcp.pop %v619
    %v621 = vmul.f32 %v619, %v620
    %v622 = vsub.f32 1.0, %v621
    %v623 = vmul.f32 %v620, %v622
    %v624 = vadd.f32 %v620, %v623
    %vm625 = vweird.f32 %v619
    %vm626 = vweird.f32 %v620
    %vm627 = vmor %vm625, %vm626
    %v628 = vsel %vm627, %v620, %v624
    %v629 = vand.u32 2147483647, %v619
    %vm630 = vcmp.eq.f32.partialorder %v629, 8.507059e+37
    %v631 = vand.u32 %v619, 2147483648
    %v632 = vor.u32 1.1754944e-38, %v631
    %v633 = vsel %vm630, %v632, %v628
    %v634 = vmul.f32 1.0, %v633
    %v636 = vrot.slane %v588, 6
    %v638 = vmul.f32 %v611, %v636
    %v639 = vadd.f32 %v333, %v638
    %v640 = vtanh.pop %v639
    %v641 = vsub.f32 1.0, %v634
    %v642 = vmul.f32 %v641, %v640
    %v643 = vrot.slane %v505, 6
    %v645 = vmul.f32 %v634, %v643
    %v646 = vadd.f32 %v642, %v645
    %vm647 = vcmask 60418
    %648 = vst.msk [vmem:[%s21] sm:$0xc] %vm647, %v646
    %650 = vset.pattern.permute.xlu0 0
    %651 = vperm.xlu0 %650, %v646
    %v652 = vpop.permute.xlu0 %651
    %v654 = vmul.f32 %v652, %v350
    %v655 = vadd.f32 %v353, %v654
    %v656 = vmul.f32 %v652, %v356
    %v657 = vadd.f32 %v359, %v656
    %v658 = vmul.f32 %v652, %v362
    %v659 = vadd.f32 %v365, %v658
    %660 = vset.pattern.permute.xlu0 1
    %661 = vperm.xlu0 %660, %v646
    %v662 = vpop.permute.xlu0 %661
    %v664 = vmul.f32 %v662, %v372
    %v665 = vadd.f32 %v655, %v664
    %v666 = vmul.f32 %v662, %v375
    %v667 = vadd.f32 %v657, %v666
    %v668 = vmul.f32 %v662, %v378
    %v669 = vadd.f32 %v659, %v668
    %670 = vset.pattern.permute.xlu0 2
    %671 = vperm.xlu0 %670, %v646
    %v672 = vpop.permute.xlu0 %671
    %v674 = vmul.f32 %v672, %v385
    %v675 = vadd.f32 %v665, %v674
    %v676 = vmul.f32 %v672, %v388
    %v677 = vadd.f32 %v667, %v676
    %v678 = vmul.f32 %v672, %v391
    %v679 = vadd.f32 %v669, %v678
    %680 = vset.pattern.permute.xlu0 3
    %681 = vperm.xlu0 %680, %v646
    %v682 = vpop.permute.xlu0 %681
    %v684 = vmul.f32 %v682, %v398
    %v685 = vadd.f32 %v675, %v684
    %v686 = vmul.f32 %v682, %v401
    %v687 = vadd.f32 %v677, %v686
    %v688 = vmul.f32 %v682, %v404
    %v689 = vadd.f32 %v679, %v688
    %690 = vset.pattern.permute.xlu0 4
    %691 = vperm.xlu0 %690, %v646
    %v692 = vpop.permute.xlu0 %691
    %v694 = vmul.f32 %v692, %v411
    %v695 = vadd.f32 %v685, %v694
    %v696 = vmul.f32 %v692, %v414
    %v697 = vadd.f32 %v687, %v696
    %v698 = vmul.f32 %v692, %v417
    %v699 = vadd.f32 %v689, %v698
    %700 = vset.pattern.permute.xlu0 5
    %701 = vperm.xlu0 %700, %v646
    %v702 = vpop.permute.xlu0 %701
    %v704 = vmul.f32 %v702, %v424
    %v705 = vadd.f32 %v695, %v704
    %v706 = vmul.f32 %v702, %v427
    %v707 = vadd.f32 %v697, %v706
    %v708 = vmul.f32 %v702, %v430
    %v709 = vadd.f32 %v699, %v708
    %710 = vset.pattern.permute.xlu0 6
    %711 = vperm.xlu0 %710, %v646
    %v712 = vpop.permute.xlu0 %711
    %v714 = vmul.f32 %v712, %v437
    %v715 = vadd.f32 %v705, %v714
    %v716 = vmul.f32 %v712, %v440
    %v717 = vadd.f32 %v707, %v716
    %v718 = vmul.f32 %v712, %v443
    %v719 = vadd.f32 %v709, %v718
    %720 = vset.pattern.permute.xlu0 7
    %721 = vperm.xlu0 %720, %v646
    %v722 = vpop.permute.xlu0 %721
    %v724 = vmul.f32 %v722, %v450
    %v725 = vadd.f32 %v715, %v724
    %v726 = vmul.f32 %v722, %v453
    %v727 = vadd.f32 %v717, %v726
    %v728 = vmul.f32 %v722, %v456
    %v729 = vadd.f32 %v719, %v728
    %v731 = vrot.slane %v725, 6
    %v733 = vadd.f32 %v271, %v731
    %v734 = vxor.u32 %v733, 2147483648
    %v735 = vmul.f32 %v734, 1.442695
    %v736 = vpow.pop %v735
    %v737 = vadd.f32 %v736, 1.0
    %v738 = vrcp.pop %v737
    %v739 = vmul.f32 %v737, %v738
    %v740 = vsub.f32 1.0, %v739
    %v741 = vmul.f32 %v738, %v740
    %v742 = vadd.f32 %v738, %v741
    %vm743 = vweird.f32 %v737
    %vm744 = vweird.f32 %v738
    %vm745 = vmor %vm743, %vm744
    %v746 = vsel %vm745, %v738, %v742
    %v747 = vand.u32 2147483647, %v737
    %vm748 = vcmp.eq.f32.partialorder %v747, 8.507059e+37
    %v749 = vand.u32 %v737, 2147483648
    %v750 = vor.u32 1.1754944e-38, %v749
    %v751 = vsel %vm748, %v750, %v746
    %v752 = vmul.f32 1.0, %v751
    %v754 = vrot.slane %v727, 6
    %v756 = vadd.f32 %v302, %v754
    %v757 = vxor.u32 %v756, 2147483648
    %v758 = vmul.f32 %v757, 1.442695
    %v759 = vpow.pop %v758
    %v760 = vadd.f32 %v759, 1.0
    %v761 = vrcp.pop %v760
    %v762 = vmul.f32 %v760, %v761
    %v763 = vsub.f32 1.0, %v762
    %v764 = vmul.f32 %v761, %v763
    %v765 = vadd.f32 %v761, %v764
    %vm766 = vweird.f32 %v760
    %vm767 = vweird.f32 %v761
    %vm768 = vmor %vm766, %vm767
    %v769 = vsel %vm768, %v761, %v765
    %v770 = vand.u32 2147483647, %v760
    %vm771 = vcmp.eq.f32.partialorder %v770, 8.507059e+37
    %v772 = vand.u32 %v760, 2147483648
    %v773 = vor.u32 1.1754944e-38, %v772
    %v774 = vsel %vm771, %v773, %v769
    %v775 = vmul.f32 1.0, %v774
    %v777 = vrot.slane %v729, 6
    %v779 = vmul.f32 %v752, %v777
    %v780 = vadd.f32 %v333, %v779
    %v781 = vtanh.pop %v780
    %v782 = vsub.f32 1.0, %v775
    %v783 = vmul.f32 %v782, %v781
    %v784 = vrot.slane %v646, 6
    %v786 = vmul.f32 %v775, %v784
    %v787 = vadd.f32 %v783, %v786
    %vm788 = vcmask 62468
    %789 = vst.msk [vmem:[%s21] sm:$0x30] %vm788, %v787
    %791 = vset.pattern.permute.xlu0 0
    %792 = vperm.xlu0 %791, %v787
    %v793 = vpop.permute.xlu0 %792
    %v795 = vmul.f32 %v793, %v350
    %v796 = vadd.f32 %v353, %v795
    %v797 = vmul.f32 %v793, %v356
    %v798 = vadd.f32 %v359, %v797
    %v799 = vmul.f32 %v793, %v362
    %v800 = vadd.f32 %v365, %v799
    %801 = vset.pattern.permute.xlu0 1
    %802 = vperm.xlu0 %801, %v787
    %v803 = vpop.permute.xlu0 %802
    %v805 = vmul.f32 %v803, %v372
    %v806 = vadd.f32 %v796, %v805
    %v807 = vmul.f32 %v803, %v375
    %v808 = vadd.f32 %v798, %v807
    %v809 = vmul.f32 %v803, %v378
    %v810 = vadd.f32 %v800, %v809
    %811 = vset.pattern.permute.xlu0 2
    %812 = vperm.xlu0 %811, %v787
    %v813 = vpop.permute.xlu0 %812
    %v815 = vmul.f32 %v813, %v385
    %v816 = vadd.f32 %v806, %v815
    %v817 = vmul.f32 %v813, %v388
    %v818 = vadd.f32 %v808, %v817
    %v819 = vmul.f32 %v813, %v391
    %v820 = vadd.f32 %v810, %v819
    %821 = vset.pattern.permute.xlu0 3
    %822 = vperm.xlu0 %821, %v787
    %v823 = vpop.permute.xlu0 %822
    %v825 = vmul.f32 %v823, %v398
    %v826 = vadd.f32 %v816, %v825
    %v827 = vmul.f32 %v823, %v401
    %v828 = vadd.f32 %v818, %v827
    %v829 = vmul.f32 %v823, %v404
    %v830 = vadd.f32 %v820, %v829
    %831 = vset.pattern.permute.xlu0 4
    %832 = vperm.xlu0 %831, %v787
    %v833 = vpop.permute.xlu0 %832
    %v835 = vmul.f32 %v833, %v411
    %v836 = vadd.f32 %v826, %v835
    %v837 = vmul.f32 %v833, %v414
    %v838 = vadd.f32 %v828, %v837
    %v839 = vmul.f32 %v833, %v417
    %v840 = vadd.f32 %v830, %v839
    %841 = vset.pattern.permute.xlu0 5
    %842 = vperm.xlu0 %841, %v787
    %v843 = vpop.permute.xlu0 %842
    %v845 = vmul.f32 %v843, %v424
    %v846 = vadd.f32 %v836, %v845
    %v847 = vmul.f32 %v843, %v427
    %v848 = vadd.f32 %v838, %v847
    %v849 = vmul.f32 %v843, %v430
    %v850 = vadd.f32 %v840, %v849
    %851 = vset.pattern.permute.xlu0 6
    %852 = vperm.xlu0 %851, %v787
    %v853 = vpop.permute.xlu0 %852
    %v855 = vmul.f32 %v853, %v437
    %v856 = vadd.f32 %v846, %v855
    %v857 = vmul.f32 %v853, %v440
    %v858 = vadd.f32 %v848, %v857
    %v859 = vmul.f32 %v853, %v443
    %v860 = vadd.f32 %v850, %v859
    %861 = vset.pattern.permute.xlu0 7
    %862 = vperm.xlu0 %861, %v787
    %v863 = vpop.permute.xlu0 %862
    %v865 = vmul.f32 %v863, %v450
    %v866 = vadd.f32 %v856, %v865
    %v867 = vmul.f32 %v863, %v453
    %v868 = vadd.f32 %v858, %v867
    %v869 = vmul.f32 %v863, %v456
    %v870 = vadd.f32 %v860, %v869
    %v872 = vrot.slane %v866, 6
    %v874 = vadd.f32 %v271, %v872
    %v875 = vxor.u32 %v874, 2147483648
    %v876 = vmul.f32 %v875, 1.442695
    %v877 = vpow.pop %v876
    %v878 = vadd.f32 %v877, 1.0
    %v879 = vrcp.pop %v878
    %v880 = vmul.f32 %v878, %v879
    %v881 = vsub.f32 1.0, %v880
    %v882 = vmul.f32 %v879, %v881
    %v883 = vadd.f32 %v879, %v882
    %vm884 = vweird.f32 %v878
    %vm885 = vweird.f32 %v879
    %vm886 = vmor %vm884, %vm885
    %v887 = vsel %vm886, %v879, %v883
    %v888 = vand.u32 2147483647, %v878
    %vm889 = vcmp.eq.f32.partialorder %v888, 8.507059e+37
    %v890 = vand.u32 %v878, 2147483648
    %v891 = vor.u32 1.1754944e-38, %v890
    %v892 = vsel %vm889, %v891, %v887
    %v893 = vmul.f32 1.0, %v892
    %v895 = vrot.slane %v868, 6
    %v897 = vadd.f32 %v302, %v895
    %v898 = vxor.u32 %v897, 2147483648
    %v899 = vmul.f32 %v898, 1.442695
    %v900 = vpow.pop %v899
    %v901 = vadd.f32 %v900, 1.0
    %v902 = vrcp.pop %v901
    %v903 = vmul.f32 %v901, %v902
    %v904 = vsub.f32 1.0, %v903
    %v905 = vmul.f32 %v902, %v904
    %v906 = vadd.f32 %v902, %v905
    %vm907 = vweird.f32 %v901
    %vm908 = vweird.f32 %v902
    %vm909 = vmor %vm907, %vm908
    %v910 = vsel %vm909, %v902, %v906
    %v911 = vand.u32 2147483647, %v901
    %vm912 = vcmp.eq.f32.partialorder %v911, 8.507059e+37
    %v913 = vand.u32 %v901, 2147483648
    %v914 = vor.u32 1.1754944e-38, %v913
    %v915 = vsel %vm912, %v914, %v910
    %v916 = vmul.f32 1.0, %v915
    %v918 = vrot.slane %v870, 6
    %v920 = vmul.f32 %v893, %v918
    %v921 = vadd.f32 %v333, %v920
    %v922 = vtanh.pop %v921
    %v923 = vsub.f32 1.0, %v916
    %v924 = vmul.f32 %v923, %v922
    %v925 = vrot.slane %v787, 6
    %v927 = vmul.f32 %v916, %v925
    %v928 = vadd.f32 %v924, %v927
    %vm929 = vcmask 64518
    %930 = vst.msk [vmem:[%s21] sm:$0xc0] %vm929, %v928
    %932 = vset.pattern.permute.xlu0 0
    %933 = vperm.xlu0 %932, %v928
    %v934 = vpop.permute.xlu0 %933
    %v936 = vmul.f32 %v934, %v350
    %v937 = vadd.f32 %v353, %v936
    %v938 = vmul.f32 %v934, %v356
    %v939 = vadd.f32 %v359, %v938
    %v940 = vmul.f32 %v934, %v362
    %v941 = vadd.f32 %v365, %v940
    %942 = vset.pattern.permute.xlu0 1
    %943 = vperm.xlu0 %942, %v928
    %v944 = vpop.permute.xlu0 %943
    %v946 = vmul.f32 %v944, %v372
    %v947 = vadd.f32 %v937, %v946
    %v948 = vmul.f32 %v944, %v375
    %v949 = vadd.f32 %v939, %v948
    %v950 = vmul.f32 %v944, %v378
    %v951 = vadd.f32 %v941, %v950
    %952 = vset.pattern.permute.xlu0 2
    %953 = vperm.xlu0 %952, %v928
    %v954 = vpop.permute.xlu0 %953
    %v956 = vmul.f32 %v954, %v385
    %v957 = vadd.f32 %v947, %v956
    %v958 = vmul.f32 %v954, %v388
    %v959 = vadd.f32 %v949, %v958
    %v960 = vmul.f32 %v954, %v391
    %v961 = vadd.f32 %v951, %v960
    %962 = vset.pattern.permute.xlu0 3
    %963 = vperm.xlu0 %962, %v928
    %v964 = vpop.permute.xlu0 %963
    %v966 = vmul.f32 %v964, %v398
    %v967 = vadd.f32 %v957, %v966
    %v968 = vmul.f32 %v964, %v401
    %v969 = vadd.f32 %v959, %v968
    %v970 = vmul.f32 %v964, %v404
    %v971 = vadd.f32 %v961, %v970
    %972 = vset.pattern.permute.xlu0 4
    %973 = vperm.xlu0 %972, %v928
    %v974 = vpop.permute.xlu0 %973
    %v976 = vmul.f32 %v974, %v411
    %v977 = vadd.f32 %v967, %v976
    %v978 = vmul.f32 %v974, %v414
    %v979 = vadd.f32 %v969, %v978
    %v980 = vmul.f32 %v974, %v417
    %v981 = vadd.f32 %v971, %v980
    %982 = vset.pattern.permute.xlu0 5
    %983 = vperm.xlu0 %982, %v928
    %v984 = vpop.permute.xlu0 %983
    %v986 = vmul.f32 %v984, %v424
    %v987 = vadd.f32 %v977, %v986
    %v988 = vmul.f32 %v984, %v427
    %v989 = vadd.f32 %v979, %v988
    %v990 = vmul.f32 %v984, %v430
    %v991 = vadd.f32 %v981, %v990
    %992 = vset.pattern.permute.xlu0 6
    %993 = vperm.xlu0 %992, %v928
    %v994 = vpop.permute.xlu0 %993
    %v996 = vmul.f32 %v994, %v437
    %v997 = vadd.f32 %v987, %v996
    %v998 = vmul.f32 %v994, %v440
    %v999 = vadd.f32 %v989, %v998
    %v1000 = vmul.f32 %v994, %v443
    %v1001 = vadd.f32 %v991, %v1000
    %1002 = vset.pattern.permute.xlu0 7
    %1003 = vperm.xlu0 %1002, %v928
    %v1004 = vpop.permute.xlu0 %1003
    %v1006 = vmul.f32 %v1004, %v450
    %v1007 = vadd.f32 %v997, %v1006
    %v1008 = vmul.f32 %v1004, %v453
    %v1009 = vadd.f32 %v999, %v1008
    %v1010 = vmul.f32 %v1004, %v456
    %v1011 = vadd.f32 %v1001, %v1010
    %v1013 = vrot.slane %v1007, 6
    %v1015 = vadd.f32 %v274, %v1013
    %v1016 = vxor.u32 %v1015, 2147483648
    %v1017 = vmul.f32 %v1016, 1.442695
    %v1018 = vpow.pop %v1017
    %v1019 = vadd.f32 %v1018, 1.0
    %v1020 = vrcp.pop %v1019
    %v1021 = vmul.f32 %v1019, %v1020
    %v1022 = vsub.f32 1.0, %v1021
    %v1023 = vmul.f32 %v1020, %v1022
    %v1024 = vadd.f32 %v1020, %v1023
    %vm1025 = vweird.f32 %v1019
    %vm1026 = vweird.f32 %v1020
    %vm1027 = vmor %vm1025, %vm1026
    %v1028 = vsel %vm1027, %v1020, %v1024
    %v1029 = vand.u32 2147483647, %v1019
    %vm1030 = vcmp.eq.f32.partialorder %v1029, 8.507059e+37
    %v1031 = vand.u32 %v1019, 2147483648
    %v1032 = vor.u32 1.1754944e-38, %v1031
    %v1033 = vsel %vm1030, %v1032, %v1028
    %v1034 = vmul.f32 1.0, %v1033
    %v1036 = vrot.slane %v1009, 6
    %v1038 = vadd.f32 %v305, %v1036
    %v1039 = vxor.u32 %v1038, 2147483648
    %v1040 = vmul.f32 %v1039, 1.442695
    %v1041 = vpow.pop %v1040
    %v1042 = vadd.f32 %v1041, 1.0
    %v1043 = vrcp.pop %v1042
    %v1044 = vmul.f32 %v1042, %v1043
    %v1045 = vsub.f32 1.0, %v1044
    %v1046 = vmul.f32 %v1043, %v1045
    %v1047 = vadd.f32 %v1043, %v1046
    %vm1048 = vweird.f32 %v1042
    %vm1049 = vweird.f32 %v1043
    %vm1050 = vmor %vm1048, %vm1049
    %v1051 = vsel %vm1050, %v1043, %v1047
    %v1052 = vand.u32 2147483647, %v1042
    %vm1053 = vcmp.eq.f32.partialorder %v1052, 8.507059e+37
    %v1054 = vand.u32 %v1042, 2147483648
    %v1055 = vor.u32 1.1754944e-38, %v1054
    %v1056 = vsel %vm1053, %v1055, %v1051
    %v1057 = vmul.f32 1.0, %v1056
    %v1059 = vrot.slane %v1011, 6
    %v1061 = vmul.f32 %v1034, %v1059
    %v1062 = vadd.f32 %v336, %v1061
    %v1063 = vtanh.pop %v1062
    %v1064 = vsub.f32 1.0, %v1057
    %v1065 = vmul.f32 %v1064, %v1063
    %v1066 = vrot.slane %v928, 6
    %v1068 = vmul.f32 %v1057, %v1066
    %v1069 = vadd.f32 %v1065, %v1068
    %1070 = vst.msk [vmem:[%s21 + $0x8] sm:$0x3] %vm506, %v1069
    %1072 = vset.pattern.permute.xlu0 0
    %1073 = vperm.xlu0 %1072, %v1069
    %v1074 = vpop.permute.xlu0 %1073
    %v1076 = vmul.f32 %v1074, %v350
    %v1077 = vadd.f32 %v353, %v1076
    %v1078 = vmul.f32 %v1074, %v356
    %v1079 = vadd.f32 %v359, %v1078
    %v1080 = vmul.f32 %v1074, %v362
    %v1081 = vadd.f32 %v365, %v1080
    %1082 = vset.pattern.permute.xlu0 1
    %1083 = vperm.xlu0 %1082, %v1069
    %v1084 = vpop.permute.xlu0 %1083
    %v1086 = vmul.f32 %v1084, %v372
    %v1087 = vadd.f32 %v1077, %v1086
    %v1088 = vmul.f32 %v1084, %v375
    %v1089 = vadd.f32 %v1079, %v1088
    %v1090 = vmul.f32 %v1084, %v378
    %v1091 = vadd.f32 %v1081, %v1090
    %1092 = vset.pattern.permute.xlu0 2
    %1093 = vperm.xlu0 %1092, %v1069
    %v1094 = vpop.permute.xlu0 %1093
    %v1096 = vmul.f32 %v1094, %v385
    %v1097 = vadd.f32 %v1087, %v1096
    %v1098 = vmul.f32 %v1094, %v388
    %v1099 = vadd.f32 %v1089, %v1098
    %v1100 = vmul.f32 %v1094, %v391
    %v1101 = vadd.f32 %v1091, %v1100
    %1102 = vset.pattern.permute.xlu0 3
    %1103 = vperm.xlu0 %1102, %v1069
    %v1104 = vpop.permute.xlu0 %1103
    %v1106 = vmul.f32 %v1104, %v398
    %v1107 = vadd.f32 %v1097, %v1106
    %v1108 = vmul.f32 %v1104, %v401
    %v1109 = vadd.f32 %v1099, %v1108
    %v1110 = vmul.f32 %v1104, %v404
    %v1111 = vadd.f32 %v1101, %v1110
    %1112 = vset.pattern.permute.xlu0 4
    %1113 = vperm.xlu0 %1112, %v1069
    %v1114 = vpop.permute.xlu0 %1113
    %v1116 = vmul.f32 %v1114, %v411
    %v1117 = vadd.f32 %v1107, %v1116
    %v1118 = vmul.f32 %v1114, %v414
    %v1119 = vadd.f32 %v1109, %v1118
    %v1120 = vmul.f32 %v1114, %v417
    %v1121 = vadd.f32 %v1111, %v1120
    %1122 = vset.pattern.permute.xlu0 5
    %1123 = vperm.xlu0 %1122, %v1069
    %v1124 = vpop.permute.xlu0 %1123
    %v1126 = vmul.f32 %v1124, %v424
    %v1127 = vadd.f32 %v1117, %v1126
    %v1128 = vmul.f32 %v1124, %v427
    %v1129 = vadd.f32 %v1119, %v1128
    %v1130 = vmul.f32 %v1124, %v430
    %v1131 = vadd.f32 %v1121, %v1130
    %1132 = vset.pattern.permute.xlu0 6
    %1133 = vperm.xlu0 %1132, %v1069
    %v1134 = vpop.permute.xlu0 %1133
    %v1136 = vmul.f32 %v1134, %v437
    %v1137 = vadd.f32 %v1127, %v1136
    %v1138 = vmul.f32 %v1134, %v440
    %v1139 = vadd.f32 %v1129, %v1138
    %v1140 = vmul.f32 %v1134, %v443
    %v1141 = vadd.f32 %v1131, %v1140
    %1142 = vset.pattern.permute.xlu0 7
    %1143 = vperm.xlu0 %1142, %v1069
    %v1144 = vpop.permute.xlu0 %1143
    %v1146 = vmul.f32 %v1144, %v450
    %v1147 = vadd.f32 %v1137, %v1146
    %v1148 = vmul.f32 %v1144, %v453
    %v1149 = vadd.f32 %v1139, %v1148
    %v1150 = vmul.f32 %v1144, %v456
    %v1151 = vadd.f32 %v1141, %v1150
    %v1153 = vrot.slane %v1147, 6
    %v1155 = vadd.f32 %v274, %v1153
    %v1156 = vxor.u32 %v1155, 2147483648
    %v1157 = vmul.f32 %v1156, 1.442695
    %v1158 = vpow.pop %v1157
    %v1159 = vadd.f32 %v1158, 1.0
    %v1160 = vrcp.pop %v1159
    %v1161 = vmul.f32 %v1159, %v1160
    %v1162 = vsub.f32 1.0, %v1161
    %v1163 = vmul.f32 %v1160, %v1162
    %v1164 = vadd.f32 %v1160, %v1163
    %vm1165 = vweird.f32 %v1159
    %vm1166 = vweird.f32 %v1160
    %vm1167 = vmor %vm1165, %vm1166
    %v1168 = vsel %vm1167, %v1160, %v1164
    %v1169 = vand.u32 2147483647, %v1159
    %vm1170 = vcmp.eq.f32.partialorder %v1169, 8.507059e+37
    %v1171 = vand.u32 %v1159, 2147483648
    %v1172 = vor.u32 1.1754944e-38, %v1171
    %v1173 = vsel %vm1170, %v1172, %v1168
    %v1174 = vmul.f32 1.0, %v1173
    %v1176 = vrot.slane %v1149, 6
    %v1178 = vadd.f32 %v305, %v1176
    %v1179 = vxor.u32 %v1178, 2147483648
    %v1180 = vmul.f32 %v1179, 1.442695
    %v1181 = vpow.pop %v1180
    %v1182 = vadd.f32 %v1181, 1.0
    %v1183 = vrcp.pop %v1182
    %v1184 = vmul.f32 %v1182, %v1183
    %v1185 = vsub.f32 1.0, %v1184
    %v1186 = vmul.f32 %v1183, %v1185
    %v1187 = vadd.f32 %v1183, %v1186
    %vm1188 = vweird.f32 %v1182
    %vm1189 = vweird.f32 %v1183
    %vm1190 = vmor %vm1188, %vm1189
    %v1191 = vsel %vm1190, %v1183, %v1187
    %v1192 = vand.u32 2147483647, %v1182
    %vm1193 = vcmp.eq.f32.partialorder %v1192, 8.507059e+37
    %v1194 = vand.u32 %v1182, 2147483648
    %v1195 = vor.u32 1.1754944e-38, %v1194
    %v1196 = vsel %vm1193, %v1195, %v1191
    %v1197 = vmul.f32 1.0, %v1196
    %v1199 = vrot.slane %v1151, 6
    %v1201 = vmul.f32 %v1174, %v1199
    %v1202 = vadd.f32 %v336, %v1201
    %v1203 = vtanh.pop %v1202
    %v1204 = vsub.f32 1.0, %v1197
    %v1205 = vmul.f32 %v1204, %v1203
    %v1206 = vrot.slane %v1069, 6
    %v1208 = vmul.f32 %v1197, %v1206
    %v1209 = vadd.f32 %v1205, %v1208
    %1210 = vst.msk [vmem:[%s21 + $0x8] sm:$0xc] %vm647, %v1209
    %1212 = vset.pattern.permute.xlu0 0
    %1213 = vperm.xlu0 %1212, %v1209
    %v1214 = vpop.permute.xlu0 %1213
    %v1216 = vmul.f32 %v1214, %v350
    %v1217 = vadd.f32 %v353, %v1216
    %v1218 = vmul.f32 %v1214, %v356
    %v1219 = vadd.f32 %v359, %v1218
    %v1220 = vmul.f32 %v1214, %v362
    %v1221 = vadd.f32 %v365, %v1220
    %1222 = vset.pattern.permute.xlu0 1
    %1223 = vperm.xlu0 %1222, %v1209
    %v1224 = vpop.permute.xlu0 %1223
    %v1226 = vmul.f32 %v1224, %v372
    %v1227 = vadd.f32 %v1217, %v1226
    %v1228 = vmul.f32 %v1224, %v375
    %v1229 = vadd.f32 %v1219, %v1228
    %v1230 = vmul.f32 %v1224, %v378
    %v1231 = vadd.f32 %v1221, %v1230
    %1232 = vset.pattern.permute.xlu0 2
    %1233 = vperm.xlu0 %1232, %v1209
    %v1234 = vpop.permute.xlu0 %1233
    %v1236 = vmul.f32 %v1234, %v385
    %v1237 = vadd.f32 %v1227, %v1236
    %v1238 = vmul.f32 %v1234, %v388
    %v1239 = vadd.f32 %v1229, %v1238
    %v1240 = vmul.f32 %v1234, %v391
    %v1241 = vadd.f32 %v1231, %v1240
    %1242 = vset.pattern.permute.xlu0 3
    %1243 = vperm.xlu0 %1242, %v1209
    %v1244 = vpop.permute.xlu0 %1243
    %v1246 = vmul.f32 %v1244, %v398
    %v1247 = vadd.f32 %v1237, %v1246
    %v1248 = vmul.f32 %v1244, %v401
    %v1249 = vadd.f32 %v1239, %v1248
    %v1250 = vmul.f32 %v1244, %v404
    %v1251 = vadd.f32 %v1241, %v1250
    %1252 = vset.pattern.permute.xlu0 4
    %1253 = vperm.xlu0 %1252, %v1209
    %v1254 = vpop.permute.xlu0 %1253
    %v1256 = vmul.f32 %v1254, %v411
    %v1257 = vadd.f32 %v1247, %v1256
    %v1258 = vmul.f32 %v1254, %v414
    %v1259 = vadd.f32 %v1249, %v1258
    %v1260 = vmul.f32 %v1254, %v417
    %v1261 = vadd.f32 %v1251, %v1260
    %1262 = vset.pattern.permute.xlu0 5
    %1263 = vperm.xlu0 %1262, %v1209
    %v1264 = vpop.permute.xlu0 %1263
    %v1266 = vmul.f32 %v1264, %v424
    %v1267 = vadd.f32 %v1257, %v1266
    %v1268 = vmul.f32 %v1264, %v427
    %v1269 = vadd.f32 %v1259, %v1268
    %v1270 = vmul.f32 %v1264, %v430
    %v1271 = vadd.f32 %v1261, %v1270
    %1272 = vset.pattern.permute.xlu0 6
    %1273 = vperm.xlu0 %1272, %v1209
    %v1274 = vpop.permute.xlu0 %1273
    %v1276 = vmul.f32 %v1274, %v437
    %v1277 = vadd.f32 %v1267, %v1276
    %v1278 = vmul.f32 %v1274, %v440
    %v1279 = vadd.f32 %v1269, %v1278
    %v1280 = vmul.f32 %v1274, %v443
    %v1281 = vadd.f32 %v1271, %v1280
    %1282 = vset.pattern.permute.xlu0 7
    %1283 = vperm.xlu0 %1282, %v1209
    %v1284 = vpop.permute.xlu0 %1283
    %v1286 = vmul.f32 %v1284, %v450
    %v1287 = vadd.f32 %v1277, %v1286
    %v1288 = vmul.f32 %v1284, %v453
    %v1289 = vadd.f32 %v1279, %v1288
    %v1290 = vmul.f32 %v1284, %v456
    %v1291 = vadd.f32 %v1281, %v1290
    %v1293 = vrot.slane %v1287, 6
    %v1295 = vadd.f32 %v274, %v1293
    %v1296 = vxor.u32 %v1295, 2147483648
    %v1297 = vmul.f32 %v1296, 1.442695
    %v1298 = vpow.pop %v1297
    %v1299 = vadd.f32 %v1298, 1.0
    %v1300 = vrcp.pop %v1299
    %v1301 = vmul.f32 %v1299, %v1300
    %v1302 = vsub.f32 1.0, %v1301
    %v1303 = vmul.f32 %v1300, %v1302
    %v1304 = vadd.f32 %v1300, %v1303
    %vm1305 = vweird.f32 %v1299
    %vm1306 = vweird.f32 %v1300
    %vm1307 = vmor %vm1305, %vm1306
    %v1308 = vsel %vm1307, %v1300, %v1304
    %v1309 = vand.u32 2147483647, %v1299
    %vm1310 = vcmp.eq.f32.partialorder %v1309, 8.507059e+37
    %v1311 = vand.u32 %v1299, 2147483648
    %v1312 = vor.u32 1.1754944e-38, %v1311
    %v1313 = vsel %vm1310, %v1312, %v1308
    %v1314 = vmul.f32 1.0, %v1313
    %v1316 = vrot.slane %v1289, 6
    %v1318 = vadd.f32 %v305, %v1316
    %v1319 = vxor.u32 %v1318, 2147483648
    %v1320 = vmul.f32 %v1319, 1.442695
    %v1321 = vpow.pop %v1320
    %v1322 = vadd.f32 %v1321, 1.0
    %v1323 = vrcp.pop %v1322
    %v1324 = vmul.f32 %v1322, %v1323
    %v1325 = vsub.f32 1.0, %v1324
    %v1326 = vmul.f32 %v1323, %v1325
    %v1327 = vadd.f32 %v1323, %v1326
    %vm1328 = vweird.f32 %v1322
    %vm1329 = vweird.f32 %v1323
    %vm1330 = vmor %vm1328, %vm1329
    %v1331 = vsel %vm1330, %v1323, %v1327
    %v1332 = vand.u32 2147483647, %v1322
    %vm1333 = vcmp.eq.f32.partialorder %v1332, 8.507059e+37
    %v1334 = vand.u32 %v1322, 2147483648
    %v1335 = vor.u32 1.1754944e-38, %v1334
    %v1336 = vsel %vm1333, %v1335, %v1331
    %v1337 = vmul.f32 1.0, %v1336
    %v1339 = vrot.slane %v1291, 6
    %v1341 = vmul.f32 %v1314, %v1339
    %v1342 = vadd.f32 %v336, %v1341
    %v1343 = vtanh.pop %v1342
    %v1344 = vsub.f32 1.0, %v1337
    %v1345 = vmul.f32 %v1344, %v1343
    %v1346 = vrot.slane %v1209, 6
    %v1348 = vmul.f32 %v1337, %v1346
    %v1349 = vadd.f32 %v1345, %v1348
    %1350 = vst.msk [vmem:[%s21 + $0x8] sm:$0x30] %vm788, %v1349
    %1352 = vset.pattern.permute.xlu0 0
    %1353 = vperm.xlu0 %1352, %v1349
    %v1354 = vpop.permute.xlu0 %1353
    %v1356 = vmul.f32 %v1354, %v350
    %v1357 = vadd.f32 %v353, %v1356
    %v1358 = vmul.f32 %v1354, %v356
    %v1359 = vadd.f32 %v359, %v1358
    %v1360 = vmul.f32 %v1354, %v362
    %v1361 = vadd.f32 %v365, %v1360
    %1362 = vset.pattern.permute.xlu0 1
    %1363 = vperm.xlu0 %1362, %v1349
    %v1364 = vpop.permute.xlu0 %1363
    %v1366 = vmul.f32 %v1364, %v372
    %v1367 = vadd.f32 %v1357, %v1366
    %v1368 = vmul.f32 %v1364, %v375
    %v1369 = vadd.f32 %v1359, %v1368
    %v1370 = vmul.f32 %v1364, %v378
    %v1371 = vadd.f32 %v1361, %v1370
    %1372 = vset.pattern.permute.xlu0 2
    %1373 = vperm.xlu0 %1372, %v1349
    %v1374 = vpop.permute.xlu0 %1373
    %v1376 = vmul.f32 %v1374, %v385
    %v1377 = vadd.f32 %v1367, %v1376
    %v1378 = vmul.f32 %v1374, %v388
    %v1379 = vadd.f32 %v1369, %v1378
    %v1380 = vmul.f32 %v1374, %v391
    %v1381 = vadd.f32 %v1371, %v1380
    %1382 = vset.pattern.permute.xlu0 3
    %1383 = vperm.xlu0 %1382, %v1349
    %v1384 = vpop.permute.xlu0 %1383
    %v1386 = vmul.f32 %v1384, %v398
    %v1387 = vadd.f32 %v1377, %v1386
    %v1388 = vmul.f32 %v1384, %v401
    %v1389 = vadd.f32 %v1379, %v1388
    %v1390 = vmul.f32 %v1384, %v404
    %v1391 = vadd.f32 %v1381, %v1390
    %1392 = vset.pattern.permute.xlu0 4
    %1393 = vperm.xlu0 %1392, %v1349
    %v1394 = vpop.permute.xlu0 %1393
    %v1396 = vmul.f32 %v1394, %v411
    %v1397 = vadd.f32 %v1387, %v1396
    %v1398 = vmul.f32 %v1394, %v414
    %v1399 = vadd.f32 %v1389, %v1398
    %v1400 = vmul.f32 %v1394, %v417
    %v1401 = vadd.f32 %v1391, %v1400
    %1402 = vset.pattern.permute.xlu0 5
    %1403 = vperm.xlu0 %1402, %v1349
    %v1404 = vpop.permute.xlu0 %1403
    %v1406 = vmul.f32 %v1404, %v424
    %v1407 = vadd.f32 %v1397, %v1406
    %v1408 = vmul.f32 %v1404, %v427
    %v1409 = vadd.f32 %v1399, %v1408
    %v1410 = vmul.f32 %v1404, %v430
    %v1411 = vadd.f32 %v1401, %v1410
    %1412 = vset.pattern.permute.xlu0 6
    %1413 = vperm.xlu0 %1412, %v1349
    %v1414 = vpop.permute.xlu0 %1413
    %v1416 = vmul.f32 %v1414, %v437
    %v1417 = vadd.f32 %v1407, %v1416
    %v1418 = vmul.f32 %v1414, %v440
    %v1419 = vadd.f32 %v1409, %v1418
    %v1420 = vmul.f32 %v1414, %v443
    %v1421 = vadd.f32 %v1411, %v1420
    %1422 = vset.pattern.permute.xlu0 7
    %1423 = vperm.xlu0 %1422, %v1349
    %v1424 = vpop.permute.xlu0 %1423
    %v1426 = vmul.f32 %v1424, %v450
    %v1427 = vadd.f32 %v1417, %v1426
    %v1428 = vmul.f32 %v1424, %v453
    %v1429 = vadd.f32 %v1419, %v1428
    %v1430 = vmul.f32 %v1424, %v456
    %v1431 = vadd.f32 %v1421, %v1430
    %v1433 = vrot.slane %v1427, 6
    %v1435 = vadd.f32 %v274, %v1433
    %v1436 = vxor.u32 %v1435, 2147483648
    %v1437 = vmul.f32 %v1436, 1.442695
    %v1438 = vpow.pop %v1437
    %v1439 = vadd.f32 %v1438, 1.0
    %v1440 = vrcp.pop %v1439
    %v1441 = vmul.f32 %v1439, %v1440
    %v1442 = vsub.f32 1.0, %v1441
    %v1443 = vmul.f32 %v1440, %v1442
    %v1444 = vadd.f32 %v1440, %v1443
    %vm1445 = vweird.f32 %v1439
    %vm1446 = vweird.f32 %v1440
    %vm1447 = vmor %vm1445, %vm1446
    %v1448 = vsel %vm1447, %v1440, %v1444
    %v1449 = vand.u32 2147483647, %v1439
    %vm1450 = vcmp.eq.f32.partialorder %v1449, 8.507059e+37
    %v1451 = vand.u32 %v1439, 2147483648
    %v1452 = vor.u32 1.1754944e-38, %v1451
    %v1453 = vsel %vm1450, %v1452, %v1448
    %v1454 = vmul.f32 1.0, %v1453
    %v1456 = vrot.slane %v1429, 6
    %v1458 = vadd.f32 %v305, %v1456
    %v1459 = vxor.u32 %v1458, 2147483648
    %v1460 = vmul.f32 %v1459, 1.442695
    %v1461 = vpow.pop %v1460
    %v1462 = vadd.f32 %v1461, 1.0
    %v1463 = vrcp.pop %v1462
    %v1464 = vmul.f32 %v1462, %v1463
    %v1465 = vsub.f32 1.0, %v1464
    %v1466 = vmul.f32 %v1463, %v1465
    %v1467 = vadd.f32 %v1463, %v1466
    %vm1468 = vweird.f32 %v1462
    %vm1469 = vweird.f32 %v1463
    %vm1470 = vmor %vm1468, %vm1469
    %v1471 = vsel %vm1470, %v1463, %v1467
    %v1472 = vand.u32 2147483647, %v1462
    %vm1473 = vcmp.eq.f32.partialorder %v1472, 8.507059e+37
    %v1474 = vand.u32 %v1462, 2147483648
    %v1475 = vor.u32 1.1754944e-38, %v1474
    %v1476 = vsel %vm1473, %v1475, %v1471
    %v1477 = vmul.f32 1.0, %v1476
    %v1479 = vrot.slane %v1431, 6
    %v1481 = vmul.f32 %v1454, %v1479
    %v1482 = vadd.f32 %v336, %v1481
    %v1483 = vtanh.pop %v1482
    %v1484 = vsub.f32 1.0, %v1477
    %v1485 = vmul.f32 %v1484, %v1483
    %v1486 = vrot.slane %v1349, 6
    %v1488 = vmul.f32 %v1477, %v1486
    %v1489 = vadd.f32 %v1485, %v1488
    %1490 = vst.msk [vmem:[%s21 + $0x8] sm:$0xc0] %vm929, %v1489
    %v1491 = vld [vmem:[%s21] sm:$0xff]
    %v1492 = vld [vmem:[%s21 + $0x8] sm:$0xff]
    %v1493 = vld [vmem:[%s14] sm:$0xff]
    %v1494 = vld [vmem:[%s15] sm:$0x1]
    %v1496 = vperm.slane %v1494, 0
    %vm1498 = vcmask 64512
    %v1500 = vsel %vm1498, %v1491, 0
    %v1503 = vsel %vm1498, %v1492, 0
    %1505 = vmatpush.msra.mxu0 0.0
    %1506 = vmatpush.msra.mxu0 0.0
    %1507 = vmatpush.msra.mxu0 0.0
    %1508 = vmatpush.msra.mxu0 0.0
    %1509 = vmatpush.msra.mxu0 0.0
    %1510 = vmatpush.msra.mxu0 0.0
    %1511 = vmatpush.msra.mxu0 0.0
    %1512 = vmatpush.msra.mxu0 0.0
    %1513 = vmatpush.msra.mxu0 0.0
    %1514 = vmatpush.msra.mxu0 0.0
    %1515 = vmatpush.msra.mxu0 0.0
    %1516 = vmatpush.msra.mxu0 0.0
    %1517 = vmatpush.msra.mxu0 0.0
    %1518 = vmatpush.msra.mxu0 0.0
    %1519 = vmatpush.msra.mxu0 0.0
    %1520 = vmatpush.msra.mxu0 %v1493
    %1521 = vmatmul.f32.gmra.mxu0 %v1500
    %v1522 = vpop.f32.mrf.mxu0
    %v1523 = vadd.f32 %v1496, %v1522
    %1524 = vmatmul.f32.gmra.mxu0 %v1503
    %v1525 = vpop.f32.mrf.mxu0
    %v1526 = vadd.f32 %v1496, %v1525
    %1527 = vdwg.mxu0
    %v1528 = vmax.f32 %v1523, 0.0
    %v1529 = vmax.f32 %v1526, 0.0
    %v1530 = vld [vmem:[#allocation19] sm:$0xff]
    %v1531 = vld [vmem:[#allocation19 + $0x8] sm:$0xff]
    %v1532 = vld [vmem:[#allocation19 + $0x10] sm:$0xff]
    %v1533 = vld [vmem:[#allocation19 + $0x18] sm:$0xff]
    %v1534 = vld [vmem:[#allocation19 + $0x20] sm:$0xff]
    %v1535 = vld [vmem:[#allocation19 + $0x28] sm:$0xff]
    %v1536 = vld [vmem:[#allocation19 + $0x30] sm:$0xff]
    %v1537 = vld [vmem:[#allocation19 + $0x38] sm:$0xff]
    %v1538 = vld [vmem:[#allocation19 + $0x40] sm:$0xff]
    %v1539 = vld [vmem:[#allocation19 + $0x48] sm:$0xff]
    %v1540 = vld [vmem:[#allocation19 + $0x50] sm:$0xff]
    %v1541 = vld [vmem:[#allocation19 + $0x58] sm:$0xff]
    %v1542 = vld [vmem:[#allocation19 + $0x60] sm:$0xff]
    %v1543 = vld [vmem:[#allocation19 + $0x68] sm:$0xff]
    %v1544 = vld [vmem:[#allocation19 + $0x70] sm:$0xff]
    %v1545 = vld [vmem:[#allocation19 + $0x78] sm:$0xff]
    %v1546 = vld [vmem:[%s17] sm:$0x1]
    %v1548 = vperm.slane %v1546, 0
    %1550 = vmatpush.msra.mxu0 %v1545
    %1551 = vmatpush.msra.mxu0 %v1544
    %1552 = vmatpush.msra.mxu0 %v1543
    %1553 = vmatpush.msra.mxu0 %v1542
    %1554 = vmatpush.msra.mxu0 %v1541
    %1555 = vmatpush.msra.mxu0 %v1540
    %1556 = vmatpush.msra.mxu0 %v1539
    %1557 = vmatpush.msra.mxu0 %v1538
    %1558 = vmatpush.msra.mxu0 %v1537
    %1559 = vmatpush.msra.mxu0 %v1536
    %1560 = vmatpush.msra.mxu0 %v1535
    %1561 = vmatpush.msra.mxu0 %v1534
    %1562 = vmatpush.msra.mxu0 %v1533
    %1563 = vmatpush.msra.mxu0 %v1532
    %1564 = vmatpush.msra.mxu0 %v1531
    %1565 = vmatpush.msra.mxu0 %v1530
    %1566 = vmatmul.f32.gmra.mxu0 %v1528
    %v1567 = vpop.f32.mrf.mxu0
    %v1568 = vadd.f32 %v1548, %v1567
    %1569 = vmatmul.f32.gmra.mxu0 %v1529
    %v1570 = vpop.f32.mrf.mxu0
    %v1571 = vadd.f32 %v1548, %v1570
    %1572 = vdwg.mxu0
    %v1573 = vmax.f32 %v1568, 0.0
    %v1574 = vmax.f32 %v1571, 0.0
    %v1575 = vld [vmem:[#allocation20] sm:$0xff]
    %v1576 = vld [vmem:[#allocation20 + $0x8] sm:$0xff]
    %v1577 = vld [vmem:[#allocation20 + $0x10] sm:$0xff]
    %v1578 = vld [vmem:[#allocation20 + $0x18] sm:$0xff]
    %v1579 = vld [vmem:[#allocation20 + $0x20] sm:$0xff]
    %v1580 = vld [vmem:[#allocation20 + $0x28] sm:$0xff]
    %v1581 = vld [vmem:[#allocation20 + $0x30] sm:$0xff]
    %v1582 = vld [vmem:[#allocation20 + $0x38] sm:$0xff]
    %v1583 = vld [vmem:[#allocation20 + $0x40] sm:$0xff]
    %v1584 = vld [vmem:[#allocation20 + $0x48] sm:$0xff]
    %v1585 = vld [vmem:[#allocation20 + $0x50] sm:$0xff]
    %v1586 = vld [vmem:[#allocation20 + $0x58] sm:$0xff]
    %v1587 = vld [vmem:[#allocation20 + $0x60] sm:$0xff]
    %v1588 = vld [vmem:[#allocation20 + $0x68] sm:$0xff]
    %v1589 = vld [vmem:[#allocation20 + $0x70] sm:$0xff]
    %v1590 = vld [vmem:[#allocation20 + $0x78] sm:$0xff]
    %v1591 = vld [vmem:[%s19] sm:$0x1]
    %v1593 = vperm.slane %v1591, 0
    %1595 = vmatpush.msra.mxu0 %v1590
    %1596 = vmatpush.msra.mxu0 %v1589
    %1597 = vmatpush.msra.mxu0 %v1588
    %1598 = vmatpush.msra.mxu0 %v1587
    %1599 = vmatpush.msra.mxu0 %v1586
    %1600 = vmatpush.msra.mxu0 %v1585
    %1601 = vmatpush.msra.mxu0 %v1584
    %1602 = vmatpush.msra.mxu0 %v1583
    %1603 = vmatpush.msra.mxu0 %v1582
    %1604 = vmatpush.msra.mxu0 %v1581
    %1605 = vmatpush.msra.mxu0 %v1580
    %1606 = vmatpush.msra.mxu0 %v1579
    %1607 = vmatpush.msra.mxu0 %v1578
    %1608 = vmatpush.msra.mxu0 %v1577
    %1609 = vmatpush.msra.mxu0 %v1576
    %1610 = vmatpush.msra.mxu0 %v1575
    %1611 = vmatmul.f32.gmra.mxu0 %v1573
    %v1612 = vpop.f32.mrf.mxu0
    %v1613 = vadd.f32 %v1593, %v1612
    %1614 = vmatmul.f32.gmra.mxu0 %v1574
    %v1615 = vpop.f32.mrf.mxu0
    %v1616 = vadd.f32 %v1593, %v1615
    %1617 = vdwg.mxu0
    %1618 = vst [vmem:[#allocation22] sm:$0xff] %v1613
    %1619 = vst [vmem:[#allocation22 + $0x8] sm:$0xff] %v1616
    // Predicated region
    $region130: #{tpu_custom_call.1} parent=1 // pred_check
      _
    $region131: #{tpu_custom_call.1} parent=1 // pred_check_branch
      %1621 = sbr.rel (0) target = $region133
    $region132: #{tpu_custom_call.1} parent=1 // pred_region
      %1623 = vsyncadd [#allocation4], 0
      %s1624 = sshll.u32 [#allocation22], 4
      %s1625 = int_to_ptr.vmem [resolvable:$true] %s1624
      %s1626 = sshll.u32 %s20, 4
      %s1627 = int_to_ptr.hbm [resolvable:$true] %s1626
      %1632 = dma.vmem_to_hbm [thread:$0]  %s1625, 256, %s1627, [#allocation4], 128, 128, 8
    $region133: #{tpu_custom_call.1} parent=1 // pred_fallthru
      _
    // Predicated region
    $region134: #{tpu_custom_call.1} parent=1 // pred_check
      _
    $region135: #{tpu_custom_call.1} parent=1 // pred_check_branch
      %1634 = sbr.rel (0) target = $region137
    $region136: #{tpu_custom_call.1} parent=1 // pred_region
      _
    $region137: #{tpu_custom_call.1} parent=1 // pred_fallthru
      _
    // Predicated region
    $region138: #{tpu_custom_call.1} parent=1 // pred_check
      _
    $region139: #{tpu_custom_call.1} parent=1 // pred_check_branch
      %1636 = sbr.rel (0) target = $region141
    $region140: #{tpu_custom_call.1} parent=1 // pred_region
      %1638 = dma.done [#allocation4], 256
    $region141: #{tpu_custom_call.1} parent=1 // pred_fallthru
      _
    // Predicated region
    $region142: #{tpu_custom_call.1} parent=1 // pred_check
      _
    $region143: #{tpu_custom_call.1} parent=1 // pred_check_branch
      %1640 = sbr.rel (0) target = $region145
    $region144: #{tpu_custom_call.1} parent=1 // pred_region
      _
    $region145: #{tpu_custom_call.1} parent=1 // pred_fallthru
      _
    %1641 = vsyncpa [#allocation3], 1
    %1642 = vsyncpa [#allocation6], 1
    %1643 = vsyncpa [#allocation9], 1
    %1644 = vsyncpa [#allocation12], 1
    %1645 = vsyncpa [#allocation15], 1
    %1646 = vsyncpa [#allocation18], 1
    %1647 = vsyncpa [#allocation21], 1
    %1648 = vsyncpa [#allocation4], 1

</llo_original>
